<compile_context>
chip_gen: v5e
topology: v5e:2x2
jax: 0.10.0
libtpu: 0.0.40
codegen_flags: <defaults>
</compile_context>

<pallas_src>
import numpy as np
import jax
import jax.numpy as jnp
from jax.experimental import pallas as pl
from jax.experimental.pallas import tpu as pltpu

# ------------------------- module hyper-parameters -------------------------
NET_DEPTH = 8
NET_WIDTH = 256
BOTTLENECK_WIDTH = 256
NET_WIDTH_VIEWDIRS = 128
MIN_DEG_POINT = 0
MAX_DEG_POINT = 12
DEG_VIEW = 4
SKIP_LAYER = 4
NUM_RGB = 3
DENSITY_BIAS = -1.0
RGB_PREMULTIPLIER = 1.0
RGB_BIAS = 0.0
RGB_PADDING = 0.001

NUM_BASIS = 21                                  # icosahedron, tesselation 2
INPUT_DIM = NUM_BASIS * MAX_DEG_POINT * 2       # 504
INPUT_DIM_PAD = 512                             # K padded to a 128 multiple
DIM_DIR_ENC = 3 + 3 * 2 * DEG_VIEW              # 27
MAX_TILE_N = 2048                               # preferred rows per grid step


# ------------------------- geopoly basis (numpy, deterministic) -------------
def _compute_sq_dist(mat0, mat1=None):
    if mat1 is None:
        mat1 = mat0
    sq0 = np.sum(mat0 ** 2, 0)
    sq1 = np.sum(mat1 ** 2, 0)
    d = sq0[:, None] + sq1[None, :] - 2.0 * mat0.T @ mat1
    return np.maximum(0.0, d)


def _tesselation_weights(v):
    w = []
    for i in range(v + 1):
        for j in range(v + 1 - i):
            w.append((i, j, v - (i + j)))
    return np.array(w, dtype=np.float64) / v


def _tesselate_geodesic(base_verts, base_faces, v, eps=1e-4):
    tri_w = _tesselation_weights(v)
    verts = []
    for face in base_faces:
        nv = tri_w @ base_verts[face, :]
        nv /= np.sqrt(np.sum(nv ** 2, 1, keepdims=True))
        verts.append(nv)
    verts = np.concatenate(verts, 0)
    sq = _compute_sq_dist(verts.T)
    assignment = np.array([np.min(np.argwhere(d <= eps)) for d in sq])
    verts = verts[np.unique(assignment), :]
    return verts


def generate_basis(base_shape='icosahedron', angular_tesselation=2,
                   remove_symmetries=True, eps=1e-4):
    assert base_shape == 'icosahedron'
    a = (np.sqrt(5.0) + 1.0) / 2.0
    verts = np.array([(-1, 0, a), (1, 0, a), (-1, 0, -a), (1, 0, -a),
                      (0, a, 1), (0, a, -1), (0, -a, 1), (0, -a, -1),
                      (a, 1, 0), (-a, 1, 0), (a, -1, 0), (-a, -1, 0)],
                     dtype=np.float64) / np.sqrt(a + 2.0)
    faces = np.array([(0, 4, 1), (0, 9, 4), (9, 5, 4), (4, 5, 8), (4, 8, 1),
                      (8, 10, 1), (8, 3, 10), (5, 3, 8), (5, 2, 3), (2, 7, 3),
                      (7, 10, 3), (7, 6, 10), (7, 11, 6), (11, 0, 6), (0, 1, 6),
                      (6, 1, 10), (9, 0, 11), (9, 11, 2), (9, 2, 5), (7, 2, 11)])
    verts = _tesselate_geodesic(verts, faces, angular_tesselation, eps)
    if remove_symmetries:
        match = _compute_sq_dist(verts.T, -verts.T) < eps
        verts = verts[np.any(np.triu(match), axis=-1), :]
    return verts[:, ::-1]  # basis, shape (num_basis, 3)


# ------------------------- coord.* helpers (plain JAX glue) ------------------
def contract(x):
    eps = jnp.float32(jnp.finfo(jnp.float32).eps)
    mag_sq = jnp.maximum(eps, jnp.sum(x ** 2, axis=-1, keepdims=True))
    return jnp.where(mag_sq <= 1.0, x,
                     ((2.0 * jnp.sqrt(mag_sq) - 1.0) / mag_sq) * x)


def track_linearize_contract(means, covs_diag):
    """Kalman-style transform of (mean, diag-cov) Gaussians through contract."""
    pre = means.shape[:-1]
    m = means.reshape(-1, 3)
    c = covs_diag.reshape(-1, 3)
    jac = jax.vmap(jax.jacfwd(contract))(m)           # [N, 3, 3]
    new_m = contract(m)
    new_cov = jnp.einsum('nij,nj,nkj->nik', jac, c, jac)
    return new_m.reshape(pre + (3,)), new_cov.reshape(pre + (3, 3))


def lift_and_diagonalize(mean, cov, basis):
    fn_mean = mean @ basis                                  # [..., NB]
    fn_cov_diag = jnp.sum(basis * (cov @ basis), axis=-2)   # [..., NB]
    return fn_mean, fn_cov_diag


def integrated_pos_enc(mean, var, min_deg, max_deg, out_dtype=jnp.float32):
    scales = 2.0 ** jnp.arange(min_deg, max_deg, dtype=jnp.float32)
    shape = mean.shape[:-1] + (-1,)
    sm = (mean[..., None, :] * scales[:, None]).reshape(shape)
    sv = (var[..., None, :] * (scales[:, None] ** 2)).reshape(shape)
    feat = jnp.exp(-0.5 * jnp.concatenate([sv, sv], -1)) * jnp.sin(
        jnp.concatenate([sm, sm + 0.5 * jnp.pi], -1))
    return feat.astype(out_dtype)   # cast fused with exp*sin under jit


def pos_enc(x, min_deg, max_deg, append_identity=True):
    scales = 2.0 ** jnp.arange(min_deg, max_deg, dtype=jnp.float32)
    shape = x.shape[:-1] + (-1,)
    sx = (x[..., None, :] * scales[:, None]).reshape(shape)
    four = jnp.sin(jnp.concatenate([sx, sx + 0.5 * jnp.pi], -1))
    return jnp.concatenate([x, four], -1) if append_identity else four


# ------------------------- Pallas kernel: the fused MLP ----------------------
def _softplus(x):
    return jnp.maximum(x, 0.0) + jnp.log(1.0 + jnp.exp(-jnp.abs(x)))


def _sigmoid(x):
    return 1.0 / (1.0 + jnp.exp(-x))


def uwmlp_kernel(x_ref, dir_ref,
                 w0, b0, w1, b1, w2, b2, w3, b3, w4, b4,
                 w5h, w5x, b5, w6, b6, w7, b7,
                 wbn, bbn, wd_row, bd,
                 wsb, wsd, bs, wr, br,
                 out_ref):
    f32 = jnp.float32
    bf16 = jnp.bfloat16
    x16 = x_ref[...]        # (T, 512) bf16 IPE features (zero-padded K)
    d16 = dir_ref[...]      # (T, 27)  bf16 view-direction encoding

    def layer(h16, w, b):   # Linear (bf16 MXU, f32 acc) + f32 bias/ReLU -> bf16
        z = jnp.dot(h16, w[...], preferred_element_type=f32) + b[...]
        return jnp.maximum(z, 0.0).astype(bf16)

    # ---- first stage trunk: 8 x (Linear + ReLU), skip concat at layer 4 ----
    h = layer(x16, w0, b0)
    h = layer(h, w1, b1)
    h = layer(h, w2, b2)
    h = layer(h, w3, b3)
    h = layer(h, w4, b4)
    # cat([h, x]) @ W5  ==  h @ W5h + x @ W5x   (skip connection)
    z5 = (jnp.dot(h, w5h[...], preferred_element_type=f32) +
          jnp.dot(x16, w5x[...], preferred_element_type=f32) + b5[...])
    h = jnp.maximum(z5, 0.0).astype(bf16)
    h = layer(h, w6, b6)
    h = layer(h, w7, b7)                                # (T, 256) bf16 trunk out

    # ---- density head off the MXU: VPU multiply + XLU lane reduction ----
    raw_density = jnp.sum(h.astype(f32) * wd_row[...], axis=-1,
                          keepdims=True) + bd[...]      # (T, 1)
    density = _softplus(raw_density + DENSITY_BIAS)

    # ---- bottleneck (clean 256x256 MXU pass) ----
    bottleneck = (jnp.dot(h, wbn[...], preferred_element_type=f32)
                  + bbn[...]).astype(bf16)              # (T, 256)

    # ---- view-direction stage + rgb head ----
    # cat([bottleneck, dir_enc]) @ Ws  ==  bottleneck @ Wsb + dir_enc @ Wsd
    y = jnp.maximum(
        jnp.dot(bottleneck, wsb[...], preferred_element_type=f32) +
        jnp.dot(d16, wsd[...], preferred_element_type=f32) + bs[...],
        0.0).astype(bf16)
    rgb = _sigmoid(RGB_PREMULTIPLIER *
                   (jnp.dot(y, wr[...], preferred_element_type=f32) + br[...])
                   + RGB_BIAS)
    rgb = rgb * (1.0 + 2.0 * RGB_PADDING) - RGB_PADDING

    # single lane-contiguous store: [density | rgb]
    out_ref[...] = jnp.concatenate([density, rgb], axis=-1)


def _num_tensorcores():
    # Heuristic: chips whose grid axes shard across 2 TensorCores under
    # dimension_semantics=("parallel",) (v4/v5p megacore, v7x).
    try:
        kind = jax.devices()[0].device_kind.lower()
    except Exception:
        return 1
    return 2 if any(t in kind for t in ('v4', 'v5p', 'v7', '7x', 'tpu7')) else 1


def _pick_tile(n_rows, two_cores):
    # Prefer big tiles (amortize per-step overhead + MXU weight pushes).  Only
    # force >=2 grid steps when the chip has 2 TensorCores to feed; min tile 16
    # respects bf16 sublane packing.
    min_steps = 2 if two_cores else 1
    for t in (MAX_TILE_N, 1024, 512, 256, 128, 64, 32, 16):
        if n_rows >= min_steps * t:
            return t
    return 16


def _vmem_limit_bytes():
    # Generation-aware VMEM budget: ~3/4 of physical, capped at 64 MiB
    # (-> ~48 MiB on v7x, 64 MiB on v5e/v6e).
    try:
        cap = pltpu.get_tpu_info().vmem_capacity_bytes
    except Exception:
        cap = None
    if not cap:
        return 48 * 1024 * 1024
    return int(min(64 * 1024 * 1024, (cap * 3) // 4))


def run_mlp_kernel(x_enc, dir_enc, mlp_params):
    n = x_enc.shape[0]
    two_cores = _num_tensorcores() >= 2
    tile = _pick_tile(n, two_cores)
    steps = pl.cdiv(n, tile)
    if two_cores and steps % 2 == 1:
        steps += 1                       # even grid -> both TCs do equal work
    n_pad = steps * tile
    # pad rows to a tile multiple and IPE columns 504 -> 512 (aligned K); both
    # inputs are already bf16 so this pass moves half the bytes of f32.
    x_p = jnp.pad(x_enc.astype(jnp.bfloat16),
                  ((0, n_pad - n), (0, INPUT_DIM_PAD - x_enc.shape[1])))
    d_p = jnp.pad(dir_enc.astype(jnp.bfloat16), ((0, n_pad - n), (0, 0)))

    in_specs = [pl.BlockSpec((tile, INPUT_DIM_PAD), lambda i: (i, 0)),
                pl.BlockSpec((tile, DIM_DIR_ENC), lambda i: (i, 0))]
    # weights/biases: whole-array blocks, VMEM-resident every step
    for p in mlp_params:
        in_specs.append(pl.BlockSpec(p.shape, lambda i: (0, 0)))

    out = pl.pallas_call(
        uwmlp_kernel,
        grid=(steps,),
        in_specs=in_specs,
        out_specs=pl.BlockSpec((tile, 1 + NUM_RGB), lambda i: (i, 0)),
        out_shape=jax.ShapeDtypeStruct((n_pad, 1 + NUM_RGB), jnp.float32),
        compiler_params=pltpu.CompilerParams(
            dimension_semantics=("parallel",),
            vmem_limit_bytes=_vmem_limit_bytes()),
    )(x_p, d_p, *mlp_params)
    return out[:n, 0], out[:n, 1:]


# ------------------------- parameter prep / init (deterministic) -------------
def prepare_mlp_params(p):
    """Pad / reshape / cast raw f32 parameters for the kernel.

    * K-dim of w0 / w5x zero-padded 504 -> 512 (matches zero-padded x columns).
    * density head kept separate as a (1, 256) f32 row (VPU/XLU reduction in
      the kernel) so the bottleneck matmul stays a clean 256x256 MXU pass.
    * weight matrices cast to bf16 (MXU operands); biases stay f32.
    """
    bf = lambda w: w.astype(jnp.bfloat16)
    f32 = lambda b: b.astype(jnp.float32)
    w0 = jnp.pad(p['w0'], ((0, INPUT_DIM_PAD - INPUT_DIM), (0, 0)))
    w5x = jnp.pad(p['w5x'], ((0, INPUT_DIM_PAD - INPUT_DIM), (0, 0)))
    wd_row = p['wd'].T                                      # (1, 256)
    return [bf(w0), f32(p['b0']),
            bf(p['w1']), f32(p['b1']),
            bf(p['w2']), f32(p['b2']),
            bf(p['w3']), f32(p['b3']),
            bf(p['w4']), f32(p['b4']),
            bf(p['w5h']), bf(w5x), f32(p['b5']),
            bf(p['w6']), f32(p['b6']),
            bf(p['w7']), f32(p['b7']),
            bf(p['wbn']), f32(p['bbn']),
            f32(wd_row), f32(p['bd']),
            bf(p['wsb']), bf(p['wsd']), f32(p['bs']),
            bf(p['wr']), f32(p['br'])]


def init_params(key):
    basis = generate_basis('icosahedron', 2)          # (21, 3)
    pos_basis_t = jnp.asarray(basis.T, jnp.float32)   # (3, 21)
    input_dim = basis.shape[0] * MAX_DEG_POINT * 2    # 504
    assert input_dim == INPUT_DIM

    keys = iter(jax.random.split(key, 64))

    def lin_init(in_dim, out_dim, fan_override=None):
        fan = fan_override if fan_override is not None else in_dim
        wbound = np.sqrt(6.0 / fan)        # he_uniform / kaiming_uniform
        w = jax.random.uniform(next(keys), (in_dim, out_dim), jnp.float32,
                               -wbound, wbound)
        bbound = 1.0 / np.sqrt(fan)
        b = jax.random.uniform(next(keys), (1, out_dim), jnp.float32,
                               -bbound, bbound)
        return w, b

    p = {}
    p['w0'], p['b0'] = lin_init(input_dim, NET_WIDTH)
    for i in range(1, 5):                               # layers 1..4
        p[f'w{i}'], p[f'b{i}'] = lin_init(NET_WIDTH, NET_WIDTH)
    fan5 = NET_WIDTH + input_dim                        # layer 5 (after skip)
    p['w5h'], _ = lin_init(NET_WIDTH, NET_WIDTH, fan_override=fan5)
    p['w5x'], p['b5'] = lin_init(input_dim, NET_WIDTH, fan_override=fan5)
    for i in (6, 7):                                    # layers 6, 7
        p[f'w{i}'], p[f'b{i}'] = lin_init(NET_WIDTH, NET_WIDTH)
    p['wd'], p['bd'] = lin_init(NET_WIDTH, 1)                        # density
    p['wbn'], p['bbn'] = lin_init(NET_WIDTH, BOTTLENECK_WIDTH)
    fan_s = BOTTLENECK_WIDTH + DIM_DIR_ENC
    p['wsb'], _ = lin_init(BOTTLENECK_WIDTH, NET_WIDTH_VIEWDIRS,
                           fan_override=fan_s)
    p['wsd'], p['bs'] = lin_init(DIM_DIR_ENC, NET_WIDTH_VIEWDIRS,
                                 fan_override=fan_s)
    p['wr'], p['br'] = lin_init(NET_WIDTH_VIEWDIRS, NUM_RGB)         # rgb head

    return {'pos_basis_t': pos_basis_t, 'mlp': prepare_mlp_params(p)}


# ------------------------- full forward (glue + kernel) ----------------------
def uwmlp_forward(params, means, covs_diag, viewdirs, glo_vec):
    # predict_density preprocessing (warp='contract', lift, IPE)
    m_c, c_c = track_linearize_contract(means, covs_diag)
    lifted_means, lifted_vars = lift_and_diagonalize(m_c, c_c,
                                                     params['pos_basis_t'])
    x_enc = integrated_pos_enc(lifted_means, lifted_vars,
                               MIN_DEG_POINT, MAX_DEG_POINT,
                               out_dtype=jnp.bfloat16)     # [B, S, 504] bf16

    dir_enc = pos_enc(viewdirs, 0, DEG_VIEW, True).astype(jnp.bfloat16)
    dir_b = jnp.broadcast_to(dir_enc[..., None, :],
                             means.shape[:-1] + (dir_enc.shape[-1],))

    n_rows = int(np.prod(means.shape[:-1]))
    dens_flat, rgb_flat = run_mlp_kernel(
        x_enc.reshape(n_rows, -1),
        dir_b.reshape(n_rows, -1),
        params['mlp'])

    density = dens_flat.reshape(means.shape[:-1])
    rgb = rgb_flat.reshape(means.shape[:-1] + (NUM_RGB,))

    # underwater medium params from glo_vec (reference's glo branch)
    sigma_bs = jax.nn.relu(glo_vec[..., 0:3])
    sigma_atten = jax.nn.relu(glo_vec[..., 3:6])
    c_med = jax.nn.relu(glo_vec[..., 6:])

    return dict(density=density, rgb=rgb, raw_grad_density=None,
                grad_pred=None, normals=None, normals_pred=None,
                roughness=None, c_med=c_med, sigma_bs=sigma_bs,
                sigma_atten=sigma_atten, glo_vec=glo_vec)


# ------------------------- demo ----------------------------------------------
if __name__ == "__main__":
    key = jax.random.PRNGKey(0)
    k1, k2, k3, k4, kp = jax.random.split(key, 5)

    B, S = 2, 8                                  # batch of rays, samples/ray
    means = jax.random.normal(k1, (B, S, 3), jnp.float32) * 2.0
    covs = jax.random.uniform(k2, (B, S, 3), jnp.float32, 1e-3, 1e-1)  # diag cov
    viewdirs = jax.random.normal(k3, (B, 3), jnp.float32)
    viewdirs = viewdirs / jnp.linalg.norm(viewdirs, axis=-1, keepdims=True)
    glo_vec = jax.random.normal(k4, (B, 9), jnp.float32)

    params = init_params(kp)
    fwd = jax.jit(uwmlp_forward)        # fuses IPE cast/pad with the encoding
    out = fwd(params, means, covs, viewdirs, glo_vec)
    out = jax.block_until_ready(out)

    assert out['density'].shape == (B, S)
    assert out['rgb'].shape == (B, S, 3)
    assert out['c_med'].shape == (B, 3)
    assert bool(jnp.all(jnp.isfinite(out['density'])))
    assert bool(jnp.all(jnp.isfinite(out['rgb'])))
    assert bool(jnp.all(out['rgb'] >= -RGB_PADDING - 1e-5))
    assert bool(jnp.all(out['rgb'] <= 1.0 + RGB_PADDING + 1e-5))
    print("KERNEL_OK")
</pallas_src>

<mosaic_0001>
module attributes {stable_mosaic.version = 11 : i64} {
  func.func @uwmlp_kernel(%arg0: i32, %arg1: memref<16x512xbf16, #tpu.memory_space<vmem>>, %arg2: memref<16x27xbf16, #tpu.memory_space<vmem>>, %arg3: memref<512x256xbf16, #tpu.memory_space<vmem>>, %arg4: memref<1x256xf32, #tpu.memory_space<vmem>>, %arg5: memref<256x256xbf16, #tpu.memory_space<vmem>>, %arg6: memref<1x256xf32, #tpu.memory_space<vmem>>, %arg7: memref<256x256xbf16, #tpu.memory_space<vmem>>, %arg8: memref<1x256xf32, #tpu.memory_space<vmem>>, %arg9: memref<256x256xbf16, #tpu.memory_space<vmem>>, %arg10: memref<1x256xf32, #tpu.memory_space<vmem>>, %arg11: memref<256x256xbf16, #tpu.memory_space<vmem>>, %arg12: memref<1x256xf32, #tpu.memory_space<vmem>>, %arg13: memref<256x256xbf16, #tpu.memory_space<vmem>>, %arg14: memref<512x256xbf16, #tpu.memory_space<vmem>>, %arg15: memref<1x256xf32, #tpu.memory_space<vmem>>, %arg16: memref<256x256xbf16, #tpu.memory_space<vmem>>, %arg17: memref<1x256xf32, #tpu.memory_space<vmem>>, %arg18: memref<256x256xbf16, #tpu.memory_space<vmem>>, %arg19: memref<1x256xf32, #tpu.memory_space<vmem>>, %arg20: memref<256x256xbf16, #tpu.memory_space<vmem>>, %arg21: memref<1x256xf32, #tpu.memory_space<vmem>>, %arg22: memref<1x256xf32, #tpu.memory_space<vmem>>, %arg23: memref<1x1xf32, #tpu.memory_space<vmem>>, %arg24: memref<256x128xbf16, #tpu.memory_space<vmem>>, %arg25: memref<27x128xbf16, #tpu.memory_space<vmem>>, %arg26: memref<1x128xf32, #tpu.memory_space<vmem>>, %arg27: memref<128x3xbf16, #tpu.memory_space<vmem>>, %arg28: memref<1x3xf32, #tpu.memory_space<vmem>>, %arg29: memref<16x4xf32, #tpu.memory_space<vmem>>) attributes {dimension_semantics = [#tpu.dimension_semantics<parallel>], iteration_bounds = array<i64: 1>, scalar_prefetch = 0 : i64, scratch_operands = 0 : i64, tpu.core_type = #tpu.core_type<tc>, window_params = [{transform_indices = @transform_0, window_bounds = array<i64: 16, 512>}, {transform_indices = @transform_1, window_bounds = array<i64: 16, 27>}, {pipeline_mode = #tpu.pipeline_mode<synchronous>, transform_indices = @transform_2, window_bounds = array<i64: 512, 256>}, {pipeline_mode = #tpu.pipeline_mode<synchronous>, transform_indices = @transform_3, window_bounds = array<i64: 1, 256>}, {pipeline_mode = #tpu.pipeline_mode<synchronous>, transform_indices = @transform_4, window_bounds = array<i64: 256, 256>}, {pipeline_mode = #tpu.pipeline_mode<synchronous>, transform_indices = @transform_5, window_bounds = array<i64: 1, 256>}, {pipeline_mode = #tpu.pipeline_mode<synchronous>, transform_indices = @transform_6, window_bounds = array<i64: 256, 256>}, {pipeline_mode = #tpu.pipeline_mode<synchronous>, transform_indices = @transform_7, window_bounds = array<i64: 1, 256>}, {pipeline_mode = #tpu.pipeline_mode<synchronous>, transform_indices = @transform_8, window_bounds = array<i64: 256, 256>}, {pipeline_mode = #tpu.pipeline_mode<synchronous>, transform_indices = @transform_9, window_bounds = array<i64: 1, 256>}, {pipeline_mode = #tpu.pipeline_mode<synchronous>, transform_indices = @transform_10, window_bounds = array<i64: 256, 256>}, {pipeline_mode = #tpu.pipeline_mode<synchronous>, transform_indices = @transform_11, window_bounds = array<i64: 1, 256>}, {pipeline_mode = #tpu.pipeline_mode<synchronous>, transform_indices = @transform_12, window_bounds = array<i64: 256, 256>}, {pipeline_mode = #tpu.pipeline_mode<synchronous>, transform_indices = @transform_13, window_bounds = array<i64: 512, 256>}, {pipeline_mode = #tpu.pipeline_mode<synchronous>, transform_indices = @transform_14, window_bounds = array<i64: 1, 256>}, {pipeline_mode = #tpu.pipeline_mode<synchronous>, transform_indices = @transform_15, window_bounds = array<i64: 256, 256>}, {pipeline_mode = #tpu.pipeline_mode<synchronous>, transform_indices = @transform_16, window_bounds = array<i64: 1, 256>}, {pipeline_mode = #tpu.pipeline_mode<synchronous>, transform_indices = @transform_17, window_bounds = array<i64: 256, 256>}, {pipeline_mode = #tpu.pipeline_mode<synchronous>, transform_indices = @transform_18, window_bounds = array<i64: 1, 256>}, {pipeline_mode = #tpu.pipeline_mode<synchronous>, transform_indices = @transform_19, window_bounds = array<i64: 256, 256>}, {pipeline_mode = #tpu.pipeline_mode<synchronous>, transform_indices = @transform_20, window_bounds = array<i64: 1, 256>}, {pipeline_mode = #tpu.pipeline_mode<synchronous>, transform_indices = @transform_21, window_bounds = array<i64: 1, 256>}, {pipeline_mode = #tpu.pipeline_mode<synchronous>, transform_indices = @transform_22, window_bounds = array<i64: 1, 1>}, {pipeline_mode = #tpu.pipeline_mode<synchronous>, transform_indices = @transform_23, window_bounds = array<i64: 256, 128>}, {pipeline_mode = #tpu.pipeline_mode<synchronous>, transform_indices = @transform_24, window_bounds = array<i64: 27, 128>}, {pipeline_mode = #tpu.pipeline_mode<synchronous>, transform_indices = @transform_25, window_bounds = array<i64: 1, 128>}, {pipeline_mode = #tpu.pipeline_mode<synchronous>, transform_indices = @transform_26, window_bounds = array<i64: 128, 3>}, {pipeline_mode = #tpu.pipeline_mode<synchronous>, transform_indices = @transform_27, window_bounds = array<i64: 1, 3>}, {transform_indices = @transform_28, window_bounds = array<i64: 16, 4>}]} {
    %c0 = arith.constant 0 : index
    %c0_0 = arith.constant 0 : index
    %0 = vector.load %arg1[%c0, %c0_0] : memref<16x512xbf16, #tpu.memory_space<vmem>>, vector<16x512xbf16>
    %c0_1 = arith.constant 0 : index
    %c0_2 = arith.constant 0 : index
    %1 = vector.load %arg2[%c0_1, %c0_2] : memref<16x27xbf16, #tpu.memory_space<vmem>>, vector<16x27xbf16>
    %c0_3 = arith.constant 0 : index
    %c0_4 = arith.constant 0 : index
    %2 = vector.load %arg3[%c0_3, %c0_4] : memref<512x256xbf16, #tpu.memory_space<vmem>>, vector<512x256xbf16>
    %cst = arith.constant dense<0.000000e+00> : vector<16x256xf32>
    %3 = tpu.matmul %0, %2, %cst {dimension_numbers = #tpu.dot_dimension_numbers<[1], [0], [0], [1], [0, 0, 1, 1], [], []>} : vector<16x512xbf16>, vector<512x256xbf16>, vector<16x256xf32> -> vector<16x256xf32>
    %c0_5 = arith.constant 0 : index
    %c0_6 = arith.constant 0 : index
    %4 = vector.load %arg4[%c0_5, %c0_6] : memref<1x256xf32, #tpu.memory_space<vmem>>, vector<1x256xf32>
    %5 = vector.broadcast %4 : vector<1x256xf32> to vector<16x256xf32>
    %6 = arith.addf %3, %5 : vector<16x256xf32>
    %cst_7 = arith.constant 0.000000e+00 : f32
    %7 = vector.broadcast %cst_7 : f32 to vector<16x256xf32>
    %8 = arith.maximumf %6, %7 : vector<16x256xf32>
    %9 = arith.truncf %8 : vector<16x256xf32> to vector<16x256xbf16>
    %c0_8 = arith.constant 0 : index
    %c0_9 = arith.constant 0 : index
    %10 = vector.load %arg5[%c0_8, %c0_9] : memref<256x256xbf16, #tpu.memory_space<vmem>>, vector<256x256xbf16>
    %cst_10 = arith.constant dense<0.000000e+00> : vector<16x256xf32>
    %11 = tpu.matmul %9, %10, %cst_10 {dimension_numbers = #tpu.dot_dimension_numbers<[1], [0], [0], [1], [0, 0, 1, 1], [], []>} : vector<16x256xbf16>, vector<256x256xbf16>, vector<16x256xf32> -> vector<16x256xf32>
    %c0_11 = arith.constant 0 : index
    %c0_12 = arith.constant 0 : index
    %12 = vector.load %arg6[%c0_11, %c0_12] : memref<1x256xf32, #tpu.memory_space<vmem>>, vector<1x256xf32>
    %13 = vector.broadcast %12 : vector<1x256xf32> to vector<16x256xf32>
    %14 = arith.addf %11, %13 : vector<16x256xf32>
    %cst_13 = arith.constant 0.000000e+00 : f32
    %15 = vector.broadcast %cst_13 : f32 to vector<16x256xf32>
    %16 = arith.maximumf %14, %15 : vector<16x256xf32>
    %17 = arith.truncf %16 : vector<16x256xf32> to vector<16x256xbf16>
    %c0_14 = arith.constant 0 : index
    %c0_15 = arith.constant 0 : index
    %18 = vector.load %arg7[%c0_14, %c0_15] : memref<256x256xbf16, #tpu.memory_space<vmem>>, vector<256x256xbf16>
    %cst_16 = arith.constant dense<0.000000e+00> : vector<16x256xf32>
    %19 = tpu.matmul %17, %18, %cst_16 {dimension_numbers = #tpu.dot_dimension_numbers<[1], [0], [0], [1], [0, 0, 1, 1], [], []>} : vector<16x256xbf16>, vector<256x256xbf16>, vector<16x256xf32> -> vector<16x256xf32>
    %c0_17 = arith.constant 0 : index
    %c0_18 = arith.constant 0 : index
    %20 = vector.load %arg8[%c0_17, %c0_18] : memref<1x256xf32, #tpu.memory_space<vmem>>, vector<1x256xf32>
    %21 = vector.broadcast %20 : vector<1x256xf32> to vector<16x256xf32>
    %22 = arith.addf %19, %21 : vector<16x256xf32>
    %cst_19 = arith.constant 0.000000e+00 : f32
    %23 = vector.broadcast %cst_19 : f32 to vector<16x256xf32>
    %24 = arith.maximumf %22, %23 : vector<16x256xf32>
    %25 = arith.truncf %24 : vector<16x256xf32> to vector<16x256xbf16>
    %c0_20 = arith.constant 0 : index
    %c0_21 = arith.constant 0 : index
    %26 = vector.load %arg9[%c0_20, %c0_21] : memref<256x256xbf16, #tpu.memory_space<vmem>>, vector<256x256xbf16>
    %cst_22 = arith.constant dense<0.000000e+00> : vector<16x256xf32>
    %27 = tpu.matmul %25, %26, %cst_22 {dimension_numbers = #tpu.dot_dimension_numbers<[1], [0], [0], [1], [0, 0, 1, 1], [], []>} : vector<16x256xbf16>, vector<256x256xbf16>, vector<16x256xf32> -> vector<16x256xf32>
    %c0_23 = arith.constant 0 : index
    %c0_24 = arith.constant 0 : index
    %28 = vector.load %arg10[%c0_23, %c0_24] : memref<1x256xf32, #tpu.memory_space<vmem>>, vector<1x256xf32>
    %29 = vector.broadcast %28 : vector<1x256xf32> to vector<16x256xf32>
    %30 = arith.addf %27, %29 : vector<16x256xf32>
    %cst_25 = arith.constant 0.000000e+00 : f32
    %31 = vector.broadcast %cst_25 : f32 to vector<16x256xf32>
    %32 = arith.maximumf %30, %31 : vector<16x256xf32>
    %33 = arith.truncf %32 : vector<16x256xf32> to vector<16x256xbf16>
    %c0_26 = arith.constant 0 : index
    %c0_27 = arith.constant 0 : index
    %34 = vector.load %arg11[%c0_26, %c0_27] : memref<256x256xbf16, #tpu.memory_space<vmem>>, vector<256x256xbf16>
    %cst_28 = arith.constant dense<0.000000e+00> : vector<16x256xf32>
    %35 = tpu.matmul %33, %34, %cst_28 {dimension_numbers = #tpu.dot_dimension_numbers<[1], [0], [0], [1], [0, 0, 1, 1], [], []>} : vector<16x256xbf16>, vector<256x256xbf16>, vector<16x256xf32> -> vector<16x256xf32>
    %c0_29 = arith.constant 0 : index
    %c0_30 = arith.constant 0 : index
    %36 = vector.load %arg12[%c0_29, %c0_30] : memref<1x256xf32, #tpu.memory_space<vmem>>, vector<1x256xf32>
    %37 = vector.broadcast %36 : vector<1x256xf32> to vector<16x256xf32>
    %38 = arith.addf %35, %37 : vector<16x256xf32>
    %cst_31 = arith.constant 0.000000e+00 : f32
    %39 = vector.broadcast %cst_31 : f32 to vector<16x256xf32>
    %40 = arith.maximumf %38, %39 : vector<16x256xf32>
    %41 = arith.truncf %40 : vector<16x256xf32> to vector<16x256xbf16>
    %c0_32 = arith.constant 0 : index
    %c0_33 = arith.constant 0 : index
    %42 = vector.load %arg13[%c0_32, %c0_33] : memref<256x256xbf16, #tpu.memory_space<vmem>>, vector<256x256xbf16>
    %cst_34 = arith.constant dense<0.000000e+00> : vector<16x256xf32>
    %43 = tpu.matmul %41, %42, %cst_34 {dimension_numbers = #tpu.dot_dimension_numbers<[1], [0], [0], [1], [0, 0, 1, 1], [], []>} : vector<16x256xbf16>, vector<256x256xbf16>, vector<16x256xf32> -> vector<16x256xf32>
    %c0_35 = arith.constant 0 : index
    %c0_36 = arith.constant 0 : index
    %44 = vector.load %arg14[%c0_35, %c0_36] : memref<512x256xbf16, #tpu.memory_space<vmem>>, vector<512x256xbf16>
    %cst_37 = arith.constant dense<0.000000e+00> : vector<16x256xf32>
    %45 = tpu.matmul %0, %44, %cst_37 {dimension_numbers = #tpu.dot_dimension_numbers<[1], [0], [0], [1], [0, 0, 1, 1], [], []>} : vector<16x512xbf16>, vector<512x256xbf16>, vector<16x256xf32> -> vector<16x256xf32>
    %46 = arith.addf %43, %45 : vector<16x256xf32>
    %c0_38 = arith.constant 0 : index
    %c0_39 = arith.constant 0 : index
    %47 = vector.load %arg15[%c0_38, %c0_39] : memref<1x256xf32, #tpu.memory_space<vmem>>, vector<1x256xf32>
    %48 = vector.broadcast %47 : vector<1x256xf32> to vector<16x256xf32>
    %49 = arith.addf %46, %48 : vector<16x256xf32>
    %cst_40 = arith.constant 0.000000e+00 : f32
    %50 = vector.broadcast %cst_40 : f32 to vector<16x256xf32>
    %51 = arith.maximumf %49, %50 : vector<16x256xf32>
    %52 = arith.truncf %51 : vector<16x256xf32> to vector<16x256xbf16>
    %c0_41 = arith.constant 0 : index
    %c0_42 = arith.constant 0 : index
    %53 = vector.load %arg16[%c0_41, %c0_42] : memref<256x256xbf16, #tpu.memory_space<vmem>>, vector<256x256xbf16>
    %cst_43 = arith.constant dense<0.000000e+00> : vector<16x256xf32>
    %54 = tpu.matmul %52, %53, %cst_43 {dimension_numbers = #tpu.dot_dimension_numbers<[1], [0], [0], [1], [0, 0, 1, 1], [], []>} : vector<16x256xbf16>, vector<256x256xbf16>, vector<16x256xf32> -> vector<16x256xf32>
    %c0_44 = arith.constant 0 : index
    %c0_45 = arith.constant 0 : index
    %55 = vector.load %arg17[%c0_44, %c0_45] : memref<1x256xf32, #tpu.memory_space<vmem>>, vector<1x256xf32>
    %56 = vector.broadcast %55 : vector<1x256xf32> to vector<16x256xf32>
    %57 = arith.addf %54, %56 : vector<16x256xf32>
    %cst_46 = arith.constant 0.000000e+00 : f32
    %58 = vector.broadcast %cst_46 : f32 to vector<16x256xf32>
    %59 = arith.maximumf %57, %58 : vector<16x256xf32>
    %60 = arith.truncf %59 : vector<16x256xf32> to vector<16x256xbf16>
    %c0_47 = arith.constant 0 : index
    %c0_48 = arith.constant 0 : index
    %61 = vector.load %arg18[%c0_47, %c0_48] : memref<256x256xbf16, #tpu.memory_space<vmem>>, vector<256x256xbf16>
    %cst_49 = arith.constant dense<0.000000e+00> : vector<16x256xf32>
    %62 = tpu.matmul %60, %61, %cst_49 {dimension_numbers = #tpu.dot_dimension_numbers<[1], [0], [0], [1], [0, 0, 1, 1], [], []>} : vector<16x256xbf16>, vector<256x256xbf16>, vector<16x256xf32> -> vector<16x256xf32>
    %c0_50 = arith.constant 0 : index
    %c0_51 = arith.constant 0 : index
    %63 = vector.load %arg19[%c0_50, %c0_51] : memref<1x256xf32, #tpu.memory_space<vmem>>, vector<1x256xf32>
    %64 = vector.broadcast %63 : vector<1x256xf32> to vector<16x256xf32>
    %65 = arith.addf %62, %64 : vector<16x256xf32>
    %cst_52 = arith.constant 0.000000e+00 : f32
    %66 = vector.broadcast %cst_52 : f32 to vector<16x256xf32>
    %67 = arith.maximumf %65, %66 : vector<16x256xf32>
    %68 = arith.truncf %67 : vector<16x256xf32> to vector<16x256xbf16>
    %69 = arith.extf %68 : vector<16x256xbf16> to vector<16x256xf32>
    %c0_53 = arith.constant 0 : index
    %c0_54 = arith.constant 0 : index
    %70 = vector.load %arg22[%c0_53, %c0_54] : memref<1x256xf32, #tpu.memory_space<vmem>>, vector<1x256xf32>
    %71 = vector.broadcast %70 : vector<1x256xf32> to vector<16x256xf32>
    %72 = arith.mulf %69, %71 : vector<16x256xf32>
    %cst_55 = arith.constant dense<0.000000e+00> : vector<16xf32>
    %73 = vector.multi_reduction <add>, %72, %cst_55 [1] : vector<16x256xf32> to vector<16xf32>
    %74 = vector.shape_cast %73 : vector<16xf32> to vector<16x1xf32>
    %c0_56 = arith.constant 0 : index
    %c0_57 = arith.constant 0 : index
    %75 = vector.load %arg23[%c0_56, %c0_57] : memref<1x1xf32, #tpu.memory_space<vmem>>, vector<1x1xf32>
    %76 = vector.broadcast %75 : vector<1x1xf32> to vector<16x1xf32>
    %77 = arith.addf %74, %76 : vector<16x1xf32>
    %cst_58 = arith.constant -1.000000e+00 : f32
    %78 = vector.broadcast %cst_58 : f32 to vector<16x1xf32>
    %79 = arith.addf %77, %78 : vector<16x1xf32>
    %cst_59 = arith.constant 0.000000e+00 : f32
    %80 = vector.broadcast %cst_59 : f32 to vector<16x1xf32>
    %81 = arith.maximumf %79, %80 : vector<16x1xf32>
    %82 = math.absf %79 : vector<16x1xf32>
    %cst_60 = arith.constant 0.000000e+00 : f32
    %83 = vector.broadcast %cst_60 : f32 to vector<16x1xf32>
    %84 = arith.subf %83, %82 : vector<16x1xf32>
    %85 = math.exp %84 : vector<16x1xf32>
    %cst_61 = arith.constant 1.000000e+00 : f32
    %86 = vector.broadcast %cst_61 : f32 to vector<16x1xf32>
    %87 = arith.addf %86, %85 : vector<16x1xf32>
    %88 = math.log %87 : vector<16x1xf32>
    %89 = arith.addf %81, %88 : vector<16x1xf32>
    %c0_62 = arith.constant 0 : index
    %c0_63 = arith.constant 0 : index
    %90 = vector.load %arg20[%c0_62, %c0_63] : memref<256x256xbf16, #tpu.memory_space<vmem>>, vector<256x256xbf16>
    %cst_64 = arith.constant dense<0.000000e+00> : vector<16x256xf32>
    %91 = tpu.matmul %68, %90, %cst_64 {dimension_numbers = #tpu.dot_dimension_numbers<[1], [0], [0], [1], [0, 0, 1, 1], [], []>} : vector<16x256xbf16>, vector<256x256xbf16>, vector<16x256xf32> -> vector<16x256xf32>
    %c0_65 = arith.constant 0 : index
    %c0_66 = arith.constant 0 : index
    %92 = vector.load %arg21[%c0_65, %c0_66] : memref<1x256xf32, #tpu.memory_space<vmem>>, vector<1x256xf32>
    %93 = vector.broadcast %92 : vector<1x256xf32> to vector<16x256xf32>
    %94 = arith.addf %91, %93 : vector<16x256xf32>
    %95 = arith.truncf %94 : vector<16x256xf32> to vector<16x256xbf16>
    %c0_67 = arith.constant 0 : index
    %c0_68 = arith.constant 0 : index
    %96 = vector.load %arg24[%c0_67, %c0_68] : memref<256x128xbf16, #tpu.memory_space<vmem>>, vector<256x128xbf16>
    %cst_69 = arith.constant dense<0.000000e+00> : vector<16x128xf32>
    %97 = tpu.matmul %95, %96, %cst_69 {dimension_numbers = #tpu.dot_dimension_numbers<[1], [0], [0], [1], [0, 0, 1, 1], [], []>} : vector<16x256xbf16>, vector<256x128xbf16>, vector<16x128xf32> -> vector<16x128xf32>
    %c0_70 = arith.constant 0 : index
    %c0_71 = arith.constant 0 : index
    %98 = vector.load %arg25[%c0_70, %c0_71] : memref<27x128xbf16, #tpu.memory_space<vmem>>, vector<27x128xbf16>
    %cst_72 = arith.constant dense<0.000000e+00> : vector<16x128xf32>
    %99 = tpu.matmul %1, %98, %cst_72 {dimension_numbers = #tpu.dot_dimension_numbers<[1], [0], [0], [1], [0, 0, 1, 1], [], []>} : vector<16x27xbf16>, vector<27x128xbf16>, vector<16x128xf32> -> vector<16x128xf32>
    %100 = arith.addf %97, %99 : vector<16x128xf32>
    %c0_73 = arith.constant 0 : index
    %c0_74 = arith.constant 0 : index
    %101 = vector.load %arg26[%c0_73, %c0_74] : memref<1x128xf32, #tpu.memory_space<vmem>>, vector<1x128xf32>
    %102 = vector.broadcast %101 : vector<1x128xf32> to vector<16x128xf32>
    %103 = arith.addf %100, %102 : vector<16x128xf32>
    %cst_75 = arith.constant 0.000000e+00 : f32
    %104 = vector.broadcast %cst_75 : f32 to vector<16x128xf32>
    %105 = arith.maximumf %103, %104 : vector<16x128xf32>
    %106 = arith.truncf %105 : vector<16x128xf32> to vector<16x128xbf16>
    %c0_76 = arith.constant 0 : index
    %c0_77 = arith.constant 0 : index
    %107 = vector.load %arg27[%c0_76, %c0_77] : memref<128x3xbf16, #tpu.memory_space<vmem>>, vector<128x3xbf16>
    %cst_78 = arith.constant dense<0.000000e+00> : vector<16x3xf32>
    %108 = tpu.matmul %106, %107, %cst_78 {dimension_numbers = #tpu.dot_dimension_numbers<[1], [0], [0], [1], [0, 0, 1, 1], [], []>} : vector<16x128xbf16>, vector<128x3xbf16>, vector<16x3xf32> -> vector<16x3xf32>
    %c0_79 = arith.constant 0 : index
    %c0_80 = arith.constant 0 : index
    %109 = vector.load %arg28[%c0_79, %c0_80] : memref<1x3xf32, #tpu.memory_space<vmem>>, vector<1x3xf32>
    %110 = vector.broadcast %109 : vector<1x3xf32> to vector<16x3xf32>
    %111 = arith.addf %108, %110 : vector<16x3xf32>
    %cst_81 = arith.constant 1.000000e+00 : f32
    %112 = vector.broadcast %cst_81 : f32 to vector<16x3xf32>
    %113 = arith.mulf %112, %111 : vector<16x3xf32>
    %cst_82 = arith.constant 0.000000e+00 : f32
    %114 = vector.broadcast %cst_82 : f32 to vector<16x3xf32>
    %115 = arith.addf %113, %114 : vector<16x3xf32>
    %cst_83 = arith.constant 0.000000e+00 : f32
    %116 = vector.broadcast %cst_83 : f32 to vector<16x3xf32>
    %117 = arith.subf %116, %115 : vector<16x3xf32>
    %118 = math.exp %117 : vector<16x3xf32>
    %cst_84 = arith.constant 1.000000e+00 : f32
    %119 = vector.broadcast %cst_84 : f32 to vector<16x3xf32>
    %120 = arith.addf %119, %118 : vector<16x3xf32>
    %cst_85 = arith.constant 1.000000e+00 : f32
    %121 = vector.broadcast %cst_85 : f32 to vector<16x3xf32>
    %122 = arith.divf %121, %120 : vector<16x3xf32>
    %cst_86 = arith.constant 1.002000e+00 : f32
    %123 = vector.broadcast %cst_86 : f32 to vector<16x3xf32>
    %124 = arith.mulf %122, %123 : vector<16x3xf32>
    %cst_87 = arith.constant 1.000000e-03 : f32
    %125 = vector.broadcast %cst_87 : f32 to vector<16x3xf32>
    %126 = arith.subf %124, %125 : vector<16x3xf32>
    %127 = tpu.concatenate %89, %126 in 1 : vector<16x1xf32>, vector<16x3xf32> -> vector<16x4xf32>
    %c0_88 = arith.constant 0 : index
    %c0_89 = arith.constant 0 : index
    %128 = vector.load %arg29[%c0_88, %c0_89] : memref<16x4xf32, #tpu.memory_space<vmem>>, vector<16x4xf32>
    tpu.vector_store %arg29[%c0_88, %c0_89], %127 {strides = array<i32>} : memref<16x4xf32, #tpu.memory_space<vmem>>, vector<16x4xf32>,
    return
  }
  func.func @transform_0(%arg0: i32) -> (i32, i32) {
    %c0_i32 = arith.constant 0 : i32
    %c0_i32_0 = arith.constant 0 : i32
    return %arg0, %c0_i32 : i32, i32
  }
  func.func @transform_1(%arg0: i32) -> (i32, i32) {
    %c0_i32 = arith.constant 0 : i32
    %c0_i32_0 = arith.constant 0 : i32
    return %arg0, %c0_i32 : i32, i32
  }
  func.func @transform_2(%arg0: i32) -> (i32, i32) {
    %c0_i32 = arith.constant 0 : i32
    %c0_i32_0 = arith.constant 0 : i32
    %c0_i32_1 = arith.constant 0 : i32
    return %c0_i32, %c0_i32_0 : i32, i32
  }
  func.func @transform_3(%arg0: i32) -> (i32, i32) {
    %c0_i32 = arith.constant 0 : i32
    %c0_i32_0 = arith.constant 0 : i32
    %c0_i32_1 = arith.constant 0 : i32
    return %c0_i32, %c0_i32_0 : i32, i32
  }
  func.func @transform_4(%arg0: i32) -> (i32, i32) {
    %c0_i32 = arith.constant 0 : i32
    %c0_i32_0 = arith.constant 0 : i32
    %c0_i32_1 = arith.constant 0 : i32
    return %c0_i32, %c0_i32_0 : i32, i32
  }
  func.func @transform_5(%arg0: i32) -> (i32, i32) {
    %c0_i32 = arith.constant 0 : i32
    %c0_i32_0 = arith.constant 0 : i32
    %c0_i32_1 = arith.constant 0 : i32
    return %c0_i32, %c0_i32_0 : i32, i32
  }
  func.func @transform_6(%arg0: i32) -> (i32, i32) {
    %c0_i32 = arith.constant 0 : i32
    %c0_i32_0 = arith.constant 0 : i32
    %c0_i32_1 = arith.constant 0 : i32
    return %c0_i32, %c0_i32_0 : i32, i32
  }
  func.func @transform_7(%arg0: i32) -> (i32, i32) {
    %c0_i32 = arith.constant 0 : i32
    %c0_i32_0 = arith.constant 0 : i32
    %c0_i32_1 = arith.constant 0 : i32
    return %c0_i32, %c0_i32_0 : i32, i32
  }
  func.func @transform_8(%arg0: i32) -> (i32, i32) {
    %c0_i32 = arith.constant 0 : i32
    %c0_i32_0 = arith.constant 0 : i32
    %c0_i32_1 = arith.constant 0 : i32
    return %c0_i32, %c0_i32_0 : i32, i32
  }
  func.func @transform_9(%arg0: i32) -> (i32, i32) {
    %c0_i32 = arith.constant 0 : i32
    %c0_i32_0 = arith.constant 0 : i32
    %c0_i32_1 = arith.constant 0 : i32
    return %c0_i32, %c0_i32_0 : i32, i32
  }
  func.func @transform_10(%arg0: i32) -> (i32, i32) {
    %c0_i32 = arith.constant 0 : i32
    %c0_i32_0 = arith.constant 0 : i32
    %c0_i32_1 = arith.constant 0 : i32
    return %c0_i32, %c0_i32_0 : i32, i32
  }
  func.func @transform_11(%arg0: i32) -> (i32, i32) {
    %c0_i32 = arith.constant 0 : i32
    %c0_i32_0 = arith.constant 0 : i32
    %c0_i32_1 = arith.constant 0 : i32
    return %c0_i32, %c0_i32_0 : i32, i32
  }
  func.func @transform_12(%arg0: i32) -> (i32, i32) {
    %c0_i32 = arith.constant 0 : i32
    %c0_i32_0 = arith.constant 0 : i32
    %c0_i32_1 = arith.constant 0 : i32
    return %c0_i32, %c0_i32_0 : i32, i32
  }
  func.func @transform_13(%arg0: i32) -> (i32, i32) {
    %c0_i32 = arith.constant 0 : i32
    %c0_i32_0 = arith.constant 0 : i32
    %c0_i32_1 = arith.constant 0 : i32
    return %c0_i32, %c0_i32_0 : i32, i32
  }
  func.func @transform_14(%arg0: i32) -> (i32, i32) {
    %c0_i32 = arith.constant 0 : i32
    %c0_i32_0 = arith.constant 0 : i32
    %c0_i32_1 = arith.constant 0 : i32
    return %c0_i32, %c0_i32_0 : i32, i32
  }
  func.func @transform_15(%arg0: i32) -> (i32, i32) {
    %c0_i32 = arith.constant 0 : i32
    %c0_i32_0 = arith.constant 0 : i32
    %c0_i32_1 = arith.constant 0 : i32
    return %c0_i32, %c0_i32_0 : i32, i32
  }
  func.func @transform_16(%arg0: i32) -> (i32, i32) {
    %c0_i32 = arith.constant 0 : i32
    %c0_i32_0 = arith.constant 0 : i32
    %c0_i32_1 = arith.constant 0 : i32
    return %c0_i32, %c0_i32_0 : i32, i32
  }
  func.func @transform_17(%arg0: i32) -> (i32, i32) {
    %c0_i32 = arith.constant 0 : i32
    %c0_i32_0 = arith.constant 0 : i32
    %c0_i32_1 = arith.constant 0 : i32
    return %c0_i32, %c0_i32_0 : i32, i32
  }
  func.func @transform_18(%arg0: i32) -> (i32, i32) {
    %c0_i32 = arith.constant 0 : i32
    %c0_i32_0 = arith.constant 0 : i32
    %c0_i32_1 = arith.constant 0 : i32
    return %c0_i32, %c0_i32_0 : i32, i32
  }
  func.func @transform_19(%arg0: i32) -> (i32, i32) {
    %c0_i32 = arith.constant 0 : i32
    %c0_i32_0 = arith.constant 0 : i32
    %c0_i32_1 = arith.constant 0 : i32
    return %c0_i32, %c0_i32_0 : i32, i32
  }
  func.func @transform_20(%arg0: i32) -> (i32, i32) {
    %c0_i32 = arith.constant 0 : i32
    %c0_i32_0 = arith.constant 0 : i32
    %c0_i32_1 = arith.constant 0 : i32
    return %c0_i32, %c0_i32_0 : i32, i32
  }
  func.func @transform_21(%arg0: i32) -> (i32, i32) {
    %c0_i32 = arith.constant 0 : i32
    %c0_i32_0 = arith.constant 0 : i32
    %c0_i32_1 = arith.constant 0 : i32
    return %c0_i32, %c0_i32_0 : i32, i32
  }
  func.func @transform_22(%arg0: i32) -> (i32, i32) {
    %c0_i32 = arith.constant 0 : i32
    %c0_i32_0 = arith.constant 0 : i32
    %c0_i32_1 = arith.constant 0 : i32
    return %c0_i32, %c0_i32_0 : i32, i32
  }
  func.func @transform_23(%arg0: i32) -> (i32, i32) {
    %c0_i32 = arith.constant 0 : i32
    %c0_i32_0 = arith.constant 0 : i32
    %c0_i32_1 = arith.constant 0 : i32
    return %c0_i32, %c0_i32_0 : i32, i32
  }
  func.func @transform_24(%arg0: i32) -> (i32, i32) {
    %c0_i32 = arith.constant 0 : i32
    %c0_i32_0 = arith.constant 0 : i32
    %c0_i32_1 = arith.constant 0 : i32
    return %c0_i32, %c0_i32_0 : i32, i32
  }
  func.func @transform_25(%arg0: i32) -> (i32, i32) {
    %c0_i32 = arith.constant 0 : i32
    %c0_i32_0 = arith.constant 0 : i32
    %c0_i32_1 = arith.constant 0 : i32
    return %c0_i32, %c0_i32_0 : i32, i32
  }
  func.func @transform_26(%arg0: i32) -> (i32, i32) {
    %c0_i32 = arith.constant 0 : i32
    %c0_i32_0 = arith.constant 0 : i32
    %c0_i32_1 = arith.constant 0 : i32
    return %c0_i32, %c0_i32_0 : i32, i32
  }
  func.func @transform_27(%arg0: i32) -> (i32, i32) {
    %c0_i32 = arith.constant 0 : i32
    %c0_i32_0 = arith.constant 0 : i32
    %c0_i32_1 = arith.constant 0 : i32
    return %c0_i32, %c0_i32_0 : i32, i32
  }
  func.func @transform_28(%arg0: i32) -> (i32, i32) {
    %c0_i32 = arith.constant 0 : i32
    %c0_i32_0 = arith.constant 0 : i32
    return %arg0, %c0_i32 : i32, i32
  }
}

</mosaic_0001>

<llo_original>
// kernel: squeeze.1
$region0: #{squeeze.1}
  %s0 = inlined_call_operand.vmem [shape: f32[16], index: 0, kind: input, shape index: {}]
  %s1 = inlined_call_operand.hbm [shape: f32[2,8], index: 1, kind: output, shape index: {}]
  $region1: #{squeeze.1} parent=0
    #allocation0 [shape = 'u8[1024]{0}', space=vmem, size = 0x400, scoped, tag = 'operand span for operand 1']
    #allocation1 [shape = 's32[1]{0}', space=sflag, size = 0x4, scoped, tag = 'scoped memory for squeeze.1']
    #allocation2 [shape = 'u8[4096]{0}', space=vmem, size = 0x1000, scoped, tag = 'scoped mem for output reshape']
    #allocation3 [shape = 'u8[4096]{0}', space=vmem, size = 0x1000, scoped, tag = 'scoped mem for input reshape']
    %2 = vsyncpa [#allocation1], 0
    %s4 = ssub.s32 2, 1
    %v5 = vld [vmem:[%s0] sm:%s4]
    %6 = vst [vmem:[#allocation3] sm:%s4] %v5
    %v7 = vld [vmem:[#allocation3] sm:$0x1]
    %vm8 = vcmask 64512
    %9 = vst.msk [vmem:[#allocation2] sm:$0x1] %vm8, %v7
    %v10 = vld [vmem:[#allocation3] sm:$0x1]
    %11 = vrot.lane.b32.xlu0 %v10, 120
    %v12 = vpop.permute.xlu0 %11
    %vm13 = vcmask 64512
    %s14 = scalar_lea.vmem [#allocation2], 1
    %15 = vst.msk [vmem:[%s14] sm:$0x1] %vm13, %v12
    %s17 = ssub.s32 4, 1
    %v18 = vld [vmem:[#allocation2] sm:%s17]
    %s20 = ssub.s32 4, 1
    %21 = vst [vmem:[#allocation0] sm:%s20] %v18
    %23 = vsyncadd [#allocation1], 0
    %s25 = sshll.u32 [#allocation0], 4
    %s26 = int_to_ptr.vmem [resolvable:$true] %s25
    %s27 = sshll.u32 %s1, 4
    %s28 = int_to_ptr.hbm [resolvable:$true] %s27
    %30 = dma.vmem_to_hbm [thread:$0]  %s26, 32, %s28, [#allocation1]
    %32 = dma.done [#allocation1], 32
    %33 = vsyncpa [#allocation1], 1

// kernel: uwmlp_forward.1
$region0: #{uwmlp_forward.1}
  #allocation0 [shape = 'u32[]', space=smem, size = 0x4, offset = 0x4, fixed_abs, tag = 'smem constant byte address 0x4 - core index']
  #allocation1 [shape = 'u32[72,128]{1,0:T(1,128)}', space=vmem, size = 0x9000, scoped, tag = 'internal scratch']
  #allocation2 [shape = 'f32[1,1]{1,0:T(1,128)S(1)}', space=vmem, size = 0x200, scoped, tag = 'scoped memory for uwmlp_forward.1']
  %s0 = inlined_call_operand.vmem [shape: bf16[16,512], index: 0, kind: input, shape index: {}]
  %s1 = inlined_call_operand.vmem [shape: bf16[16,27], index: 1, kind: input, shape index: {}]
  %s2 = inlined_call_operand.vmem [shape: bf16[512,256], index: 2, kind: input, shape index: {}]
  %s3 = inlined_call_operand.vmem [shape: f32[1,256], index: 3, kind: input, shape index: {}]
  %s4 = inlined_call_operand.vmem [shape: bf16[256,256], index: 4, kind: input, shape index: {}]
  %s5 = inlined_call_operand.vmem [shape: f32[1,256], index: 5, kind: input, shape index: {}]
  %s6 = inlined_call_operand.vmem [shape: bf16[256,256], index: 6, kind: input, shape index: {}]
  %s7 = inlined_call_operand.vmem [shape: f32[1,256], index: 7, kind: input, shape index: {}]
  %s8 = inlined_call_operand.hbm [shape: bf16[256,256], index: 8, kind: input, shape index: {}]
  %s9 = inlined_call_operand.vmem [shape: f32[1,256], index: 9, kind: input, shape index: {}]
  %s10 = inlined_call_operand.hbm [shape: bf16[256,256], index: 10, kind: input, shape index: {}]
  %s11 = inlined_call_operand.vmem [shape: f32[1,256], index: 11, kind: input, shape index: {}]
  %s12 = inlined_call_operand.hbm [shape: bf16[256,256], index: 12, kind: input, shape index: {}]
  %s13 = inlined_call_operand.vmem [shape: bf16[512,256], index: 13, kind: input, shape index: {}]
  %s14 = inlined_call_operand.vmem [shape: f32[1,256], index: 14, kind: input, shape index: {}]
  %s15 = inlined_call_operand.hbm [shape: bf16[256,256], index: 15, kind: input, shape index: {}]
  %s16 = inlined_call_operand.vmem [shape: f32[1,256], index: 16, kind: input, shape index: {}]
  %s17 = inlined_call_operand.hbm [shape: bf16[256,256], index: 17, kind: input, shape index: {}]
  %s18 = inlined_call_operand.vmem [shape: f32[1,256], index: 18, kind: input, shape index: {}]
  %s19 = inlined_call_operand.hbm [shape: bf16[256,256], index: 19, kind: input, shape index: {}]
  %s20 = inlined_call_operand.vmem [shape: f32[1,256], index: 20, kind: input, shape index: {}]
  %s21 = inlined_call_operand.vmem [shape: f32[1,256], index: 21, kind: input, shape index: {}]
  %s22 = inlined_call_operand.<no memory space> [shape: f32[1,1], index: 22, kind: input, shape index: {}]
  %s23 = inlined_call_operand.vmem [shape: bf16[256,128], index: 23, kind: input, shape index: {}]
  %s24 = inlined_call_operand.vmem [shape: bf16[27,128], index: 24, kind: input, shape index: {}]
  %s25 = inlined_call_operand.vmem [shape: f32[1,128], index: 25, kind: input, shape index: {}]
  %s26 = inlined_call_operand.vmem [shape: bf16[128,3], index: 26, kind: input, shape index: {}]
  %s27 = inlined_call_operand.vmem [shape: f32[1,3], index: 27, kind: input, shape index: {}]
  %s28 = inlined_call_operand.vmem [shape: f32[16,4], index: 28, kind: output, shape index: {}]
  %s29 = sld [smem:[#allocation0]]
  $region146: #{uwmlp_forward.1} parent=0
    _
  %s31 = ssub.s32 1, %s29
  %s32 = scalar_select 0, %s31, %s29
  %v33 = vstv %s22
  %34 = vst [vmem:[#allocation2] sm:$0x1] %v33
  $region1: #{uwmlp_forward.1} parent=0
    #allocation3 [shape = 'u8[131072]{0}', space=vmem, size = 0x20000, scoped, tag = 'input window, operand 8, single buffered']
    #allocation4 [shape = 's32[1]{0}', space=sflag, size = 0x4, scoped, tag = 'scoped memory for uwmlp_forward.1']
    #allocation5 [shape = 'u8[131072]{0}', space=vmem, size = 0x20000, scoped, tag = 'input window, operand 10, single buffered']
    #allocation6 [shape = 's32[1]{0}', space=sflag, size = 0x4, scoped, tag = 'scoped memory for uwmlp_forward.1']
    #allocation7 [shape = 'u8[131072]{0}', space=vmem, size = 0x20000, scoped, tag = 'input window, operand 12, single buffered']
    #allocation8 [shape = 'u8[131072]{0}', space=vmem, size = 0x20000, scoped, tag = 'input window, operand 15, single buffered']
    #allocation9 [shape = 's32[1]{0}', space=sflag, size = 0x4, scoped, tag = 'scoped memory for uwmlp_forward.1']
    #allocation10 [shape = 'u8[131072]{0}', space=vmem, size = 0x20000, scoped, tag = 'input window, operand 17, single buffered']
    #allocation11 [shape = 'u8[131072]{0}', space=vmem, size = 0x20000, scoped, tag = 'input window, operand 19, single buffered']
    #allocation12 [shape = 's32[1]{0}', space=sflag, size = 0x4, scoped, tag = 'scoped memory for uwmlp_forward.1']
    %35 = vsyncpa [#allocation4], 0
    %36 = vsyncpa [#allocation6], 0
    %37 = vsyncpa [#allocation9], 0
    %38 = vsyncpa [#allocation12], 0
    // Predicated region
    $region2: #{uwmlp_forward.1} parent=1 // pred_check
      _
    $region3: #{uwmlp_forward.1} parent=1 // pred_check_branch
      %40 = sbr.rel (0) target = $region5
    $region4: #{uwmlp_forward.1} parent=1 // pred_region
      _
    $region5: #{uwmlp_forward.1} parent=1 // pred_fallthru
      _
    // Predicated region
    $region6: #{uwmlp_forward.1} parent=1 // pred_check
      _
    $region7: #{uwmlp_forward.1} parent=1 // pred_check_branch
      %42 = sbr.rel (0) target = $region9
    $region8: #{uwmlp_forward.1} parent=1 // pred_region
      _
    $region9: #{uwmlp_forward.1} parent=1 // pred_fallthru
      _
    // Predicated region
    $region10: #{uwmlp_forward.1} parent=1 // pred_check
      _
    $region11: #{uwmlp_forward.1} parent=1 // pred_check_branch
      %44 = sbr.rel (0) target = $region13
    $region12: #{uwmlp_forward.1} parent=1 // pred_region
      _
    $region13: #{uwmlp_forward.1} parent=1 // pred_fallthru
      _
    // Predicated region
    $region14: #{uwmlp_forward.1} parent=1 // pred_check
      _
    $region15: #{uwmlp_forward.1} parent=1 // pred_check_branch
      %46 = sbr.rel (0) target = $region17
    $region16: #{uwmlp_forward.1} parent=1 // pred_region
      _
    $region17: #{uwmlp_forward.1} parent=1 // pred_fallthru
      _
    // Predicated region
    $region18: #{uwmlp_forward.1} parent=1 // pred_check
      _
    $region19: #{uwmlp_forward.1} parent=1 // pred_check_branch
      %48 = sbr.rel (0) target = $region21
    $region20: #{uwmlp_forward.1} parent=1 // pred_region
      _
    $region21: #{uwmlp_forward.1} parent=1 // pred_fallthru
      _
    // Predicated region
    $region22: #{uwmlp_forward.1} parent=1 // pred_check
      _
    $region23: #{uwmlp_forward.1} parent=1 // pred_check_branch
      %50 = sbr.rel (0) target = $region25
    $region24: #{uwmlp_forward.1} parent=1 // pred_region
      _
    $region25: #{uwmlp_forward.1} parent=1 // pred_fallthru
      _
    // Predicated region
    $region26: #{uwmlp_forward.1} parent=1 // pred_check
      _
    $region27: #{uwmlp_forward.1} parent=1 // pred_check_branch
      %52 = sbr.rel (0) target = $region29
    $region28: #{uwmlp_forward.1} parent=1 // pred_region
      _
    $region29: #{uwmlp_forward.1} parent=1 // pred_fallthru
      _
    // Predicated region
    $region30: #{uwmlp_forward.1} parent=1 // pred_check
      _
    $region31: #{uwmlp_forward.1} parent=1 // pred_check_branch
      %54 = sbr.rel (0) target = $region33
    $region32: #{uwmlp_forward.1} parent=1 // pred_region
      _
    $region33: #{uwmlp_forward.1} parent=1 // pred_fallthru
      _
    // Predicated region
    $region34: #{uwmlp_forward.1} parent=1 // pred_check
      _
    $region35: #{uwmlp_forward.1} parent=1 // pred_check_branch
      %56 = sbr.rel (0) target = $region37
    $region36: #{uwmlp_forward.1} parent=1 // pred_region
      %58 = vsyncadd [#allocation4], 0
      %s59 = sshll.u32 %s8, 4
      %s60 = int_to_ptr.hbm [resolvable:$true] %s59
      %s61 = sshll.u32 [#allocation3], 4
      %s62 = int_to_ptr.vmem [resolvable:$true] %s61
      %67 = dma.hbm_to_vmem [thread:$0]  %s60, 4096, %s62, [#allocation4], 128, 128, 8
    $region37: #{uwmlp_forward.1} parent=1 // pred_fallthru
      _
    // Predicated region
    $region38: #{uwmlp_forward.1} parent=1 // pred_check
      _
    $region39: #{uwmlp_forward.1} parent=1 // pred_check_branch
      %69 = sbr.rel (0) target = $region41
    $region40: #{uwmlp_forward.1} parent=1 // pred_region
      _
    $region41: #{uwmlp_forward.1} parent=1 // pred_fallthru
      _
    // Predicated region
    $region42: #{uwmlp_forward.1} parent=1 // pred_check
      _
    $region43: #{uwmlp_forward.1} parent=1 // pred_check_branch
      %71 = sbr.rel (0) target = $region45
    $region44: #{uwmlp_forward.1} parent=1 // pred_region
      %73 = vsyncadd [#allocation6], 0
      %s74 = sshll.u32 %s10, 4
      %s75 = int_to_ptr.hbm [resolvable:$true] %s74
      %s76 = sshll.u32 [#allocation5], 4
      %s77 = int_to_ptr.vmem [resolvable:$true] %s76
      %82 = dma.hbm_to_vmem [thread:$0]  %s75, 4096, %s77, [#allocation6], 128, 128, 8
    $region45: #{uwmlp_forward.1} parent=1 // pred_fallthru
      _
    // Predicated region
    $region46: #{uwmlp_forward.1} parent=1 // pred_check
      _
    $region47: #{uwmlp_forward.1} parent=1 // pred_check_branch
      %84 = sbr.rel (0) target = $region49
    $region48: #{uwmlp_forward.1} parent=1 // pred_region
      _
    $region49: #{uwmlp_forward.1} parent=1 // pred_fallthru
      _
    // Predicated region
    $region50: #{uwmlp_forward.1} parent=1 // pred_check
      _
    $region51: #{uwmlp_forward.1} parent=1 // pred_check_branch
      %86 = sbr.rel (0) target = $region53
    $region52: #{uwmlp_forward.1} parent=1 // pred_region
      %88 = vsyncadd [#allocation6], 0
      %s89 = sshll.u32 %s12, 4
      %s90 = int_to_ptr.hbm [resolvable:$true] %s89
      %s91 = sshll.u32 [#allocation7], 4
      %s92 = int_to_ptr.vmem [resolvable:$true] %s91
      %97 = dma.hbm_to_vmem [thread:$0]  %s90, 4096, %s92, [#allocation6], 128, 128, 8
    $region53: #{uwmlp_forward.1} parent=1 // pred_fallthru
      _
    // Predicated region
    $region54: #{uwmlp_forward.1} parent=1 // pred_check
      _
    $region55: #{uwmlp_forward.1} parent=1 // pred_check_branch
      %99 = sbr.rel (0) target = $region57
    $region56: #{uwmlp_forward.1} parent=1 // pred_region
      _
    $region57: #{uwmlp_forward.1} parent=1 // pred_fallthru
      _
    // Predicated region
    $region58: #{uwmlp_forward.1} parent=1 // pred_check
      _
    $region59: #{uwmlp_forward.1} parent=1 // pred_check_branch
      %101 = sbr.rel (0) target = $region61
    $region60: #{uwmlp_forward.1} parent=1 // pred_region
      _
    $region61: #{uwmlp_forward.1} parent=1 // pred_fallthru
      _
    // Predicated region
    $region62: #{uwmlp_forward.1} parent=1 // pred_check
      _
    $region63: #{uwmlp_forward.1} parent=1 // pred_check_branch
      %103 = sbr.rel (0) target = $region65
    $region64: #{uwmlp_forward.1} parent=1 // pred_region
      %105 = vsyncadd [#allocation9], 0
      %s106 = sshll.u32 %s15, 4
      %s107 = int_to_ptr.hbm [resolvable:$true] %s106
      %s108 = sshll.u32 [#allocation8], 4
      %s109 = int_to_ptr.vmem [resolvable:$true] %s108
      %114 = dma.hbm_to_vmem [thread:$0]  %s107, 4096, %s109, [#allocation9], 128, 128, 8
    $region65: #{uwmlp_forward.1} parent=1 // pred_fallthru
      _
    // Predicated region
    $region66: #{uwmlp_forward.1} parent=1 // pred_check
      _
    $region67: #{uwmlp_forward.1} parent=1 // pred_check_branch
      %116 = sbr.rel (0) target = $region69
    $region68: #{uwmlp_forward.1} parent=1 // pred_region
      _
    $region69: #{uwmlp_forward.1} parent=1 // pred_fallthru
      _
    // Predicated region
    $region70: #{uwmlp_forward.1} parent=1 // pred_check
      _
    $region71: #{uwmlp_forward.1} parent=1 // pred_check_branch
      %118 = sbr.rel (0) target = $region73
    $region72: #{uwmlp_forward.1} parent=1 // pred_region
      %120 = vsyncadd [#allocation9], 0
      %s121 = sshll.u32 %s17, 4
      %s122 = int_to_ptr.hbm [resolvable:$true] %s121
      %s123 = sshll.u32 [#allocation10], 4
      %s124 = int_to_ptr.vmem [resolvable:$true] %s123
      %129 = dma.hbm_to_vmem [thread:$0]  %s122, 4096, %s124, [#allocation9], 128, 128, 8
    $region73: #{uwmlp_forward.1} parent=1 // pred_fallthru
      _
    // Predicated region
    $region74: #{uwmlp_forward.1} parent=1 // pred_check
      _
    $region75: #{uwmlp_forward.1} parent=1 // pred_check_branch
      %131 = sbr.rel (0) target = $region77
    $region76: #{uwmlp_forward.1} parent=1 // pred_region
      _
    $region77: #{uwmlp_forward.1} parent=1 // pred_fallthru
      _
    // Predicated region
    $region78: #{uwmlp_forward.1} parent=1 // pred_check
      _
    $region79: #{uwmlp_forward.1} parent=1 // pred_check_branch
      %133 = sbr.rel (0) target = $region81
    $region80: #{uwmlp_forward.1} parent=1 // pred_region
      %135 = vsyncadd [#allocation12], 0
      %s136 = sshll.u32 %s19, 4
      %s137 = int_to_ptr.hbm [resolvable:$true] %s136
      %s138 = sshll.u32 [#allocation11], 4
      %s139 = int_to_ptr.vmem [resolvable:$true] %s138
      %144 = dma.hbm_to_vmem [thread:$0]  %s137, 4096, %s139, [#allocation12], 128, 128, 8
    $region81: #{uwmlp_forward.1} parent=1 // pred_fallthru
      _
    // Predicated region
    $region82: #{uwmlp_forward.1} parent=1 // pred_check
      _
    $region83: #{uwmlp_forward.1} parent=1 // pred_check_branch
      %146 = sbr.rel (0) target = $region85
    $region84: #{uwmlp_forward.1} parent=1 // pred_region
      _
    $region85: #{uwmlp_forward.1} parent=1 // pred_fallthru
      _
    // Predicated region
    $region86: #{uwmlp_forward.1} parent=1 // pred_check
      _
    $region87: #{uwmlp_forward.1} parent=1 // pred_check_branch
      %148 = sbr.rel (0) target = $region89
    $region88: #{uwmlp_forward.1} parent=1 // pred_region
      _
    $region89: #{uwmlp_forward.1} parent=1 // pred_fallthru
      _
    // Predicated region
    $region90: #{uwmlp_forward.1} parent=1 // pred_check
      _
    $region91: #{uwmlp_forward.1} parent=1 // pred_check_branch
      %150 = sbr.rel (0) target = $region93
    $region92: #{uwmlp_forward.1} parent=1 // pred_region
      _
    $region93: #{uwmlp_forward.1} parent=1 // pred_fallthru
      _
    // Predicated region
    $region94: #{uwmlp_forward.1} parent=1 // pred_check
      _
    $region95: #{uwmlp_forward.1} parent=1 // pred_check_branch
      %152 = sbr.rel (0) target = $region97
    $region96: #{uwmlp_forward.1} parent=1 // pred_region
      _
    $region97: #{uwmlp_forward.1} parent=1 // pred_fallthru
      _
    // Predicated region
    $region98: #{uwmlp_forward.1} parent=1 // pred_check
      _
    $region99: #{uwmlp_forward.1} parent=1 // pred_check_branch
      %154 = sbr.rel (0) target = $region101
    $region100: #{uwmlp_forward.1} parent=1 // pred_region
      _
    $region101: #{uwmlp_forward.1} parent=1 // pred_fallthru
      _
    // Predicated region
    $region102: #{uwmlp_forward.1} parent=1 // pred_check
      _
    $region103: #{uwmlp_forward.1} parent=1 // pred_check_branch
      %156 = sbr.rel (0) target = $region105
    $region104: #{uwmlp_forward.1} parent=1 // pred_region
      _
    $region105: #{uwmlp_forward.1} parent=1 // pred_fallthru
      _
    // Predicated region
    $region106: #{uwmlp_forward.1} parent=1 // pred_check
      _
    $region107: #{uwmlp_forward.1} parent=1 // pred_check_branch
      %158 = sbr.rel (0) target = $region109
    $region108: #{uwmlp_forward.1} parent=1 // pred_region
      _
    $region109: #{uwmlp_forward.1} parent=1 // pred_fallthru
      _
    // Predicated region
    $region110: #{uwmlp_forward.1} parent=1 // pred_check
      _
    $region111: #{uwmlp_forward.1} parent=1 // pred_check_branch
      %160 = sbr.rel (0) target = $region113
    $region112: #{uwmlp_forward.1} parent=1 // pred_region
      _
    $region113: #{uwmlp_forward.1} parent=1 // pred_fallthru
      _
    // Predicated region
    $region114: #{uwmlp_forward.1} parent=1 // pred_check
      _
    $region115: #{uwmlp_forward.1} parent=1 // pred_check_branch
      %162 = sbr.rel (0) target = $region117
    $region116: #{uwmlp_forward.1} parent=1 // pred_region
      %164 = dma.done [#allocation4], 4096
    $region117: #{uwmlp_forward.1} parent=1 // pred_fallthru
      _
    // Predicated region
    $region118: #{uwmlp_forward.1} parent=1 // pred_check
      _
    $region119: #{uwmlp_forward.1} parent=1 // pred_check_branch
      %166 = sbr.rel (0) target = $region121
    $region120: #{uwmlp_forward.1} parent=1 // pred_region
      %168 = dma.done [#allocation6], 4096
    $region121: #{uwmlp_forward.1} parent=1 // pred_fallthru
      _
    // Predicated region
    $region122: #{uwmlp_forward.1} parent=1 // pred_check
      _
    $region123: #{uwmlp_forward.1} parent=1 // pred_check_branch
      %170 = sbr.rel (0) target = $region125
    $region124: #{uwmlp_forward.1} parent=1 // pred_region
      %172 = dma.done [#allocation6], 4096
    $region125: #{uwmlp_forward.1} parent=1 // pred_fallthru
      _
    // Predicated region
    $region126: #{uwmlp_forward.1} parent=1 // pred_check
      _
    $region127: #{uwmlp_forward.1} parent=1 // pred_check_branch
      %174 = sbr.rel (0) target = $region129
    $region128: #{uwmlp_forward.1} parent=1 // pred_region
      %176 = dma.done [#allocation9], 4096
    $region129: #{uwmlp_forward.1} parent=1 // pred_fallthru
      _
    // Predicated region
    $region130: #{uwmlp_forward.1} parent=1 // pred_check
      _
    $region131: #{uwmlp_forward.1} parent=1 // pred_check_branch
      %178 = sbr.rel (0) target = $region133
    $region132: #{uwmlp_forward.1} parent=1 // pred_region
      %180 = dma.done [#allocation9], 4096
    $region133: #{uwmlp_forward.1} parent=1 // pred_fallthru
      _
    // Predicated region
    $region134: #{uwmlp_forward.1} parent=1 // pred_check
      _
    $region135: #{uwmlp_forward.1} parent=1 // pred_check_branch
      %182 = sbr.rel (0) target = $region137
    $region136: #{uwmlp_forward.1} parent=1 // pred_region
      %184 = dma.done [#allocation12], 4096
    $region137: #{uwmlp_forward.1} parent=1 // pred_fallthru
      _
    %v186 = vld [vmem:[%s0] sm:$0xff]
    %v187 = vld [vmem:[%s0 + $0x8] sm:$0xff]
    %v188 = vld [vmem:[%s0 + $0x10] sm:$0xff]
    %v189 = vld [vmem:[%s0 + $0x18] sm:$0xff]
    %v190 = vld [vmem:[%s1] sm:$0xf]
    %v191 = vld [vmem:[%s1 + $0x4] sm:$0xf]
    %v192 = vld [vmem:[%s2] sm:$0xff]
    %v193 = vld [vmem:[%s2 + $0x8] sm:$0xff]
    %v194 = vld [vmem:[%s2 + $0x10] sm:$0xff]
    %v195 = vld [vmem:[%s2 + $0x18] sm:$0xff]
    %v196 = vld [vmem:[%s2 + $0x20] sm:$0xff]
    %v197 = vld [vmem:[%s2 + $0x28] sm:$0xff]
    %v198 = vld [vmem:[%s2 + $0x30] sm:$0xff]
    %v199 = vld [vmem:[%s2 + $0x38] sm:$0xff]
    %v200 = vld [vmem:[%s2 + $0x40] sm:$0xff]
    %v201 = vld [vmem:[%s2 + $0x48] sm:$0xff]
    %v202 = vld [vmem:[%s2 + $0x50] sm:$0xff]
    %v203 = vld [vmem:[%s2 + $0x58] sm:$0xff]
    %v204 = vld [vmem:[%s2 + $0x60] sm:$0xff]
    %v205 = vld [vmem:[%s2 + $0x68] sm:$0xff]
    %v206 = vld [vmem:[%s2 + $0x70] sm:$0xff]
    %v207 = vld [vmem:[%s2 + $0x78] sm:$0xff]
    %v208 = vld [vmem:[%s2 + $0x80] sm:$0xff]
    %v209 = vld [vmem:[%s2 + $0x88] sm:$0xff]
    %v210 = vld [vmem:[%s2 + $0x90] sm:$0xff]
    %v211 = vld [vmem:[%s2 + $0x98] sm:$0xff]
    %v212 = vld [vmem:[%s2 + $0xa0] sm:$0xff]
    %v213 = vld [vmem:[%s2 + $0xa8] sm:$0xff]
    %v214 = vld [vmem:[%s2 + $0xb0] sm:$0xff]
    %v215 = vld [vmem:[%s2 + $0xb8] sm:$0xff]
    %v216 = vld [vmem:[%s2 + $0xc0] sm:$0xff]
    %v217 = vld [vmem:[%s2 + $0xc8] sm:$0xff]
    %v218 = vld [vmem:[%s2 + $0xd0] sm:$0xff]
    %v219 = vld [vmem:[%s2 + $0xd8] sm:$0xff]
    %v220 = vld [vmem:[%s2 + $0xe0] sm:$0xff]
    %v221 = vld [vmem:[%s2 + $0xe8] sm:$0xff]
    %v222 = vld [vmem:[%s2 + $0xf0] sm:$0xff]
    %v223 = vld [vmem:[%s2 + $0xf8] sm:$0xff]
    %v224 = vld [vmem:[%s2 + $0x100] sm:$0xff]
    %v225 = vld [vmem:[%s2 + $0x108] sm:$0xff]
    %v226 = vld [vmem:[%s2 + $0x110] sm:$0xff]
    %v227 = vld [vmem:[%s2 + $0x118] sm:$0xff]
    %v228 = vld [vmem:[%s2 + $0x120] sm:$0xff]
    %v229 = vld [vmem:[%s2 + $0x128] sm:$0xff]
    %v230 = vld [vmem:[%s2 + $0x130] sm:$0xff]
    %v231 = vld [vmem:[%s2 + $0x138] sm:$0xff]
    %v232 = vld [vmem:[%s2 + $0x140] sm:$0xff]
    %v233 = vld [vmem:[%s2 + $0x148] sm:$0xff]
    %v234 = vld [vmem:[%s2 + $0x150] sm:$0xff]
    %v235 = vld [vmem:[%s2 + $0x158] sm:$0xff]
    %v236 = vld [vmem:[%s2 + $0x160] sm:$0xff]
    %v237 = vld [vmem:[%s2 + $0x168] sm:$0xff]
    %v238 = vld [vmem:[%s2 + $0x170] sm:$0xff]
    %v239 = vld [vmem:[%s2 + $0x178] sm:$0xff]
    %v240 = vld [vmem:[%s2 + $0x180] sm:$0xff]
    %v241 = vld [vmem:[%s2 + $0x188] sm:$0xff]
    %v242 = vld [vmem:[%s2 + $0x190] sm:$0xff]
    %v243 = vld [vmem:[%s2 + $0x198] sm:$0xff]
    %v244 = vld [vmem:[%s2 + $0x1a0] sm:$0xff]
    %v245 = vld [vmem:[%s2 + $0x1a8] sm:$0xff]
    %v246 = vld [vmem:[%s2 + $0x1b0] sm:$0xff]
    %v247 = vld [vmem:[%s2 + $0x1b8] sm:$0xff]
    %v248 = vld [vmem:[%s2 + $0x1c0] sm:$0xff]
    %v249 = vld [vmem:[%s2 + $0x1c8] sm:$0xff]
    %v250 = vld [vmem:[%s2 + $0x1d0] sm:$0xff]
    %v251 = vld [vmem:[%s2 + $0x1d8] sm:$0xff]
    %v252 = vld [vmem:[%s2 + $0x1e0] sm:$0xff]
    %v253 = vld [vmem:[%s2 + $0x1e8] sm:$0xff]
    %v254 = vld [vmem:[%s2 + $0x1f0] sm:$0xff]
    %v255 = vld [vmem:[%s2 + $0x1f8] sm:$0xff]
    %v256 = vld [vmem:[%s3] sm:$0x3]
    %v258 = vperm.slane %v256, 0
    %v259 = vperm.slane %v256, 1
    %v266 = vunpack.c.l.b16 %v186
    %v267 = vunpack.c.h.b16 %v186
    %v268 = vunpack.c.l.b16 %v187
    %v269 = vunpack.c.h.b16 %v187
    %v270 = vunpack.c.l.b16 %v188
    %v271 = vunpack.c.h.b16 %v188
    %v272 = vunpack.c.l.b16 %v189
    %v273 = vunpack.c.h.b16 %v189
    %v274 = vpack.c.b16 %v270, %v266
    %v275 = vpack.c.b16 %v271, %v267
    %v276 = vpack.c.b16 %v272, %v268
    %v277 = vpack.c.b16 %v273, %v269
    %v346 = vunpack.c.l.b16 %v192
    %v347 = vunpack.c.h.b16 %v192
    %v348 = vunpack.c.l.b16 %v193
    %v349 = vunpack.c.h.b16 %v193
    %v350 = vunpack.c.l.b16 %v194
    %v351 = vunpack.c.h.b16 %v194
    %v352 = vunpack.c.l.b16 %v195
    %v353 = vunpack.c.h.b16 %v195
    %v354 = vunpack.c.l.b16 %v196
    %v355 = vunpack.c.h.b16 %v196
    %v356 = vunpack.c.l.b16 %v197
    %v357 = vunpack.c.h.b16 %v197
    %v358 = vunpack.c.l.b16 %v198
    %v359 = vunpack.c.h.b16 %v198
    %v360 = vunpack.c.l.b16 %v199
    %v361 = vunpack.c.h.b16 %v199
    %v362 = vunpack.c.l.b16 %v200
    %v363 = vunpack.c.h.b16 %v200
    %v364 = vunpack.c.l.b16 %v201
    %v365 = vunpack.c.h.b16 %v201
    %v366 = vunpack.c.l.b16 %v202
    %v367 = vunpack.c.h.b16 %v202
    %v368 = vunpack.c.l.b16 %v203
    %v369 = vunpack.c.h.b16 %v203
    %v370 = vunpack.c.l.b16 %v204
    %v371 = vunpack.c.h.b16 %v204
    %v372 = vunpack.c.l.b16 %v205
    %v373 = vunpack.c.h.b16 %v205
    %v374 = vunpack.c.l.b16 %v206
    %v375 = vunpack.c.h.b16 %v206
    %v376 = vunpack.c.l.b16 %v207
    %v377 = vunpack.c.h.b16 %v207
    %v378 = vunpack.c.l.b16 %v208
    %v379 = vunpack.c.h.b16 %v208
    %v380 = vunpack.c.l.b16 %v209
    %v381 = vunpack.c.h.b16 %v209
    %v382 = vunpack.c.l.b16 %v210
    %v383 = vunpack.c.h.b16 %v210
    %v384 = vunpack.c.l.b16 %v211
    %v385 = vunpack.c.h.b16 %v211
    %v386 = vunpack.c.l.b16 %v212
    %v387 = vunpack.c.h.b16 %v212
    %v388 = vunpack.c.l.b16 %v213
    %v389 = vunpack.c.h.b16 %v213
    %v390 = vunpack.c.l.b16 %v214
    %v391 = vunpack.c.h.b16 %v214
    %v392 = vunpack.c.l.b16 %v215
    %v393 = vunpack.c.h.b16 %v215
    %v394 = vunpack.c.l.b16 %v216
    %v395 = vunpack.c.h.b16 %v216
    %v396 = vunpack.c.l.b16 %v217
    %v397 = vunpack.c.h.b16 %v217
    %v398 = vunpack.c.l.b16 %v218
    %v399 = vunpack.c.h.b16 %v218
    %v400 = vunpack.c.l.b16 %v219
    %v401 = vunpack.c.h.b16 %v219
    %v402 = vunpack.c.l.b16 %v220
    %v403 = vunpack.c.h.b16 %v220
    %v404 = vunpack.c.l.b16 %v221
    %v405 = vunpack.c.h.b16 %v221
    %v406 = vunpack.c.l.b16 %v222
    %v407 = vunpack.c.h.b16 %v222
    %v408 = vunpack.c.l.b16 %v223
    %v409 = vunpack.c.h.b16 %v223
    %v410 = vunpack.c.l.b16 %v224
    %v411 = vunpack.c.h.b16 %v224
    %v412 = vunpack.c.l.b16 %v225
    %v413 = vunpack.c.h.b16 %v225
    %v414 = vunpack.c.l.b16 %v226
    %v415 = vunpack.c.h.b16 %v226
    %v416 = vunpack.c.l.b16 %v227
    %v417 = vunpack.c.h.b16 %v227
    %v418 = vunpack.c.l.b16 %v228
    %v419 = vunpack.c.h.b16 %v228
    %v420 = vunpack.c.l.b16 %v229
    %v421 = vunpack.c.h.b16 %v229
    %v422 = vunpack.c.l.b16 %v230
    %v423 = vunpack.c.h.b16 %v230
    %v424 = vunpack.c.l.b16 %v231
    %v425 = vunpack.c.h.b16 %v231
    %v426 = vunpack.c.l.b16 %v232
    %v427 = vunpack.c.h.b16 %v232
    %v428 = vunpack.c.l.b16 %v233
    %v429 = vunpack.c.h.b16 %v233
    %v430 = vunpack.c.l.b16 %v234
    %v431 = vunpack.c.h.b16 %v234
    %v432 = vunpack.c.l.b16 %v235
    %v433 = vunpack.c.h.b16 %v235
    %v434 = vunpack.c.l.b16 %v236
    %v435 = vunpack.c.h.b16 %v236
    %v436 = vunpack.c.l.b16 %v237
    %v437 = vunpack.c.h.b16 %v237
    %v438 = vunpack.c.l.b16 %v238
    %v439 = vunpack.c.h.b16 %v238
    %v440 = vunpack.c.l.b16 %v239
    %v441 = vunpack.c.h.b16 %v239
    %v442 = vunpack.c.l.b16 %v240
    %v443 = vunpack.c.h.b16 %v240
    %v444 = vunpack.c.l.b16 %v241
    %v445 = vunpack.c.h.b16 %v241
    %v446 = vunpack.c.l.b16 %v242
    %v447 = vunpack.c.h.b16 %v242
    %v448 = vunpack.c.l.b16 %v243
    %v449 = vunpack.c.h.b16 %v243
    %v450 = vunpack.c.l.b16 %v244
    %v451 = vunpack.c.h.b16 %v244
    %v452 = vunpack.c.l.b16 %v245
    %v453 = vunpack.c.h.b16 %v245
    %v454 = vunpack.c.l.b16 %v246
    %v455 = vunpack.c.h.b16 %v246
    %v456 = vunpack.c.l.b16 %v247
    %v457 = vunpack.c.h.b16 %v247
    %v458 = vunpack.c.l.b16 %v248
    %v459 = vunpack.c.h.b16 %v248
    %v460 = vunpack.c.l.b16 %v249
    %v461 = vunpack.c.h.b16 %v249
    %v462 = vunpack.c.l.b16 %v250
    %v463 = vunpack.c.h.b16 %v250
    %v464 = vunpack.c.l.b16 %v251
    %v465 = vunpack.c.h.b16 %v251
    %v466 = vunpack.c.l.b16 %v252
    %v467 = vunpack.c.h.b16 %v252
    %v468 = vunpack.c.l.b16 %v253
    %v469 = vunpack.c.h.b16 %v253
    %v470 = vunpack.c.l.b16 %v254
    %v471 = vunpack.c.h.b16 %v254
    %v472 = vunpack.c.l.b16 %v255
    %v473 = vunpack.c.h.b16 %v255
    %v474 = vpack.c.b16 %v348, %v346
    %v475 = vpack.c.b16 %v349, %v347
    %v476 = vpack.c.b16 %v352, %v350
    %v477 = vpack.c.b16 %v353, %v351
    %v478 = vpack.c.b16 %v356, %v354
    %v479 = vpack.c.b16 %v357, %v355
    %v480 = vpack.c.b16 %v360, %v358
    %v481 = vpack.c.b16 %v361, %v359
    %v482 = vpack.c.b16 %v364, %v362
    %v483 = vpack.c.b16 %v365, %v363
    %v484 = vpack.c.b16 %v368, %v366
    %v485 = vpack.c.b16 %v369, %v367
    %v486 = vpack.c.b16 %v372, %v370
    %v487 = vpack.c.b16 %v373, %v371
    %v488 = vpack.c.b16 %v376, %v374
    %v489 = vpack.c.b16 %v377, %v375
    %v490 = vpack.c.b16 %v380, %v378
    %v491 = vpack.c.b16 %v381, %v379
    %v492 = vpack.c.b16 %v384, %v382
    %v493 = vpack.c.b16 %v385, %v383
    %v494 = vpack.c.b16 %v388, %v386
    %v495 = vpack.c.b16 %v389, %v387
    %v496 = vpack.c.b16 %v392, %v390
    %v497 = vpack.c.b16 %v393, %v391
    %v498 = vpack.c.b16 %v396, %v394
    %v499 = vpack.c.b16 %v397, %v395
    %v500 = vpack.c.b16 %v400, %v398
    %v501 = vpack.c.b16 %v401, %v399
    %v502 = vpack.c.b16 %v404, %v402
    %v503 = vpack.c.b16 %v405, %v403
    %v504 = vpack.c.b16 %v408, %v406
    %v505 = vpack.c.b16 %v409, %v407
    %v506 = vpack.c.b16 %v412, %v410
    %v507 = vpack.c.b16 %v413, %v411
    %v508 = vpack.c.b16 %v416, %v414
    %v509 = vpack.c.b16 %v417, %v415
    %v510 = vpack.c.b16 %v420, %v418
    %v511 = vpack.c.b16 %v421, %v419
    %v512 = vpack.c.b16 %v424, %v422
    %v513 = vpack.c.b16 %v425, %v423
    %v514 = vpack.c.b16 %v428, %v426
    %v515 = vpack.c.b16 %v429, %v427
    %v516 = vpack.c.b16 %v432, %v430
    %v517 = vpack.c.b16 %v433, %v431
    %v518 = vpack.c.b16 %v436, %v434
    %v519 = vpack.c.b16 %v437, %v435
    %v520 = vpack.c.b16 %v440, %v438
    %v521 = vpack.c.b16 %v441, %v439
    %v522 = vpack.c.b16 %v444, %v442
    %v523 = vpack.c.b16 %v445, %v443
    %v524 = vpack.c.b16 %v448, %v446
    %v525 = vpack.c.b16 %v449, %v447
    %v526 = vpack.c.b16 %v452, %v450
    %v527 = vpack.c.b16 %v453, %v451
    %v528 = vpack.c.b16 %v456, %v454
    %v529 = vpack.c.b16 %v457, %v455
    %v530 = vpack.c.b16 %v460, %v458
    %v531 = vpack.c.b16 %v461, %v459
    %v532 = vpack.c.b16 %v464, %v462
    %v533 = vpack.c.b16 %v465, %v463
    %v534 = vpack.c.b16 %v468, %v466
    %v535 = vpack.c.b16 %v469, %v467
    %v536 = vpack.c.b16 %v472, %v470
    %v537 = vpack.c.b16 %v473, %v471
    %602 = vmatpush.bf16.msra.mxu0 %v488
    %603 = vmatpush.bf16.msra.mxu0 %v486
    %604 = vmatpush.bf16.msra.mxu0 %v484
    %605 = vmatpush.bf16.msra.mxu0 %v482
    %606 = vmatpush.bf16.msra.mxu0 %v480
    %607 = vmatpush.bf16.msra.mxu0 %v478
    %608 = vmatpush.bf16.msra.mxu0 %v476
    %609 = vmatpush.bf16.msra.mxu0 %v474
    %610 = vmatmul.bf16.gmra.mxu0 %v274
    %v611 = vpop.f32.mrf.mxu0
    %v612 = vadd.f32 %v258, %v611
    %v613 = vpop.f32.mrf.mxu0
    %v614 = vadd.f32 %v258, %v613
    %615 = vdwg.mxu0
    %616 = vmatpush.bf16.msra.mxu0 %v504
    %617 = vmatpush.bf16.msra.mxu0 %v502
    %618 = vmatpush.bf16.msra.mxu0 %v500
    %619 = vmatpush.bf16.msra.mxu0 %v498
    %620 = vmatpush.bf16.msra.mxu0 %v496
    %621 = vmatpush.bf16.msra.mxu0 %v494
    %622 = vmatpush.bf16.msra.mxu0 %v492
    %623 = vmatpush.bf16.msra.mxu0 %v490
    %624 = vmatmul.bf16.gmra.mxu0 %v275
    %v625 = vpop.f32.mrf.mxu0
    %v626 = vadd.f32 %v612, %v625
    %v627 = vpop.f32.mrf.mxu0
    %v628 = vadd.f32 %v614, %v627
    %629 = vdwg.mxu0
    %630 = vmatpush.bf16.msra.mxu0 %v520
    %631 = vmatpush.bf16.msra.mxu0 %v518
    %632 = vmatpush.bf16.msra.mxu0 %v516
    %633 = vmatpush.bf16.msra.mxu0 %v514
    %634 = vmatpush.bf16.msra.mxu0 %v512
    %635 = vmatpush.bf16.msra.mxu0 %v510
    %636 = vmatpush.bf16.msra.mxu0 %v508
    %637 = vmatpush.bf16.msra.mxu0 %v506
    %638 = vmatmul.bf16.gmra.mxu0 %v276
    %v639 = vpop.f32.mrf.mxu0
    %v640 = vadd.f32 %v626, %v639
    %v641 = vpop.f32.mrf.mxu0
    %v642 = vadd.f32 %v628, %v641
    %643 = vdwg.mxu0
    %644 = vmatpush.bf16.msra.mxu0 %v536
    %645 = vmatpush.bf16.msra.mxu0 %v534
    %646 = vmatpush.bf16.msra.mxu0 %v532
    %647 = vmatpush.bf16.msra.mxu0 %v530
    %648 = vmatpush.bf16.msra.mxu0 %v528
    %649 = vmatpush.bf16.msra.mxu0 %v526
    %650 = vmatpush.bf16.msra.mxu0 %v524
    %651 = vmatpush.bf16.msra.mxu0 %v522
    %652 = vmatmul.bf16.gmra.mxu0 %v277
    %v653 = vpop.f32.mrf.mxu0
    %v654 = vadd.f32 %v640, %v653
    %v655 = vpop.f32.mrf.mxu0
    %v656 = vadd.f32 %v642, %v655
    %657 = vdwg.mxu0
    %658 = vmatpush.bf16.msra.mxu0 %v489
    %659 = vmatpush.bf16.msra.mxu0 %v487
    %660 = vmatpush.bf16.msra.mxu0 %v485
    %661 = vmatpush.bf16.msra.mxu0 %v483
    %662 = vmatpush.bf16.msra.mxu0 %v481
    %663 = vmatpush.bf16.msra.mxu0 %v479
    %664 = vmatpush.bf16.msra.mxu0 %v477
    %665 = vmatpush.bf16.msra.mxu0 %v475
    %666 = vmatmul.bf16.gmra.mxu0 %v274
    %v667 = vpop.f32.mrf.mxu0
    %v668 = vadd.f32 %v259, %v667
    %v669 = vpop.f32.mrf.mxu0
    %v670 = vadd.f32 %v259, %v669
    %671 = vdwg.mxu0
    %672 = vmatpush.bf16.msra.mxu0 %v505
    %673 = vmatpush.bf16.msra.mxu0 %v503
    %674 = vmatpush.bf16.msra.mxu0 %v501
    %675 = vmatpush.bf16.msra.mxu0 %v499
    %676 = vmatpush.bf16.msra.mxu0 %v497
    %677 = vmatpush.bf16.msra.mxu0 %v495
    %678 = vmatpush.bf16.msra.mxu0 %v493
    %679 = vmatpush.bf16.msra.mxu0 %v491
    %680 = vmatmul.bf16.gmra.mxu0 %v275
    %v681 = vpop.f32.mrf.mxu0
    %v682 = vadd.f32 %v668, %v681
    %v683 = vpop.f32.mrf.mxu0
    %v684 = vadd.f32 %v670, %v683
    %685 = vdwg.mxu0
    %686 = vmatpush.bf16.msra.mxu0 %v521
    %687 = vmatpush.bf16.msra.mxu0 %v519
    %688 = vmatpush.bf16.msra.mxu0 %v517
    %689 = vmatpush.bf16.msra.mxu0 %v515
    %690 = vmatpush.bf16.msra.mxu0 %v513
    %691 = vmatpush.bf16.msra.mxu0 %v511
    %692 = vmatpush.bf16.msra.mxu0 %v509
    %693 = vmatpush.bf16.msra.mxu0 %v507
    %694 = vmatmul.bf16.gmra.mxu0 %v276
    %v695 = vpop.f32.mrf.mxu0
    %v696 = vadd.f32 %v682, %v695
    %v697 = vpop.f32.mrf.mxu0
    %v698 = vadd.f32 %v684, %v697
    %699 = vdwg.mxu0
    %700 = vmatpush.bf16.msra.mxu0 %v537
    %701 = vmatpush.bf16.msra.mxu0 %v535
    %702 = vmatpush.bf16.msra.mxu0 %v533
    %703 = vmatpush.bf16.msra.mxu0 %v531
    %704 = vmatpush.bf16.msra.mxu0 %v529
    %705 = vmatpush.bf16.msra.mxu0 %v527
    %706 = vmatpush.bf16.msra.mxu0 %v525
    %707 = vmatpush.bf16.msra.mxu0 %v523
    %708 = vmatmul.bf16.gmra.mxu0 %v277
    %v709 = vpop.f32.mrf.mxu0
    %v710 = vadd.f32 %v696, %v709
    %v711 = vpop.f32.mrf.mxu0
    %v712 = vadd.f32 %v698, %v711
    %713 = vdwg.mxu0
    %v714 = vmax.f32 %v654, 0.0
    %v715 = vmax.f32 %v710, 0.0
    %v716 = vmax.f32 %v656, 0.0
    %v717 = vmax.f32 %v712, 0.0
    %v718 = vpack.c.bf16 %v716, %v714
    %v719 = vpack.c.bf16 %v717, %v715
    %v720 = vld [vmem:[%s4] sm:$0xff]
    %v721 = vld [vmem:[%s4 + $0x8] sm:$0xff]
    %v722 = vld [vmem:[%s4 + $0x10] sm:$0xff]
    %v723 = vld [vmem:[%s4 + $0x18] sm:$0xff]
    %v724 = vld [vmem:[%s4 + $0x20] sm:$0xff]
    %v725 = vld [vmem:[%s4 + $0x28] sm:$0xff]
    %v726 = vld [vmem:[%s4 + $0x30] sm:$0xff]
    %v727 = vld [vmem:[%s4 + $0x38] sm:$0xff]
    %v728 = vld [vmem:[%s4 + $0x40] sm:$0xff]
    %v729 = vld [vmem:[%s4 + $0x48] sm:$0xff]
    %v730 = vld [vmem:[%s4 + $0x50] sm:$0xff]
    %v731 = vld [vmem:[%s4 + $0x58] sm:$0xff]
    %v732 = vld [vmem:[%s4 + $0x60] sm:$0xff]
    %v733 = vld [vmem:[%s4 + $0x68] sm:$0xff]
    %v734 = vld [vmem:[%s4 + $0x70] sm:$0xff]
    %v735 = vld [vmem:[%s4 + $0x78] sm:$0xff]
    %v736 = vld [vmem:[%s4 + $0x80] sm:$0xff]
    %v737 = vld [vmem:[%s4 + $0x88] sm:$0xff]
    %v738 = vld [vmem:[%s4 + $0x90] sm:$0xff]
    %v739 = vld [vmem:[%s4 + $0x98] sm:$0xff]
    %v740 = vld [vmem:[%s4 + $0xa0] sm:$0xff]
    %v741 = vld [vmem:[%s4 + $0xa8] sm:$0xff]
    %v742 = vld [vmem:[%s4 + $0xb0] sm:$0xff]
    %v743 = vld [vmem:[%s4 + $0xb8] sm:$0xff]
    %v744 = vld [vmem:[%s4 + $0xc0] sm:$0xff]
    %v745 = vld [vmem:[%s4 + $0xc8] sm:$0xff]
    %v746 = vld [vmem:[%s4 + $0xd0] sm:$0xff]
    %v747 = vld [vmem:[%s4 + $0xd8] sm:$0xff]
    %v748 = vld [vmem:[%s4 + $0xe0] sm:$0xff]
    %v749 = vld [vmem:[%s4 + $0xe8] sm:$0xff]
    %v750 = vld [vmem:[%s4 + $0xf0] sm:$0xff]
    %v751 = vld [vmem:[%s4 + $0xf8] sm:$0xff]
    %v752 = vld [vmem:[%s5] sm:$0x3]
    %v754 = vperm.slane %v752, 0
    %v755 = vperm.slane %v752, 1
    %v790 = vunpack.c.l.b16 %v720
    %v791 = vunpack.c.h.b16 %v720
    %v792 = vunpack.c.l.b16 %v721
    %v793 = vunpack.c.h.b16 %v721
    %v794 = vunpack.c.l.b16 %v722
    %v795 = vunpack.c.h.b16 %v722
    %v796 = vunpack.c.l.b16 %v723
    %v797 = vunpack.c.h.b16 %v723
    %v798 = vunpack.c.l.b16 %v724
    %v799 = vunpack.c.h.b16 %v724
    %v800 = vunpack.c.l.b16 %v725
    %v801 = vunpack.c.h.b16 %v725
    %v802 = vunpack.c.l.b16 %v726
    %v803 = vunpack.c.h.b16 %v726
    %v804 = vunpack.c.l.b16 %v727
    %v805 = vunpack.c.h.b16 %v727
    %v806 = vunpack.c.l.b16 %v728
    %v807 = vunpack.c.h.b16 %v728
    %v808 = vunpack.c.l.b16 %v729
    %v809 = vunpack.c.h.b16 %v729
    %v810 = vunpack.c.l.b16 %v730
    %v811 = vunpack.c.h.b16 %v730
    %v812 = vunpack.c.l.b16 %v731
    %v813 = vunpack.c.h.b16 %v731
    %v814 = vunpack.c.l.b16 %v732
    %v815 = vunpack.c.h.b16 %v732
    %v816 = vunpack.c.l.b16 %v733
    %v817 = vunpack.c.h.b16 %v733
    %v818 = vunpack.c.l.b16 %v734
    %v819 = vunpack.c.h.b16 %v734
    %v820 = vunpack.c.l.b16 %v735
    %v821 = vunpack.c.h.b16 %v735
    %v822 = vunpack.c.l.b16 %v736
    %v823 = vunpack.c.h.b16 %v736
    %v824 = vunpack.c.l.b16 %v737
    %v825 = vunpack.c.h.b16 %v737
    %v826 = vunpack.c.l.b16 %v738
    %v827 = vunpack.c.h.b16 %v738
    %v828 = vunpack.c.l.b16 %v739
    %v829 = vunpack.c.h.b16 %v739
    %v830 = vunpack.c.l.b16 %v740
    %v831 = vunpack.c.h.b16 %v740
    %v832 = vunpack.c.l.b16 %v741
    %v833 = vunpack.c.h.b16 %v741
    %v834 = vunpack.c.l.b16 %v742
    %v835 = vunpack.c.h.b16 %v742
    %v836 = vunpack.c.l.b16 %v743
    %v837 = vunpack.c.h.b16 %v743
    %v838 = vunpack.c.l.b16 %v744
    %v839 = vunpack.c.h.b16 %v744
    %v840 = vunpack.c.l.b16 %v745
    %v841 = vunpack.c.h.b16 %v745
    %v842 = vunpack.c.l.b16 %v746
    %v843 = vunpack.c.h.b16 %v746
    %v844 = vunpack.c.l.b16 %v747
    %v845 = vunpack.c.h.b16 %v747
    %v846 = vunpack.c.l.b16 %v748
    %v847 = vunpack.c.h.b16 %v748
    %v848 = vunpack.c.l.b16 %v749
    %v849 = vunpack.c.h.b16 %v749
    %v850 = vunpack.c.l.b16 %v750
    %v851 = vunpack.c.h.b16 %v750
    %v852 = vunpack.c.l.b16 %v751
    %v853 = vunpack.c.h.b16 %v751
    %v854 = vpack.c.b16 %v792, %v790
    %v855 = vpack.c.b16 %v793, %v791
    %v856 = vpack.c.b16 %v796, %v794
    %v857 = vpack.c.b16 %v797, %v795
    %v858 = vpack.c.b16 %v800, %v798
    %v859 = vpack.c.b16 %v801, %v799
    %v860 = vpack.c.b16 %v804, %v802
    %v861 = vpack.c.b16 %v805, %v803
    %v862 = vpack.c.b16 %v808, %v806
    %v863 = vpack.c.b16 %v809, %v807
    %v864 = vpack.c.b16 %v812, %v810
    %v865 = vpack.c.b16 %v813, %v811
    %v866 = vpack.c.b16 %v816, %v814
    %v867 = vpack.c.b16 %v817, %v815
    %v868 = vpack.c.b16 %v820, %v818
    %v869 = vpack.c.b16 %v821, %v819
    %v870 = vpack.c.b16 %v824, %v822
    %v871 = vpack.c.b16 %v825, %v823
    %v872 = vpack.c.b16 %v828, %v826
    %v873 = vpack.c.b16 %v829, %v827
    %v874 = vpack.c.b16 %v832, %v830
    %v875 = vpack.c.b16 %v833, %v831
    %v876 = vpack.c.b16 %v836, %v834
    %v877 = vpack.c.b16 %v837, %v835
    %v878 = vpack.c.b16 %v840, %v838
    %v879 = vpack.c.b16 %v841, %v839
    %v880 = vpack.c.b16 %v844, %v842
    %v881 = vpack.c.b16 %v845, %v843
    %v882 = vpack.c.b16 %v848, %v846
    %v883 = vpack.c.b16 %v849, %v847
    %v884 = vpack.c.b16 %v852, %v850
    %v885 = vpack.c.b16 %v853, %v851
    %918 = vmatpush.bf16.msra.mxu0 %v868
    %919 = vmatpush.bf16.msra.mxu0 %v866
    %920 = vmatpush.bf16.msra.mxu0 %v864
    %921 = vmatpush.bf16.msra.mxu0 %v862
    %922 = vmatpush.bf16.msra.mxu0 %v860
    %923 = vmatpush.bf16.msra.mxu0 %v858
    %924 = vmatpush.bf16.msra.mxu0 %v856
    %925 = vmatpush.bf16.msra.mxu0 %v854
    %926 = vmatmul.bf16.gmra.mxu0 %v718
    %v927 = vpop.f32.mrf.mxu0
    %v928 = vadd.f32 %v754, %v927
    %v929 = vpop.f32.mrf.mxu0
    %v930 = vadd.f32 %v754, %v929
    %931 = vdwg.mxu0
    %932 = vmatpush.bf16.msra.mxu0 %v884
    %933 = vmatpush.bf16.msra.mxu0 %v882
    %934 = vmatpush.bf16.msra.mxu0 %v880
    %935 = vmatpush.bf16.msra.mxu0 %v878
    %936 = vmatpush.bf16.msra.mxu0 %v876
    %937 = vmatpush.bf16.msra.mxu0 %v874
    %938 = vmatpush.bf16.msra.mxu0 %v872
    %939 = vmatpush.bf16.msra.mxu0 %v870
    %940 = vmatmul.bf16.gmra.mxu0 %v719
    %v941 = vpop.f32.mrf.mxu0
    %v942 = vadd.f32 %v928, %v941
    %v943 = vpop.f32.mrf.mxu0
    %v944 = vadd.f32 %v930, %v943
    %945 = vdwg.mxu0
    %946 = vmatpush.bf16.msra.mxu0 %v869
    %947 = vmatpush.bf16.msra.mxu0 %v867
    %948 = vmatpush.bf16.msra.mxu0 %v865
    %949 = vmatpush.bf16.msra.mxu0 %v863
    %950 = vmatpush.bf16.msra.mxu0 %v861
    %951 = vmatpush.bf16.msra.mxu0 %v859
    %952 = vmatpush.bf16.msra.mxu0 %v857
    %953 = vmatpush.bf16.msra.mxu0 %v855
    %954 = vmatmul.bf16.gmra.mxu0 %v718
    %v955 = vpop.f32.mrf.mxu0
    %v956 = vadd.f32 %v755, %v955
    %v957 = vpop.f32.mrf.mxu0
    %v958 = vadd.f32 %v755, %v957
    %959 = vdwg.mxu0
    %960 = vmatpush.bf16.msra.mxu0 %v885
    %961 = vmatpush.bf16.msra.mxu0 %v883
    %962 = vmatpush.bf16.msra.mxu0 %v881
    %963 = vmatpush.bf16.msra.mxu0 %v879
    %964 = vmatpush.bf16.msra.mxu0 %v877
    %965 = vmatpush.bf16.msra.mxu0 %v875
    %966 = vmatpush.bf16.msra.mxu0 %v873
    %967 = vmatpush.bf16.msra.mxu0 %v871
    %968 = vmatmul.bf16.gmra.mxu0 %v719
    %v969 = vpop.f32.mrf.mxu0
    %v970 = vadd.f32 %v956, %v969
    %v971 = vpop.f32.mrf.mxu0
    %v972 = vadd.f32 %v958, %v971
    %973 = vdwg.mxu0
    %v974 = vmax.f32 %v942, 0.0
    %v975 = vmax.f32 %v970, 0.0
    %v976 = vmax.f32 %v944, 0.0
    %v977 = vmax.f32 %v972, 0.0
    %v978 = vpack.c.bf16 %v976, %v974
    %v979 = vpack.c.bf16 %v977, %v975
    %v980 = vld [vmem:[%s6] sm:$0xff]
    %v981 = vld [vmem:[%s6 + $0x8] sm:$0xff]
    %v982 = vld [vmem:[%s6 + $0x10] sm:$0xff]
    %v983 = vld [vmem:[%s6 + $0x18] sm:$0xff]
    %v984 = vld [vmem:[%s6 + $0x20] sm:$0xff]
    %v985 = vld [vmem:[%s6 + $0x28] sm:$0xff]
    %v986 = vld [vmem:[%s6 + $0x30] sm:$0xff]
    %v987 = vld [vmem:[%s6 + $0x38] sm:$0xff]
    %v988 = vld [vmem:[%s6 + $0x40] sm:$0xff]
    %v989 = vld [vmem:[%s6 + $0x48] sm:$0xff]
    %v990 = vld [vmem:[%s6 + $0x50] sm:$0xff]
    %v991 = vld [vmem:[%s6 + $0x58] sm:$0xff]
    %v992 = vld [vmem:[%s6 + $0x60] sm:$0xff]
    %v993 = vld [vmem:[%s6 + $0x68] sm:$0xff]
    %v994 = vld [vmem:[%s6 + $0x70] sm:$0xff]
    %v995 = vld [vmem:[%s6 + $0x78] sm:$0xff]
    %v996 = vld [vmem:[%s6 + $0x80] sm:$0xff]
    %v997 = vld [vmem:[%s6 + $0x88] sm:$0xff]
    %v998 = vld [vmem:[%s6 + $0x90] sm:$0xff]
    %v999 = vld [vmem:[%s6 + $0x98] sm:$0xff]
    %v1000 = vld [vmem:[%s6 + $0xa0] sm:$0xff]
    %v1001 = vld [vmem:[%s6 + $0xa8] sm:$0xff]
    %v1002 = vld [vmem:[%s6 + $0xb0] sm:$0xff]
    %v1003 = vld [vmem:[%s6 + $0xb8] sm:$0xff]
    %v1004 = vld [vmem:[%s6 + $0xc0] sm:$0xff]
    %v1005 = vld [vmem:[%s6 + $0xc8] sm:$0xff]
    %v1006 = vld [vmem:[%s6 + $0xd0] sm:$0xff]
    %v1007 = vld [vmem:[%s6 + $0xd8] sm:$0xff]
    %v1008 = vld [vmem:[%s6 + $0xe0] sm:$0xff]
    %v1009 = vld [vmem:[%s6 + $0xe8] sm:$0xff]
    %v1010 = vld [vmem:[%s6 + $0xf0] sm:$0xff]
    %v1011 = vld [vmem:[%s6 + $0xf8] sm:$0xff]
    %v1012 = vld [vmem:[%s7] sm:$0x3]
    %v1014 = vperm.slane %v1012, 0
    %v1015 = vperm.slane %v1012, 1
    %v1050 = vunpack.c.l.b16 %v980
    %v1051 = vunpack.c.h.b16 %v980
    %v1052 = vunpack.c.l.b16 %v981
    %v1053 = vunpack.c.h.b16 %v981
    %v1054 = vunpack.c.l.b16 %v982
    %v1055 = vunpack.c.h.b16 %v982
    %v1056 = vunpack.c.l.b16 %v983
    %v1057 = vunpack.c.h.b16 %v983
    %v1058 = vunpack.c.l.b16 %v984
    %v1059 = vunpack.c.h.b16 %v984
    %v1060 = vunpack.c.l.b16 %v985
    %v1061 = vunpack.c.h.b16 %v985
    %v1062 = vunpack.c.l.b16 %v986
    %v1063 = vunpack.c.h.b16 %v986
    %v1064 = vunpack.c.l.b16 %v987
    %v1065 = vunpack.c.h.b16 %v987
    %v1066 = vunpack.c.l.b16 %v988
    %v1067 = vunpack.c.h.b16 %v988
    %v1068 = vunpack.c.l.b16 %v989
    %v1069 = vunpack.c.h.b16 %v989
    %v1070 = vunpack.c.l.b16 %v990
    %v1071 = vunpack.c.h.b16 %v990
    %v1072 = vunpack.c.l.b16 %v991
    %v1073 = vunpack.c.h.b16 %v991
    %v1074 = vunpack.c.l.b16 %v992
    %v1075 = vunpack.c.h.b16 %v992
    %v1076 = vunpack.c.l.b16 %v993
    %v1077 = vunpack.c.h.b16 %v993
    %v1078 = vunpack.c.l.b16 %v994
    %v1079 = vunpack.c.h.b16 %v994
    %v1080 = vunpack.c.l.b16 %v995
    %v1081 = vunpack.c.h.b16 %v995
    %v1082 = vunpack.c.l.b16 %v996
    %v1083 = vunpack.c.h.b16 %v996
    %v1084 = vunpack.c.l.b16 %v997
    %v1085 = vunpack.c.h.b16 %v997
    %v1086 = vunpack.c.l.b16 %v998
    %v1087 = vunpack.c.h.b16 %v998
    %v1088 = vunpack.c.l.b16 %v999
    %v1089 = vunpack.c.h.b16 %v999
    %v1090 = vunpack.c.l.b16 %v1000
    %v1091 = vunpack.c.h.b16 %v1000
    %v1092 = vunpack.c.l.b16 %v1001
    %v1093 = vunpack.c.h.b16 %v1001
    %v1094 = vunpack.c.l.b16 %v1002
    %v1095 = vunpack.c.h.b16 %v1002
    %v1096 = vunpack.c.l.b16 %v1003
    %v1097 = vunpack.c.h.b16 %v1003
    %v1098 = vunpack.c.l.b16 %v1004
    %v1099 = vunpack.c.h.b16 %v1004
    %v1100 = vunpack.c.l.b16 %v1005
    %v1101 = vunpack.c.h.b16 %v1005
    %v1102 = vunpack.c.l.b16 %v1006
    %v1103 = vunpack.c.h.b16 %v1006
    %v1104 = vunpack.c.l.b16 %v1007
    %v1105 = vunpack.c.h.b16 %v1007
    %v1106 = vunpack.c.l.b16 %v1008
    %v1107 = vunpack.c.h.b16 %v1008
    %v1108 = vunpack.c.l.b16 %v1009
    %v1109 = vunpack.c.h.b16 %v1009
    %v1110 = vunpack.c.l.b16 %v1010
    %v1111 = vunpack.c.h.b16 %v1010
    %v1112 = vunpack.c.l.b16 %v1011
    %v1113 = vunpack.c.h.b16 %v1011
    %v1114 = vpack.c.b16 %v1052, %v1050
    %v1115 = vpack.c.b16 %v1053, %v1051
    %v1116 = vpack.c.b16 %v1056, %v1054
    %v1117 = vpack.c.b16 %v1057, %v1055
    %v1118 = vpack.c.b16 %v1060, %v1058
    %v1119 = vpack.c.b16 %v1061, %v1059
    %v1120 = vpack.c.b16 %v1064, %v1062
    %v1121 = vpack.c.b16 %v1065, %v1063
    %v1122 = vpack.c.b16 %v1068, %v1066
    %v1123 = vpack.c.b16 %v1069, %v1067
    %v1124 = vpack.c.b16 %v1072, %v1070
    %v1125 = vpack.c.b16 %v1073, %v1071
    %v1126 = vpack.c.b16 %v1076, %v1074
    %v1127 = vpack.c.b16 %v1077, %v1075
    %v1128 = vpack.c.b16 %v1080, %v1078
    %v1129 = vpack.c.b16 %v1081, %v1079
    %v1130 = vpack.c.b16 %v1084, %v1082
    %v1131 = vpack.c.b16 %v1085, %v1083
    %v1132 = vpack.c.b16 %v1088, %v1086
    %v1133 = vpack.c.b16 %v1089, %v1087
    %v1134 = vpack.c.b16 %v1092, %v1090
    %v1135 = vpack.c.b16 %v1093, %v1091
    %v1136 = vpack.c.b16 %v1096, %v1094
    %v1137 = vpack.c.b16 %v1097, %v1095
    %v1138 = vpack.c.b16 %v1100, %v1098
    %v1139 = vpack.c.b16 %v1101, %v1099
    %v1140 = vpack.c.b16 %v1104, %v1102
    %v1141 = vpack.c.b16 %v1105, %v1103
    %v1142 = vpack.c.b16 %v1108, %v1106
    %v1143 = vpack.c.b16 %v1109, %v1107
    %v1144 = vpack.c.b16 %v1112, %v1110
    %v1145 = vpack.c.b16 %v1113, %v1111
    %1178 = vmatpush.bf16.msra.mxu0 %v1128
    %1179 = vmatpush.bf16.msra.mxu0 %v1126
    %1180 = vmatpush.bf16.msra.mxu0 %v1124
    %1181 = vmatpush.bf16.msra.mxu0 %v1122
    %1182 = vmatpush.bf16.msra.mxu0 %v1120
    %1183 = vmatpush.bf16.msra.mxu0 %v1118
    %1184 = vmatpush.bf16.msra.mxu0 %v1116
    %1185 = vmatpush.bf16.msra.mxu0 %v1114
    %1186 = vmatmul.bf16.gmra.mxu0 %v978
    %v1187 = vpop.f32.mrf.mxu0
    %v1188 = vadd.f32 %v1014, %v1187
    %v1189 = vpop.f32.mrf.mxu0
    %v1190 = vadd.f32 %v1014, %v1189
    %1191 = vdwg.mxu0
    %1192 = vmatpush.bf16.msra.mxu0 %v1144
    %1193 = vmatpush.bf16.msra.mxu0 %v1142
    %1194 = vmatpush.bf16.msra.mxu0 %v1140
    %1195 = vmatpush.bf16.msra.mxu0 %v1138
    %1196 = vmatpush.bf16.msra.mxu0 %v1136
    %1197 = vmatpush.bf16.msra.mxu0 %v1134
    %1198 = vmatpush.bf16.msra.mxu0 %v1132
    %1199 = vmatpush.bf16.msra.mxu0 %v1130
    %1200 = vmatmul.bf16.gmra.mxu0 %v979
    %v1201 = vpop.f32.mrf.mxu0
    %v1202 = vadd.f32 %v1188, %v1201
    %v1203 = vpop.f32.mrf.mxu0
    %v1204 = vadd.f32 %v1190, %v1203
    %1205 = vdwg.mxu0
    %1206 = vmatpush.bf16.msra.mxu0 %v1129
    %1207 = vmatpush.bf16.msra.mxu0 %v1127
    %1208 = vmatpush.bf16.msra.mxu0 %v1125
    %1209 = vmatpush.bf16.msra.mxu0 %v1123
    %1210 = vmatpush.bf16.msra.mxu0 %v1121
    %1211 = vmatpush.bf16.msra.mxu0 %v1119
    %1212 = vmatpush.bf16.msra.mxu0 %v1117
    %1213 = vmatpush.bf16.msra.mxu0 %v1115
    %1214 = vmatmul.bf16.gmra.mxu0 %v978
    %v1215 = vpop.f32.mrf.mxu0
    %v1216 = vadd.f32 %v1015, %v1215
    %v1217 = vpop.f32.mrf.mxu0
    %v1218 = vadd.f32 %v1015, %v1217
    %1219 = vdwg.mxu0
    %1220 = vmatpush.bf16.msra.mxu0 %v1145
    %1221 = vmatpush.bf16.msra.mxu0 %v1143
    %1222 = vmatpush.bf16.msra.mxu0 %v1141
    %1223 = vmatpush.bf16.msra.mxu0 %v1139
    %1224 = vmatpush.bf16.msra.mxu0 %v1137
    %1225 = vmatpush.bf16.msra.mxu0 %v1135
    %1226 = vmatpush.bf16.msra.mxu0 %v1133
    %1227 = vmatpush.bf16.msra.mxu0 %v1131
    %1228 = vmatmul.bf16.gmra.mxu0 %v979
    %v1229 = vpop.f32.mrf.mxu0
    %v1230 = vadd.f32 %v1216, %v1229
    %v1231 = vpop.f32.mrf.mxu0
    %v1232 = vadd.f32 %v1218, %v1231
    %1233 = vdwg.mxu0
    %v1234 = vmax.f32 %v1202, 0.0
    %v1235 = vmax.f32 %v1230, 0.0
    %v1236 = vmax.f32 %v1204, 0.0
    %v1237 = vmax.f32 %v1232, 0.0
    %v1238 = vpack.c.bf16 %v1236, %v1234
    %v1239 = vpack.c.bf16 %v1237, %v1235
    %v1240 = vld [vmem:[#allocation3] sm:$0xff]
    %v1241 = vld [vmem:[#allocation3 + $0x8] sm:$0xff]
    %v1242 = vld [vmem:[#allocation3 + $0x10] sm:$0xff]
    %v1243 = vld [vmem:[#allocation3 + $0x18] sm:$0xff]
    %v1244 = vld [vmem:[#allocation3 + $0x20] sm:$0xff]
    %v1245 = vld [vmem:[#allocation3 + $0x28] sm:$0xff]
    %v1246 = vld [vmem:[#allocation3 + $0x30] sm:$0xff]
    %v1247 = vld [vmem:[#allocation3 + $0x38] sm:$0xff]
    %v1248 = vld [vmem:[#allocation3 + $0x40] sm:$0xff]
    %v1249 = vld [vmem:[#allocation3 + $0x48] sm:$0xff]
    %v1250 = vld [vmem:[#allocation3 + $0x50] sm:$0xff]
    %v1251 = vld [vmem:[#allocation3 + $0x58] sm:$0xff]
    %v1252 = vld [vmem:[#allocation3 + $0x60] sm:$0xff]
    %v1253 = vld [vmem:[#allocation3 + $0x68] sm:$0xff]
    %v1254 = vld [vmem:[#allocation3 + $0x70] sm:$0xff]
    %v1255 = vld [vmem:[#allocation3 + $0x78] sm:$0xff]
    %v1256 = vld [vmem:[#allocation3 + $0x80] sm:$0xff]
    %v1257 = vld [vmem:[#allocation3 + $0x88] sm:$0xff]
    %v1258 = vld [vmem:[#allocation3 + $0x90] sm:$0xff]
    %v1259 = vld [vmem:[#allocation3 + $0x98] sm:$0xff]
    %v1260 = vld [vmem:[#allocation3 + $0xa0] sm:$0xff]
    %v1261 = vld [vmem:[#allocation3 + $0xa8] sm:$0xff]
    %v1262 = vld [vmem:[#allocation3 + $0xb0] sm:$0xff]
    %v1263 = vld [vmem:[#allocation3 + $0xb8] sm:$0xff]
    %v1264 = vld [vmem:[#allocation3 + $0xc0] sm:$0xff]
    %v1265 = vld [vmem:[#allocation3 + $0xc8] sm:$0xff]
    %v1266 = vld [vmem:[#allocation3 + $0xd0] sm:$0xff]
    %v1267 = vld [vmem:[#allocation3 + $0xd8] sm:$0xff]
    %v1268 = vld [vmem:[#allocation3 + $0xe0] sm:$0xff]
    %v1269 = vld [vmem:[#allocation3 + $0xe8] sm:$0xff]
    %v1270 = vld [vmem:[#allocation3 + $0xf0] sm:$0xff]
    %v1271 = vld [vmem:[#allocation3 + $0xf8] sm:$0xff]
    %v1272 = vld [vmem:[%s9] sm:$0x3]
    %v1274 = vperm.slane %v1272, 0
    %v1275 = vperm.slane %v1272, 1
    %v1310 = vunpack.c.l.b16 %v1240
    %v1311 = vunpack.c.h.b16 %v1240
    %v1312 = vunpack.c.l.b16 %v1241
    %v1313 = vunpack.c.h.b16 %v1241
    %v1314 = vunpack.c.l.b16 %v1242
    %v1315 = vunpack.c.h.b16 %v1242
    %v1316 = vunpack.c.l.b16 %v1243
    %v1317 = vunpack.c.h.b16 %v1243
    %v1318 = vunpack.c.l.b16 %v1244
    %v1319 = vunpack.c.h.b16 %v1244
    %v1320 = vunpack.c.l.b16 %v1245
    %v1321 = vunpack.c.h.b16 %v1245
    %v1322 = vunpack.c.l.b16 %v1246
    %v1323 = vunpack.c.h.b16 %v1246
    %v1324 = vunpack.c.l.b16 %v1247
    %v1325 = vunpack.c.h.b16 %v1247
    %v1326 = vunpack.c.l.b16 %v1248
    %v1327 = vunpack.c.h.b16 %v1248
    %v1328 = vunpack.c.l.b16 %v1249
    %v1329 = vunpack.c.h.b16 %v1249
    %v1330 = vunpack.c.l.b16 %v1250
    %v1331 = vunpack.c.h.b16 %v1250
    %v1332 = vunpack.c.l.b16 %v1251
    %v1333 = vunpack.c.h.b16 %v1251
    %v1334 = vunpack.c.l.b16 %v1252
    %v1335 = vunpack.c.h.b16 %v1252
    %v1336 = vunpack.c.l.b16 %v1253
    %v1337 = vunpack.c.h.b16 %v1253
    %v1338 = vunpack.c.l.b16 %v1254
    %v1339 = vunpack.c.h.b16 %v1254
    %v1340 = vunpack.c.l.b16 %v1255
    %v1341 = vunpack.c.h.b16 %v1255
    %v1342 = vunpack.c.l.b16 %v1256
    %v1343 = vunpack.c.h.b16 %v1256
    %v1344 = vunpack.c.l.b16 %v1257
    %v1345 = vunpack.c.h.b16 %v1257
    %v1346 = vunpack.c.l.b16 %v1258
    %v1347 = vunpack.c.h.b16 %v1258
    %v1348 = vunpack.c.l.b16 %v1259
    %v1349 = vunpack.c.h.b16 %v1259
    %v1350 = vunpack.c.l.b16 %v1260
    %v1351 = vunpack.c.h.b16 %v1260
    %v1352 = vunpack.c.l.b16 %v1261
    %v1353 = vunpack.c.h.b16 %v1261
    %v1354 = vunpack.c.l.b16 %v1262
    %v1355 = vunpack.c.h.b16 %v1262
    %v1356 = vunpack.c.l.b16 %v1263
    %v1357 = vunpack.c.h.b16 %v1263
    %v1358 = vunpack.c.l.b16 %v1264
    %v1359 = vunpack.c.h.b16 %v1264
    %v1360 = vunpack.c.l.b16 %v1265
    %v1361 = vunpack.c.h.b16 %v1265
    %v1362 = vunpack.c.l.b16 %v1266
    %v1363 = vunpack.c.h.b16 %v1266
    %v1364 = vunpack.c.l.b16 %v1267
    %v1365 = vunpack.c.h.b16 %v1267
    %v1366 = vunpack.c.l.b16 %v1268
    %v1367 = vunpack.c.h.b16 %v1268
    %v1368 = vunpack.c.l.b16 %v1269
    %v1369 = vunpack.c.h.b16 %v1269
    %v1370 = vunpack.c.l.b16 %v1270
    %v1371 = vunpack.c.h.b16 %v1270
    %v1372 = vunpack.c.l.b16 %v1271
    %v1373 = vunpack.c.h.b16 %v1271
    %v1374 = vpack.c.b16 %v1312, %v1310
    %v1375 = vpack.c.b16 %v1313, %v1311
    %v1376 = vpack.c.b16 %v1316, %v1314
    %v1377 = vpack.c.b16 %v1317, %v1315
    %v1378 = vpack.c.b16 %v1320, %v1318
    %v1379 = vpack.c.b16 %v1321, %v1319
    %v1380 = vpack.c.b16 %v1324, %v1322
    %v1381 = vpack.c.b16 %v1325, %v1323
    %v1382 = vpack.c.b16 %v1328, %v1326
    %v1383 = vpack.c.b16 %v1329, %v1327
    %v1384 = vpack.c.b16 %v1332, %v1330
    %v1385 = vpack.c.b16 %v1333, %v1331
    %v1386 = vpack.c.b16 %v1336, %v1334
    %v1387 = vpack.c.b16 %v1337, %v1335
    %v1388 = vpack.c.b16 %v1340, %v1338
    %v1389 = vpack.c.b16 %v1341, %v1339
    %v1390 = vpack.c.b16 %v1344, %v1342
    %v1391 = vpack.c.b16 %v1345, %v1343
    %v1392 = vpack.c.b16 %v1348, %v1346
    %v1393 = vpack.c.b16 %v1349, %v1347
    %v1394 = vpack.c.b16 %v1352, %v1350
    %v1395 = vpack.c.b16 %v1353, %v1351
    %v1396 = vpack.c.b16 %v1356, %v1354
    %v1397 = vpack.c.b16 %v1357, %v1355
    %v1398 = vpack.c.b16 %v1360, %v1358
    %v1399 = vpack.c.b16 %v1361, %v1359
    %v1400 = vpack.c.b16 %v1364, %v1362
    %v1401 = vpack.c.b16 %v1365, %v1363
    %v1402 = vpack.c.b16 %v1368, %v1366
    %v1403 = vpack.c.b16 %v1369, %v1367
    %v1404 = vpack.c.b16 %v1372, %v1370
    %v1405 = vpack.c.b16 %v1373, %v1371
    %1438 = vmatpush.bf16.msra.mxu0 %v1388
    %1439 = vmatpush.bf16.msra.mxu0 %v1386
    %1440 = vmatpush.bf16.msra.mxu0 %v1384
    %1441 = vmatpush.bf16.msra.mxu0 %v1382
    %1442 = vmatpush.bf16.msra.mxu0 %v1380
    %1443 = vmatpush.bf16.msra.mxu0 %v1378
    %1444 = vmatpush.bf16.msra.mxu0 %v1376
    %1445 = vmatpush.bf16.msra.mxu0 %v1374
    %1446 = vmatmul.bf16.gmra.mxu0 %v1238
    %v1447 = vpop.f32.mrf.mxu0
    %v1448 = vadd.f32 %v1274, %v1447
    %v1449 = vpop.f32.mrf.mxu0
    %v1450 = vadd.f32 %v1274, %v1449
    %1451 = vdwg.mxu0
    %1452 = vmatpush.bf16.msra.mxu0 %v1404
    %1453 = vmatpush.bf16.msra.mxu0 %v1402
    %1454 = vmatpush.bf16.msra.mxu0 %v1400
    %1455 = vmatpush.bf16.msra.mxu0 %v1398
    %1456 = vmatpush.bf16.msra.mxu0 %v1396
    %1457 = vmatpush.bf16.msra.mxu0 %v1394
    %1458 = vmatpush.bf16.msra.mxu0 %v1392
    %1459 = vmatpush.bf16.msra.mxu0 %v1390
    %1460 = vmatmul.bf16.gmra.mxu0 %v1239
    %v1461 = vpop.f32.mrf.mxu0
    %v1462 = vadd.f32 %v1448, %v1461
    %v1463 = vpop.f32.mrf.mxu0
    %v1464 = vadd.f32 %v1450, %v1463
    %1465 = vdwg.mxu0
    %1466 = vmatpush.bf16.msra.mxu0 %v1389
    %1467 = vmatpush.bf16.msra.mxu0 %v1387
    %1468 = vmatpush.bf16.msra.mxu0 %v1385
    %1469 = vmatpush.bf16.msra.mxu0 %v1383
    %1470 = vmatpush.bf16.msra.mxu0 %v1381
    %1471 = vmatpush.bf16.msra.mxu0 %v1379
    %1472 = vmatpush.bf16.msra.mxu0 %v1377
    %1473 = vmatpush.bf16.msra.mxu0 %v1375
    %1474 = vmatmul.bf16.gmra.mxu0 %v1238
    %v1475 = vpop.f32.mrf.mxu0
    %v1476 = vadd.f32 %v1275, %v1475
    %v1477 = vpop.f32.mrf.mxu0
    %v1478 = vadd.f32 %v1275, %v1477
    %1479 = vdwg.mxu0
    %1480 = vmatpush.bf16.msra.mxu0 %v1405
    %1481 = vmatpush.bf16.msra.mxu0 %v1403
    %1482 = vmatpush.bf16.msra.mxu0 %v1401
    %1483 = vmatpush.bf16.msra.mxu0 %v1399
    %1484 = vmatpush.bf16.msra.mxu0 %v1397
    %1485 = vmatpush.bf16.msra.mxu0 %v1395
    %1486 = vmatpush.bf16.msra.mxu0 %v1393
    %1487 = vmatpush.bf16.msra.mxu0 %v1391
    %1488 = vmatmul.bf16.gmra.mxu0 %v1239
    %v1489 = vpop.f32.mrf.mxu0
    %v1490 = vadd.f32 %v1476, %v1489
    %v1491 = vpop.f32.mrf.mxu0
    %v1492 = vadd.f32 %v1478, %v1491
    %1493 = vdwg.mxu0
    %v1494 = vmax.f32 %v1462, 0.0
    %v1495 = vmax.f32 %v1490, 0.0
    %v1496 = vmax.f32 %v1464, 0.0
    %v1497 = vmax.f32 %v1492, 0.0
    %v1498 = vpack.c.bf16 %v1496, %v1494
    %v1499 = vpack.c.bf16 %v1497, %v1495
    %v1500 = vld [vmem:[#allocation5] sm:$0xff]
    %v1501 = vld [vmem:[#allocation5 + $0x8] sm:$0xff]
    %v1502 = vld [vmem:[#allocation5 + $0x10] sm:$0xff]
    %v1503 = vld [vmem:[#allocation5 + $0x18] sm:$0xff]
    %v1504 = vld [vmem:[#allocation5 + $0x20] sm:$0xff]
    %v1505 = vld [vmem:[#allocation5 + $0x28] sm:$0xff]
    %v1506 = vld [vmem:[#allocation5 + $0x30] sm:$0xff]
    %v1507 = vld [vmem:[#allocation5 + $0x38] sm:$0xff]
    %v1508 = vld [vmem:[#allocation5 + $0x40] sm:$0xff]
    %v1509 = vld [vmem:[#allocation5 + $0x48] sm:$0xff]
    %v1510 = vld [vmem:[#allocation5 + $0x50] sm:$0xff]
    %v1511 = vld [vmem:[#allocation5 + $0x58] sm:$0xff]
    %v1512 = vld [vmem:[#allocation5 + $0x60] sm:$0xff]
    %v1513 = vld [vmem:[#allocation5 + $0x68] sm:$0xff]
    %v1514 = vld [vmem:[#allocation5 + $0x70] sm:$0xff]
    %v1515 = vld [vmem:[#allocation5 + $0x78] sm:$0xff]
    %v1516 = vld [vmem:[#allocation5 + $0x80] sm:$0xff]
    %v1517 = vld [vmem:[#allocation5 + $0x88] sm:$0xff]
    %v1518 = vld [vmem:[#allocation5 + $0x90] sm:$0xff]
    %v1519 = vld [vmem:[#allocation5 + $0x98] sm:$0xff]
    %v1520 = vld [vmem:[#allocation5 + $0xa0] sm:$0xff]
    %v1521 = vld [vmem:[#allocation5 + $0xa8] sm:$0xff]
    %v1522 = vld [vmem:[#allocation5 + $0xb0] sm:$0xff]
    %v1523 = vld [vmem:[#allocation5 + $0xb8] sm:$0xff]
    %v1524 = vld [vmem:[#allocation5 + $0xc0] sm:$0xff]
    %v1525 = vld [vmem:[#allocation5 + $0xc8] sm:$0xff]
    %v1526 = vld [vmem:[#allocation5 + $0xd0] sm:$0xff]
    %v1527 = vld [vmem:[#allocation5 + $0xd8] sm:$0xff]
    %v1528 = vld [vmem:[#allocation5 + $0xe0] sm:$0xff]
    %v1529 = vld [vmem:[#allocation5 + $0xe8] sm:$0xff]
    %v1530 = vld [vmem:[#allocation5 + $0xf0] sm:$0xff]
    %v1531 = vld [vmem:[#allocation5 + $0xf8] sm:$0xff]
    %v1532 = vld [vmem:[%s11] sm:$0x3]
    %v1534 = vperm.slane %v1532, 0
    %v1535 = vperm.slane %v1532, 1
    %v1570 = vunpack.c.l.b16 %v1500
    %v1571 = vunpack.c.h.b16 %v1500
    %v1572 = vunpack.c.l.b16 %v1501
    %v1573 = vunpack.c.h.b16 %v1501
    %v1574 = vunpack.c.l.b16 %v1502
    %v1575 = vunpack.c.h.b16 %v1502
    %v1576 = vunpack.c.l.b16 %v1503
    %v1577 = vunpack.c.h.b16 %v1503
    %v1578 = vunpack.c.l.b16 %v1504
    %v1579 = vunpack.c.h.b16 %v1504
    %v1580 = vunpack.c.l.b16 %v1505
    %v1581 = vunpack.c.h.b16 %v1505
    %v1582 = vunpack.c.l.b16 %v1506
    %v1583 = vunpack.c.h.b16 %v1506
    %v1584 = vunpack.c.l.b16 %v1507
    %v1585 = vunpack.c.h.b16 %v1507
    %v1586 = vunpack.c.l.b16 %v1508
    %v1587 = vunpack.c.h.b16 %v1508
    %v1588 = vunpack.c.l.b16 %v1509
    %v1589 = vunpack.c.h.b16 %v1509
    %v1590 = vunpack.c.l.b16 %v1510
    %v1591 = vunpack.c.h.b16 %v1510
    %v1592 = vunpack.c.l.b16 %v1511
    %v1593 = vunpack.c.h.b16 %v1511
    %v1594 = vunpack.c.l.b16 %v1512
    %v1595 = vunpack.c.h.b16 %v1512
    %v1596 = vunpack.c.l.b16 %v1513
    %v1597 = vunpack.c.h.b16 %v1513
    %v1598 = vunpack.c.l.b16 %v1514
    %v1599 = vunpack.c.h.b16 %v1514
    %v1600 = vunpack.c.l.b16 %v1515
    %v1601 = vunpack.c.h.b16 %v1515
    %v1602 = vunpack.c.l.b16 %v1516
    %v1603 = vunpack.c.h.b16 %v1516
    %v1604 = vunpack.c.l.b16 %v1517
    %v1605 = vunpack.c.h.b16 %v1517
    %v1606 = vunpack.c.l.b16 %v1518
    %v1607 = vunpack.c.h.b16 %v1518
    %v1608 = vunpack.c.l.b16 %v1519
    %v1609 = vunpack.c.h.b16 %v1519
    %v1610 = vunpack.c.l.b16 %v1520
    %v1611 = vunpack.c.h.b16 %v1520
    %v1612 = vunpack.c.l.b16 %v1521
    %v1613 = vunpack.c.h.b16 %v1521
    %v1614 = vunpack.c.l.b16 %v1522
    %v1615 = vunpack.c.h.b16 %v1522
    %v1616 = vunpack.c.l.b16 %v1523
    %v1617 = vunpack.c.h.b16 %v1523
    %v1618 = vunpack.c.l.b16 %v1524
    %v1619 = vunpack.c.h.b16 %v1524
    %v1620 = vunpack.c.l.b16 %v1525
    %v1621 = vunpack.c.h.b16 %v1525
    %v1622 = vunpack.c.l.b16 %v1526
    %v1623 = vunpack.c.h.b16 %v1526
    %v1624 = vunpack.c.l.b16 %v1527
    %v1625 = vunpack.c.h.b16 %v1527
    %v1626 = vunpack.c.l.b16 %v1528
    %v1627 = vunpack.c.h.b16 %v1528
    %v1628 = vunpack.c.l.b16 %v1529
    %v1629 = vunpack.c.h.b16 %v1529
    %v1630 = vunpack.c.l.b16 %v1530
    %v1631 = vunpack.c.h.b16 %v1530
    %v1632 = vunpack.c.l.b16 %v1531
    %v1633 = vunpack.c.h.b16 %v1531
    %v1634 = vpack.c.b16 %v1572, %v1570
    %v1635 = vpack.c.b16 %v1573, %v1571
    %v1636 = vpack.c.b16 %v1576, %v1574
    %v1637 = vpack.c.b16 %v1577, %v1575
    %v1638 = vpack.c.b16 %v1580, %v1578
    %v1639 = vpack.c.b16 %v1581, %v1579
    %v1640 = vpack.c.b16 %v1584, %v1582
    %v1641 = vpack.c.b16 %v1585, %v1583
    %v1642 = vpack.c.b16 %v1588, %v1586
    %v1643 = vpack.c.b16 %v1589, %v1587
    %v1644 = vpack.c.b16 %v1592, %v1590
    %v1645 = vpack.c.b16 %v1593, %v1591
    %v1646 = vpack.c.b16 %v1596, %v1594
    %v1647 = vpack.c.b16 %v1597, %v1595
    %v1648 = vpack.c.b16 %v1600, %v1598
    %v1649 = vpack.c.b16 %v1601, %v1599
    %v1650 = vpack.c.b16 %v1604, %v1602
    %v1651 = vpack.c.b16 %v1605, %v1603
    %v1652 = vpack.c.b16 %v1608, %v1606
    %v1653 = vpack.c.b16 %v1609, %v1607
    %v1654 = vpack.c.b16 %v1612, %v1610
    %v1655 = vpack.c.b16 %v1613, %v1611
    %v1656 = vpack.c.b16 %v1616, %v1614
    %v1657 = vpack.c.b16 %v1617, %v1615
    %v1658 = vpack.c.b16 %v1620, %v1618
    %v1659 = vpack.c.b16 %v1621, %v1619
    %v1660 = vpack.c.b16 %v1624, %v1622
    %v1661 = vpack.c.b16 %v1625, %v1623
    %v1662 = vpack.c.b16 %v1628, %v1626
    %v1663 = vpack.c.b16 %v1629, %v1627
    %v1664 = vpack.c.b16 %v1632, %v1630
    %v1665 = vpack.c.b16 %v1633, %v1631
    %1698 = vmatpush.bf16.msra.mxu0 %v1648
    %1699 = vmatpush.bf16.msra.mxu0 %v1646
    %1700 = vmatpush.bf16.msra.mxu0 %v1644
    %1701 = vmatpush.bf16.msra.mxu0 %v1642
    %1702 = vmatpush.bf16.msra.mxu0 %v1640
    %1703 = vmatpush.bf16.msra.mxu0 %v1638
    %1704 = vmatpush.bf16.msra.mxu0 %v1636
    %1705 = vmatpush.bf16.msra.mxu0 %v1634
    %1706 = vmatmul.bf16.gmra.mxu0 %v1498
    %v1707 = vpop.f32.mrf.mxu0
    %v1708 = vadd.f32 %v1534, %v1707
    %v1709 = vpop.f32.mrf.mxu0
    %v1710 = vadd.f32 %v1534, %v1709
    %1711 = vdwg.mxu0
    %1712 = vmatpush.bf16.msra.mxu0 %v1664
    %1713 = vmatpush.bf16.msra.mxu0 %v1662
    %1714 = vmatpush.bf16.msra.mxu0 %v1660
    %1715 = vmatpush.bf16.msra.mxu0 %v1658
    %1716 = vmatpush.bf16.msra.mxu0 %v1656
    %1717 = vmatpush.bf16.msra.mxu0 %v1654
    %1718 = vmatpush.bf16.msra.mxu0 %v1652
    %1719 = vmatpush.bf16.msra.mxu0 %v1650
    %1720 = vmatmul.bf16.gmra.mxu0 %v1499
    %v1721 = vpop.f32.mrf.mxu0
    %v1722 = vadd.f32 %v1708, %v1721
    %v1723 = vpop.f32.mrf.mxu0
    %v1724 = vadd.f32 %v1710, %v1723
    %1725 = vdwg.mxu0
    %1726 = vmatpush.bf16.msra.mxu0 %v1649
    %1727 = vmatpush.bf16.msra.mxu0 %v1647
    %1728 = vmatpush.bf16.msra.mxu0 %v1645
    %1729 = vmatpush.bf16.msra.mxu0 %v1643
    %1730 = vmatpush.bf16.msra.mxu0 %v1641
    %1731 = vmatpush.bf16.msra.mxu0 %v1639
    %1732 = vmatpush.bf16.msra.mxu0 %v1637
    %1733 = vmatpush.bf16.msra.mxu0 %v1635
    %1734 = vmatmul.bf16.gmra.mxu0 %v1498
    %v1735 = vpop.f32.mrf.mxu0
    %v1736 = vadd.f32 %v1535, %v1735
    %v1737 = vpop.f32.mrf.mxu0
    %v1738 = vadd.f32 %v1535, %v1737
    %1739 = vdwg.mxu0
    %1740 = vmatpush.bf16.msra.mxu0 %v1665
    %1741 = vmatpush.bf16.msra.mxu0 %v1663
    %1742 = vmatpush.bf16.msra.mxu0 %v1661
    %1743 = vmatpush.bf16.msra.mxu0 %v1659
    %1744 = vmatpush.bf16.msra.mxu0 %v1657
    %1745 = vmatpush.bf16.msra.mxu0 %v1655
    %1746 = vmatpush.bf16.msra.mxu0 %v1653
    %1747 = vmatpush.bf16.msra.mxu0 %v1651
    %1748 = vmatmul.bf16.gmra.mxu0 %v1499
    %v1749 = vpop.f32.mrf.mxu0
    %v1750 = vadd.f32 %v1736, %v1749
    %v1751 = vpop.f32.mrf.mxu0
    %v1752 = vadd.f32 %v1738, %v1751
    %1753 = vdwg.mxu0
    %v1754 = vmax.f32 %v1722, 0.0
    %v1755 = vmax.f32 %v1750, 0.0
    %v1756 = vmax.f32 %v1724, 0.0
    %v1757 = vmax.f32 %v1752, 0.0
    %v1758 = vpack.c.bf16 %v1756, %v1754
    %v1759 = vpack.c.bf16 %v1757, %v1755
    %v1760 = vld [vmem:[#allocation7] sm:$0xff]
    %v1761 = vld [vmem:[#allocation7 + $0x8] sm:$0xff]
    %v1762 = vld [vmem:[#allocation7 + $0x10] sm:$0xff]
    %v1763 = vld [vmem:[#allocation7 + $0x18] sm:$0xff]
    %v1764 = vld [vmem:[#allocation7 + $0x20] sm:$0xff]
    %v1765 = vld [vmem:[#allocation7 + $0x28] sm:$0xff]
    %v1766 = vld [vmem:[#allocation7 + $0x30] sm:$0xff]
    %v1767 = vld [vmem:[#allocation7 + $0x38] sm:$0xff]
    %v1768 = vld [vmem:[#allocation7 + $0x40] sm:$0xff]
    %v1769 = vld [vmem:[#allocation7 + $0x48] sm:$0xff]
    %v1770 = vld [vmem:[#allocation7 + $0x50] sm:$0xff]
    %v1771 = vld [vmem:[#allocation7 + $0x58] sm:$0xff]
    %v1772 = vld [vmem:[#allocation7 + $0x60] sm:$0xff]
    %v1773 = vld [vmem:[#allocation7 + $0x68] sm:$0xff]
    %v1774 = vld [vmem:[#allocation7 + $0x70] sm:$0xff]
    %v1775 = vld [vmem:[#allocation7 + $0x78] sm:$0xff]
    %v1776 = vld [vmem:[#allocation7 + $0x80] sm:$0xff]
    %v1777 = vld [vmem:[#allocation7 + $0x88] sm:$0xff]
    %v1778 = vld [vmem:[#allocation7 + $0x90] sm:$0xff]
    %v1779 = vld [vmem:[#allocation7 + $0x98] sm:$0xff]
    %v1780 = vld [vmem:[#allocation7 + $0xa0] sm:$0xff]
    %v1781 = vld [vmem:[#allocation7 + $0xa8] sm:$0xff]
    %v1782 = vld [vmem:[#allocation7 + $0xb0] sm:$0xff]
    %v1783 = vld [vmem:[#allocation7 + $0xb8] sm:$0xff]
    %v1784 = vld [vmem:[#allocation7 + $0xc0] sm:$0xff]
    %v1785 = vld [vmem:[#allocation7 + $0xc8] sm:$0xff]
    %v1786 = vld [vmem:[#allocation7 + $0xd0] sm:$0xff]
    %v1787 = vld [vmem:[#allocation7 + $0xd8] sm:$0xff]
    %v1788 = vld [vmem:[#allocation7 + $0xe0] sm:$0xff]
    %v1789 = vld [vmem:[#allocation7 + $0xe8] sm:$0xff]
    %v1790 = vld [vmem:[#allocation7 + $0xf0] sm:$0xff]
    %v1791 = vld [vmem:[#allocation7 + $0xf8] sm:$0xff]
    %v1792 = vld [vmem:[%s13] sm:$0xff]
    %v1793 = vld [vmem:[%s13 + $0x8] sm:$0xff]
    %v1794 = vld [vmem:[%s13 + $0x10] sm:$0xff]
    %v1795 = vld [vmem:[%s13 + $0x18] sm:$0xff]
    %v1796 = vld [vmem:[%s13 + $0x20] sm:$0xff]
    %v1797 = vld [vmem:[%s13 + $0x28] sm:$0xff]
    %v1798 = vld [vmem:[%s13 + $0x30] sm:$0xff]
    %v1799 = vld [vmem:[%s13 + $0x38] sm:$0xff]
    %v1800 = vld [vmem:[%s13 + $0x40] sm:$0xff]
    %v1801 = vld [vmem:[%s13 + $0x48] sm:$0xff]
    %v1802 = vld [vmem:[%s13 + $0x50] sm:$0xff]
    %v1803 = vld [vmem:[%s13 + $0x58] sm:$0xff]
    %v1804 = vld [vmem:[%s13 + $0x60] sm:$0xff]
    %v1805 = vld [vmem:[%s13 + $0x68] sm:$0xff]
    %v1806 = vld [vmem:[%s13 + $0x70] sm:$0xff]
    %v1807 = vld [vmem:[%s13 + $0x78] sm:$0xff]
    %v1808 = vld [vmem:[%s13 + $0x80] sm:$0xff]
    %v1809 = vld [vmem:[%s13 + $0x88] sm:$0xff]
    %v1810 = vld [vmem:[%s13 + $0x90] sm:$0xff]
    %v1811 = vld [vmem:[%s13 + $0x98] sm:$0xff]
    %v1812 = vld [vmem:[%s13 + $0xa0] sm:$0xff]
    %v1813 = vld [vmem:[%s13 + $0xa8] sm:$0xff]
    %v1814 = vld [vmem:[%s13 + $0xb0] sm:$0xff]
    %v1815 = vld [vmem:[%s13 + $0xb8] sm:$0xff]
    %v1816 = vld [vmem:[%s13 + $0xc0] sm:$0xff]
    %v1817 = vld [vmem:[%s13 + $0xc8] sm:$0xff]
    %v1818 = vld [vmem:[%s13 + $0xd0] sm:$0xff]
    %v1819 = vld [vmem:[%s13 + $0xd8] sm:$0xff]
    %v1820 = vld [vmem:[%s13 + $0xe0] sm:$0xff]
    %v1821 = vld [vmem:[%s13 + $0xe8] sm:$0xff]
    %v1822 = vld [vmem:[%s13 + $0xf0] sm:$0xff]
    %v1823 = vld [vmem:[%s13 + $0xf8] sm:$0xff]
    %v1824 = vld [vmem:[%s13 + $0x100] sm:$0xff]
    %v1825 = vld [vmem:[%s13 + $0x108] sm:$0xff]
    %v1826 = vld [vmem:[%s13 + $0x110] sm:$0xff]
    %v1827 = vld [vmem:[%s13 + $0x118] sm:$0xff]
    %v1828 = vld [vmem:[%s13 + $0x120] sm:$0xff]
    %v1829 = vld [vmem:[%s13 + $0x128] sm:$0xff]
    %v1830 = vld [vmem:[%s13 + $0x130] sm:$0xff]
    %v1831 = vld [vmem:[%s13 + $0x138] sm:$0xff]
    %v1832 = vld [vmem:[%s13 + $0x140] sm:$0xff]
    %v1833 = vld [vmem:[%s13 + $0x148] sm:$0xff]
    %v1834 = vld [vmem:[%s13 + $0x150] sm:$0xff]
    %v1835 = vld [vmem:[%s13 + $0x158] sm:$0xff]
    %v1836 = vld [vmem:[%s13 + $0x160] sm:$0xff]
    %v1837 = vld [vmem:[%s13 + $0x168] sm:$0xff]
    %v1838 = vld [vmem:[%s13 + $0x170] sm:$0xff]
    %v1839 = vld [vmem:[%s13 + $0x178] sm:$0xff]
    %v1840 = vld [vmem:[%s13 + $0x180] sm:$0xff]
    %v1841 = vld [vmem:[%s13 + $0x188] sm:$0xff]
    %v1842 = vld [vmem:[%s13 + $0x190] sm:$0xff]
    %v1843 = vld [vmem:[%s13 + $0x198] sm:$0xff]
    %v1844 = vld [vmem:[%s13 + $0x1a0] sm:$0xff]
    %v1845 = vld [vmem:[%s13 + $0x1a8] sm:$0xff]
    %v1846 = vld [vmem:[%s13 + $0x1b0] sm:$0xff]
    %v1847 = vld [vmem:[%s13 + $0x1b8] sm:$0xff]
    %v1848 = vld [vmem:[%s13 + $0x1c0] sm:$0xff]
    %v1849 = vld [vmem:[%s13 + $0x1c8] sm:$0xff]
    %v1850 = vld [vmem:[%s13 + $0x1d0] sm:$0xff]
    %v1851 = vld [vmem:[%s13 + $0x1d8] sm:$0xff]
    %v1852 = vld [vmem:[%s13 + $0x1e0] sm:$0xff]
    %v1853 = vld [vmem:[%s13 + $0x1e8] sm:$0xff]
    %v1854 = vld [vmem:[%s13 + $0x1f0] sm:$0xff]
    %v1855 = vld [vmem:[%s13 + $0x1f8] sm:$0xff]
    %v1920 = vunpack.c.l.b16 %v1792
    %v1921 = vunpack.c.h.b16 %v1792
    %v1922 = vunpack.c.l.b16 %v1793
    %v1923 = vunpack.c.h.b16 %v1793
    %v1924 = vunpack.c.l.b16 %v1794
    %v1925 = vunpack.c.h.b16 %v1794
    %v1926 = vunpack.c.l.b16 %v1795
    %v1927 = vunpack.c.h.b16 %v1795
    %v1928 = vunpack.c.l.b16 %v1796
    %v1929 = vunpack.c.h.b16 %v1796
    %v1930 = vunpack.c.l.b16 %v1797
    %v1931 = vunpack.c.h.b16 %v1797
    %v1932 = vunpack.c.l.b16 %v1798
    %v1933 = vunpack.c.h.b16 %v1798
    %v1934 = vunpack.c.l.b16 %v1799
    %v1935 = vunpack.c.h.b16 %v1799
    %v1936 = vunpack.c.l.b16 %v1800
    %v1937 = vunpack.c.h.b16 %v1800
    %v1938 = vunpack.c.l.b16 %v1801
    %v1939 = vunpack.c.h.b16 %v1801
    %v1940 = vunpack.c.l.b16 %v1802
    %v1941 = vunpack.c.h.b16 %v1802
    %v1942 = vunpack.c.l.b16 %v1803
    %v1943 = vunpack.c.h.b16 %v1803
    %v1944 = vunpack.c.l.b16 %v1804
    %v1945 = vunpack.c.h.b16 %v1804
    %v1946 = vunpack.c.l.b16 %v1805
    %v1947 = vunpack.c.h.b16 %v1805
    %v1948 = vunpack.c.l.b16 %v1806
    %v1949 = vunpack.c.h.b16 %v1806
    %v1950 = vunpack.c.l.b16 %v1807
    %v1951 = vunpack.c.h.b16 %v1807
    %v1952 = vunpack.c.l.b16 %v1808
    %v1953 = vunpack.c.h.b16 %v1808
    %v1954 = vunpack.c.l.b16 %v1809
    %v1955 = vunpack.c.h.b16 %v1809
    %v1956 = vunpack.c.l.b16 %v1810
    %v1957 = vunpack.c.h.b16 %v1810
    %v1958 = vunpack.c.l.b16 %v1811
    %v1959 = vunpack.c.h.b16 %v1811
    %v1960 = vunpack.c.l.b16 %v1812
    %v1961 = vunpack.c.h.b16 %v1812
    %v1962 = vunpack.c.l.b16 %v1813
    %v1963 = vunpack.c.h.b16 %v1813
    %v1964 = vunpack.c.l.b16 %v1814
    %v1965 = vunpack.c.h.b16 %v1814
    %v1966 = vunpack.c.l.b16 %v1815
    %v1967 = vunpack.c.h.b16 %v1815
    %v1968 = vunpack.c.l.b16 %v1816
    %v1969 = vunpack.c.h.b16 %v1816
    %v1970 = vunpack.c.l.b16 %v1817
    %v1971 = vunpack.c.h.b16 %v1817
    %v1972 = vunpack.c.l.b16 %v1818
    %v1973 = vunpack.c.h.b16 %v1818
    %v1974 = vunpack.c.l.b16 %v1819
    %v1975 = vunpack.c.h.b16 %v1819
    %v1976 = vunpack.c.l.b16 %v1820
    %v1977 = vunpack.c.h.b16 %v1820
    %v1978 = vunpack.c.l.b16 %v1821
    %v1979 = vunpack.c.h.b16 %v1821
    %v1980 = vunpack.c.l.b16 %v1822
    %v1981 = vunpack.c.h.b16 %v1822
    %v1982 = vunpack.c.l.b16 %v1823
    %v1983 = vunpack.c.h.b16 %v1823
    %v1984 = vunpack.c.l.b16 %v1824
    %v1985 = vunpack.c.h.b16 %v1824
    %v1986 = vunpack.c.l.b16 %v1825
    %v1987 = vunpack.c.h.b16 %v1825
    %v1988 = vunpack.c.l.b16 %v1826
    %v1989 = vunpack.c.h.b16 %v1826
    %v1990 = vunpack.c.l.b16 %v1827
    %v1991 = vunpack.c.h.b16 %v1827
    %v1992 = vunpack.c.l.b16 %v1828
    %v1993 = vunpack.c.h.b16 %v1828
    %v1994 = vunpack.c.l.b16 %v1829
    %v1995 = vunpack.c.h.b16 %v1829
    %v1996 = vunpack.c.l.b16 %v1830
    %v1997 = vunpack.c.h.b16 %v1830
    %v1998 = vunpack.c.l.b16 %v1831
    %v1999 = vunpack.c.h.b16 %v1831
    %v2000 = vunpack.c.l.b16 %v1832
    %v2001 = vunpack.c.h.b16 %v1832
    %v2002 = vunpack.c.l.b16 %v1833
    %v2003 = vunpack.c.h.b16 %v1833
    %v2004 = vunpack.c.l.b16 %v1834
    %v2005 = vunpack.c.h.b16 %v1834
    %v2006 = vunpack.c.l.b16 %v1835
    %v2007 = vunpack.c.h.b16 %v1835
    %v2008 = vunpack.c.l.b16 %v1836
    %v2009 = vunpack.c.h.b16 %v1836
    %v2010 = vunpack.c.l.b16 %v1837
    %v2011 = vunpack.c.h.b16 %v1837
    %v2012 = vunpack.c.l.b16 %v1838
    %v2013 = vunpack.c.h.b16 %v1838
    %v2014 = vunpack.c.l.b16 %v1839
    %v2015 = vunpack.c.h.b16 %v1839
    %v2016 = vunpack.c.l.b16 %v1840
    %v2017 = vunpack.c.h.b16 %v1840
    %v2018 = vunpack.c.l.b16 %v1841
    %v2019 = vunpack.c.h.b16 %v1841
    %v2020 = vunpack.c.l.b16 %v1842
    %v2021 = vunpack.c.h.b16 %v1842
    %v2022 = vunpack.c.l.b16 %v1843
    %v2023 = vunpack.c.h.b16 %v1843
    %v2024 = vunpack.c.l.b16 %v1844
    %v2025 = vunpack.c.h.b16 %v1844
    %v2026 = vunpack.c.l.b16 %v1845
    %v2027 = vunpack.c.h.b16 %v1845
    %v2028 = vunpack.c.l.b16 %v1846
    %v2029 = vunpack.c.h.b16 %v1846
    %v2030 = vunpack.c.l.b16 %v1847
    %v2031 = vunpack.c.h.b16 %v1847
    %v2032 = vunpack.c.l.b16 %v1848
    %v2033 = vunpack.c.h.b16 %v1848
    %v2034 = vunpack.c.l.b16 %v1849
    %v2035 = vunpack.c.h.b16 %v1849
    %v2036 = vunpack.c.l.b16 %v1850
    %v2037 = vunpack.c.h.b16 %v1850
    %v2038 = vunpack.c.l.b16 %v1851
    %v2039 = vunpack.c.h.b16 %v1851
    %v2040 = vunpack.c.l.b16 %v1852
    %v2041 = vunpack.c.h.b16 %v1852
    %v2042 = vunpack.c.l.b16 %v1853
    %v2043 = vunpack.c.h.b16 %v1853
    %v2044 = vunpack.c.l.b16 %v1854
    %v2045 = vunpack.c.h.b16 %v1854
    %v2046 = vunpack.c.l.b16 %v1855
    %v2047 = vunpack.c.h.b16 %v1855
    %v2048 = vpack.c.b16 %v1922, %v1920
    %v2049 = vpack.c.b16 %v1923, %v1921
    %v2050 = vpack.c.b16 %v1926, %v1924
    %v2051 = vpack.c.b16 %v1927, %v1925
    %v2052 = vpack.c.b16 %v1930, %v1928
    %v2053 = vpack.c.b16 %v1931, %v1929
    %v2054 = vpack.c.b16 %v1934, %v1932
    %v2055 = vpack.c.b16 %v1935, %v1933
    %v2056 = vpack.c.b16 %v1938, %v1936
    %v2057 = vpack.c.b16 %v1939, %v1937
    %v2058 = vpack.c.b16 %v1942, %v1940
    %v2059 = vpack.c.b16 %v1943, %v1941
    %v2060 = vpack.c.b16 %v1946, %v1944
    %v2061 = vpack.c.b16 %v1947, %v1945
    %v2062 = vpack.c.b16 %v1950, %v1948
    %v2063 = vpack.c.b16 %v1951, %v1949
    %v2064 = vpack.c.b16 %v1954, %v1952
    %v2065 = vpack.c.b16 %v1955, %v1953
    %v2066 = vpack.c.b16 %v1958, %v1956
    %v2067 = vpack.c.b16 %v1959, %v1957
    %v2068 = vpack.c.b16 %v1962, %v1960
    %v2069 = vpack.c.b16 %v1963, %v1961
    %v2070 = vpack.c.b16 %v1966, %v1964
    %v2071 = vpack.c.b16 %v1967, %v1965
    %v2072 = vpack.c.b16 %v1970, %v1968
    %v2073 = vpack.c.b16 %v1971, %v1969
    %v2074 = vpack.c.b16 %v1974, %v1972
    %v2075 = vpack.c.b16 %v1975, %v1973
    %v2076 = vpack.c.b16 %v1978, %v1976
    %v2077 = vpack.c.b16 %v1979, %v1977
    %v2078 = vpack.c.b16 %v1982, %v1980
    %v2079 = vpack.c.b16 %v1983, %v1981
    %v2080 = vpack.c.b16 %v1986, %v1984
    %v2081 = vpack.c.b16 %v1987, %v1985
    %v2082 = vpack.c.b16 %v1990, %v1988
    %v2083 = vpack.c.b16 %v1991, %v1989
    %v2084 = vpack.c.b16 %v1994, %v1992
    %v2085 = vpack.c.b16 %v1995, %v1993
    %v2086 = vpack.c.b16 %v1998, %v1996
    %v2087 = vpack.c.b16 %v1999, %v1997
    %v2088 = vpack.c.b16 %v2002, %v2000
    %v2089 = vpack.c.b16 %v2003, %v2001
    %v2090 = vpack.c.b16 %v2006, %v2004
    %v2091 = vpack.c.b16 %v2007, %v2005
    %v2092 = vpack.c.b16 %v2010, %v2008
    %v2093 = vpack.c.b16 %v2011, %v2009
    %v2094 = vpack.c.b16 %v2014, %v2012
    %v2095 = vpack.c.b16 %v2015, %v2013
    %v2096 = vpack.c.b16 %v2018, %v2016
    %v2097 = vpack.c.b16 %v2019, %v2017
    %v2098 = vpack.c.b16 %v2022, %v2020
    %v2099 = vpack.c.b16 %v2023, %v2021
    %v2100 = vpack.c.b16 %v2026, %v2024
    %v2101 = vpack.c.b16 %v2027, %v2025
    %v2102 = vpack.c.b16 %v2030, %v2028
    %v2103 = vpack.c.b16 %v2031, %v2029
    %v2104 = vpack.c.b16 %v2034, %v2032
    %v2105 = vpack.c.b16 %v2035, %v2033
    %v2106 = vpack.c.b16 %v2038, %v2036
    %v2107 = vpack.c.b16 %v2039, %v2037
    %v2108 = vpack.c.b16 %v2042, %v2040
    %v2109 = vpack.c.b16 %v2043, %v2041
    %v2110 = vpack.c.b16 %v2046, %v2044
    %v2111 = vpack.c.b16 %v2047, %v2045
    %2176 = vmatpush.bf16.msra.mxu0 %v2062
    %2177 = vmatpush.bf16.msra.mxu0 %v2060
    %2178 = vmatpush.bf16.msra.mxu0 %v2058
    %2179 = vmatpush.bf16.msra.mxu0 %v2056
    %2180 = vmatpush.bf16.msra.mxu0 %v2054
    %2181 = vmatpush.bf16.msra.mxu0 %v2052
    %2182 = vmatpush.bf16.msra.mxu0 %v2050
    %2183 = vmatpush.bf16.msra.mxu0 %v2048
    %2184 = vmatmul.bf16.gmra.mxu0 %v274
    %v2185 = vpop.f32.mrf.mxu0
    %v2186 = vadd.f32 0.0, %v2185
    %v2187 = vpop.f32.mrf.mxu0
    %v2188 = vadd.f32 0.0, %v2187
    %2189 = vdwg.mxu0
    %2190 = vmatpush.bf16.msra.mxu0 %v2078
    %2191 = vmatpush.bf16.msra.mxu0 %v2076
    %2192 = vmatpush.bf16.msra.mxu0 %v2074
    %2193 = vmatpush.bf16.msra.mxu0 %v2072
    %2194 = vmatpush.bf16.msra.mxu0 %v2070
    %2195 = vmatpush.bf16.msra.mxu0 %v2068
    %2196 = vmatpush.bf16.msra.mxu0 %v2066
    %2197 = vmatpush.bf16.msra.mxu0 %v2064
    %2198 = vmatmul.bf16.gmra.mxu0 %v275
    %v2199 = vpop.f32.mrf.mxu0
    %v2200 = vadd.f32 %v2186, %v2199
    %v2201 = vpop.f32.mrf.mxu0
    %v2202 = vadd.f32 %v2188, %v2201
    %2203 = vdwg.mxu0
    %2204 = vmatpush.bf16.msra.mxu0 %v2094
    %2205 = vmatpush.bf16.msra.mxu0 %v2092
    %2206 = vmatpush.bf16.msra.mxu0 %v2090
    %2207 = vmatpush.bf16.msra.mxu0 %v2088
    %2208 = vmatpush.bf16.msra.mxu0 %v2086
    %2209 = vmatpush.bf16.msra.mxu0 %v2084
    %2210 = vmatpush.bf16.msra.mxu0 %v2082
    %2211 = vmatpush.bf16.msra.mxu0 %v2080
    %2212 = vmatmul.bf16.gmra.mxu0 %v276
    %v2213 = vpop.f32.mrf.mxu0
    %v2214 = vadd.f32 %v2200, %v2213
    %v2215 = vpop.f32.mrf.mxu0
    %v2216 = vadd.f32 %v2202, %v2215
    %2217 = vdwg.mxu0
    %2218 = vmatpush.bf16.msra.mxu0 %v2110
    %2219 = vmatpush.bf16.msra.mxu0 %v2108
    %2220 = vmatpush.bf16.msra.mxu0 %v2106
    %2221 = vmatpush.bf16.msra.mxu0 %v2104
    %2222 = vmatpush.bf16.msra.mxu0 %v2102
    %2223 = vmatpush.bf16.msra.mxu0 %v2100
    %2224 = vmatpush.bf16.msra.mxu0 %v2098
    %2225 = vmatpush.bf16.msra.mxu0 %v2096
    %2226 = vmatmul.bf16.gmra.mxu0 %v277
    %v2227 = vpop.f32.mrf.mxu0
    %v2228 = vadd.f32 %v2214, %v2227
    %v2229 = vpop.f32.mrf.mxu0
    %v2230 = vadd.f32 %v2216, %v2229
    %2231 = vdwg.mxu0
    %2232 = vmatpush.bf16.msra.mxu0 %v2063
    %2233 = vmatpush.bf16.msra.mxu0 %v2061
    %2234 = vmatpush.bf16.msra.mxu0 %v2059
    %2235 = vmatpush.bf16.msra.mxu0 %v2057
    %2236 = vmatpush.bf16.msra.mxu0 %v2055
    %2237 = vmatpush.bf16.msra.mxu0 %v2053
    %2238 = vmatpush.bf16.msra.mxu0 %v2051
    %2239 = vmatpush.bf16.msra.mxu0 %v2049
    %2240 = vmatmul.bf16.gmra.mxu0 %v274
    %v2241 = vpop.f32.mrf.mxu0
    %v2242 = vadd.f32 0.0, %v2241
    %v2243 = vpop.f32.mrf.mxu0
    %v2244 = vadd.f32 0.0, %v2243
    %2245 = vdwg.mxu0
    %2246 = vmatpush.bf16.msra.mxu0 %v2079
    %2247 = vmatpush.bf16.msra.mxu0 %v2077
    %2248 = vmatpush.bf16.msra.mxu0 %v2075
    %2249 = vmatpush.bf16.msra.mxu0 %v2073
    %2250 = vmatpush.bf16.msra.mxu0 %v2071
    %2251 = vmatpush.bf16.msra.mxu0 %v2069
    %2252 = vmatpush.bf16.msra.mxu0 %v2067
    %2253 = vmatpush.bf16.msra.mxu0 %v2065
    %2254 = vmatmul.bf16.gmra.mxu0 %v275
    %v2255 = vpop.f32.mrf.mxu0
    %v2256 = vadd.f32 %v2242, %v2255
    %v2257 = vpop.f32.mrf.mxu0
    %v2258 = vadd.f32 %v2244, %v2257
    %2259 = vdwg.mxu0
    %2260 = vmatpush.bf16.msra.mxu0 %v2095
    %2261 = vmatpush.bf16.msra.mxu0 %v2093
    %2262 = vmatpush.bf16.msra.mxu0 %v2091
    %2263 = vmatpush.bf16.msra.mxu0 %v2089
    %2264 = vmatpush.bf16.msra.mxu0 %v2087
    %2265 = vmatpush.bf16.msra.mxu0 %v2085
    %2266 = vmatpush.bf16.msra.mxu0 %v2083
    %2267 = vmatpush.bf16.msra.mxu0 %v2081
    %2268 = vmatmul.bf16.gmra.mxu0 %v276
    %v2269 = vpop.f32.mrf.mxu0
    %v2270 = vadd.f32 %v2256, %v2269
    %v2271 = vpop.f32.mrf.mxu0
    %v2272 = vadd.f32 %v2258, %v2271
    %2273 = vdwg.mxu0
    %2274 = vmatpush.bf16.msra.mxu0 %v2111
    %2275 = vmatpush.bf16.msra.mxu0 %v2109
    %2276 = vmatpush.bf16.msra.mxu0 %v2107
    %2277 = vmatpush.bf16.msra.mxu0 %v2105
    %2278 = vmatpush.bf16.msra.mxu0 %v2103
    %2279 = vmatpush.bf16.msra.mxu0 %v2101
    %2280 = vmatpush.bf16.msra.mxu0 %v2099
    %2281 = vmatpush.bf16.msra.mxu0 %v2097
    %2282 = vmatmul.bf16.gmra.mxu0 %v277
    %v2283 = vpop.f32.mrf.mxu0
    %v2284 = vadd.f32 %v2270, %v2283
    %v2285 = vpop.f32.mrf.mxu0
    %v2286 = vadd.f32 %v2272, %v2285
    %2287 = vdwg.mxu0
    %v2320 = vunpack.c.l.b16 %v1760
    %v2321 = vunpack.c.h.b16 %v1760
    %v2322 = vunpack.c.l.b16 %v1761
    %v2323 = vunpack.c.h.b16 %v1761
    %v2324 = vunpack.c.l.b16 %v1762
    %v2325 = vunpack.c.h.b16 %v1762
    %v2326 = vunpack.c.l.b16 %v1763
    %v2327 = vunpack.c.h.b16 %v1763
    %v2328 = vunpack.c.l.b16 %v1764
    %v2329 = vunpack.c.h.b16 %v1764
    %v2330 = vunpack.c.l.b16 %v1765
    %v2331 = vunpack.c.h.b16 %v1765
    %v2332 = vunpack.c.l.b16 %v1766
    %v2333 = vunpack.c.h.b16 %v1766
    %v2334 = vunpack.c.l.b16 %v1767
    %v2335 = vunpack.c.h.b16 %v1767
    %v2336 = vunpack.c.l.b16 %v1768
    %v2337 = vunpack.c.h.b16 %v1768
    %v2338 = vunpack.c.l.b16 %v1769
    %v2339 = vunpack.c.h.b16 %v1769
    %v2340 = vunpack.c.l.b16 %v1770
    %v2341 = vunpack.c.h.b16 %v1770
    %v2342 = vunpack.c.l.b16 %v1771
    %v2343 = vunpack.c.h.b16 %v1771
    %v2344 = vunpack.c.l.b16 %v1772
    %v2345 = vunpack.c.h.b16 %v1772
    %v2346 = vunpack.c.l.b16 %v1773
    %v2347 = vunpack.c.h.b16 %v1773
    %v2348 = vunpack.c.l.b16 %v1774
    %v2349 = vunpack.c.h.b16 %v1774
    %v2350 = vunpack.c.l.b16 %v1775
    %v2351 = vunpack.c.h.b16 %v1775
    %v2352 = vunpack.c.l.b16 %v1776
    %v2353 = vunpack.c.h.b16 %v1776
    %v2354 = vunpack.c.l.b16 %v1777
    %v2355 = vunpack.c.h.b16 %v1777
    %v2356 = vunpack.c.l.b16 %v1778
    %v2357 = vunpack.c.h.b16 %v1778
    %v2358 = vunpack.c.l.b16 %v1779
    %v2359 = vunpack.c.h.b16 %v1779
    %v2360 = vunpack.c.l.b16 %v1780
    %v2361 = vunpack.c.h.b16 %v1780
    %v2362 = vunpack.c.l.b16 %v1781
    %v2363 = vunpack.c.h.b16 %v1781
    %v2364 = vunpack.c.l.b16 %v1782
    %v2365 = vunpack.c.h.b16 %v1782
    %v2366 = vunpack.c.l.b16 %v1783
    %v2367 = vunpack.c.h.b16 %v1783
    %v2368 = vunpack.c.l.b16 %v1784
    %v2369 = vunpack.c.h.b16 %v1784
    %v2370 = vunpack.c.l.b16 %v1785
    %v2371 = vunpack.c.h.b16 %v1785
    %v2372 = vunpack.c.l.b16 %v1786
    %v2373 = vunpack.c.h.b16 %v1786
    %v2374 = vunpack.c.l.b16 %v1787
    %v2375 = vunpack.c.h.b16 %v1787
    %v2376 = vunpack.c.l.b16 %v1788
    %v2377 = vunpack.c.h.b16 %v1788
    %v2378 = vunpack.c.l.b16 %v1789
    %v2379 = vunpack.c.h.b16 %v1789
    %v2380 = vunpack.c.l.b16 %v1790
    %v2381 = vunpack.c.h.b16 %v1790
    %v2382 = vunpack.c.l.b16 %v1791
    %v2383 = vunpack.c.h.b16 %v1791
    %v2384 = vpack.c.b16 %v2322, %v2320
    %v2385 = vpack.c.b16 %v2323, %v2321
    %v2386 = vpack.c.b16 %v2326, %v2324
    %v2387 = vpack.c.b16 %v2327, %v2325
    %v2388 = vpack.c.b16 %v2330, %v2328
    %v2389 = vpack.c.b16 %v2331, %v2329
    %v2390 = vpack.c.b16 %v2334, %v2332
    %v2391 = vpack.c.b16 %v2335, %v2333
    %v2392 = vpack.c.b16 %v2338, %v2336
    %v2393 = vpack.c.b16 %v2339, %v2337
    %v2394 = vpack.c.b16 %v2342, %v2340
    %v2395 = vpack.c.b16 %v2343, %v2341
    %v2396 = vpack.c.b16 %v2346, %v2344
    %v2397 = vpack.c.b16 %v2347, %v2345
    %v2398 = vpack.c.b16 %v2350, %v2348
    %v2399 = vpack.c.b16 %v2351, %v2349
    %v2400 = vpack.c.b16 %v2354, %v2352
    %v2401 = vpack.c.b16 %v2355, %v2353
    %v2402 = vpack.c.b16 %v2358, %v2356
    %v2403 = vpack.c.b16 %v2359, %v2357
    %v2404 = vpack.c.b16 %v2362, %v2360
    %v2405 = vpack.c.b16 %v2363, %v2361
    %v2406 = vpack.c.b16 %v2366, %v2364
    %v2407 = vpack.c.b16 %v2367, %v2365
    %v2408 = vpack.c.b16 %v2370, %v2368
    %v2409 = vpack.c.b16 %v2371, %v2369
    %v2410 = vpack.c.b16 %v2374, %v2372
    %v2411 = vpack.c.b16 %v2375, %v2373
    %v2412 = vpack.c.b16 %v2378, %v2376
    %v2413 = vpack.c.b16 %v2379, %v2377
    %v2414 = vpack.c.b16 %v2382, %v2380
    %v2415 = vpack.c.b16 %v2383, %v2381
    %2448 = vmatpush.bf16.msra.mxu0 %v2398
    %2449 = vmatpush.bf16.msra.mxu0 %v2396
    %2450 = vmatpush.bf16.msra.mxu0 %v2394
    %2451 = vmatpush.bf16.msra.mxu0 %v2392
    %2452 = vmatpush.bf16.msra.mxu0 %v2390
    %2453 = vmatpush.bf16.msra.mxu0 %v2388
    %2454 = vmatpush.bf16.msra.mxu0 %v2386
    %2455 = vmatpush.bf16.msra.mxu0 %v2384
    %2456 = vmatmul.bf16.gmra.mxu0 %v1758
    %v2457 = vpop.f32.mrf.mxu0
    %v2458 = vadd.f32 %v2228, %v2457
    %v2459 = vpop.f32.mrf.mxu0
    %v2460 = vadd.f32 %v2230, %v2459
    %2461 = vdwg.mxu0
    %2462 = vmatpush.bf16.msra.mxu0 %v2414
    %2463 = vmatpush.bf16.msra.mxu0 %v2412
    %2464 = vmatpush.bf16.msra.mxu0 %v2410
    %2465 = vmatpush.bf16.msra.mxu0 %v2408
    %2466 = vmatpush.bf16.msra.mxu0 %v2406
    %2467 = vmatpush.bf16.msra.mxu0 %v2404
    %2468 = vmatpush.bf16.msra.mxu0 %v2402
    %2469 = vmatpush.bf16.msra.mxu0 %v2400
    %2470 = vmatmul.bf16.gmra.mxu0 %v1759
    %v2471 = vpop.f32.mrf.mxu0
    %v2472 = vadd.f32 %v2458, %v2471
    %v2473 = vpop.f32.mrf.mxu0
    %v2474 = vadd.f32 %v2460, %v2473
    %2475 = vdwg.mxu0
    %2476 = vmatpush.bf16.msra.mxu0 %v2399
    %2477 = vmatpush.bf16.msra.mxu0 %v2397
    %2478 = vmatpush.bf16.msra.mxu0 %v2395
    %2479 = vmatpush.bf16.msra.mxu0 %v2393
    %2480 = vmatpush.bf16.msra.mxu0 %v2391
    %2481 = vmatpush.bf16.msra.mxu0 %v2389
    %2482 = vmatpush.bf16.msra.mxu0 %v2387
    %2483 = vmatpush.bf16.msra.mxu0 %v2385
    %2484 = vmatmul.bf16.gmra.mxu0 %v1758
    %v2485 = vpop.f32.mrf.mxu0
    %v2486 = vadd.f32 %v2284, %v2485
    %v2487 = vpop.f32.mrf.mxu0
    %v2488 = vadd.f32 %v2286, %v2487
    %2489 = vdwg.mxu0
    %2490 = vmatpush.bf16.msra.mxu0 %v2415
    %2491 = vmatpush.bf16.msra.mxu0 %v2413
    %2492 = vmatpush.bf16.msra.mxu0 %v2411
    %2493 = vmatpush.bf16.msra.mxu0 %v2409
    %2494 = vmatpush.bf16.msra.mxu0 %v2407
    %2495 = vmatpush.bf16.msra.mxu0 %v2405
    %2496 = vmatpush.bf16.msra.mxu0 %v2403
    %2497 = vmatpush.bf16.msra.mxu0 %v2401
    %2498 = vmatmul.bf16.gmra.mxu0 %v1759
    %v2499 = vpop.f32.mrf.mxu0
    %v2500 = vadd.f32 %v2486, %v2499
    %v2501 = vpop.f32.mrf.mxu0
    %v2502 = vadd.f32 %v2488, %v2501
    %2503 = vdwg.mxu0
    %v2504 = vld [vmem:[%s14] sm:$0x3]
    %v2506 = vperm.slane %v2504, 0
    %v2507 = vperm.slane %v2504, 1
    %v2510 = vadd.f32 %v2472, %v2506
    %v2511 = vadd.f32 %v2500, %v2507
    %v2512 = vadd.f32 %v2474, %v2506
    %v2513 = vadd.f32 %v2502, %v2507
    %v2514 = vmax.f32 %v2510, 0.0
    %v2515 = vmax.f32 %v2511, 0.0
    %v2516 = vmax.f32 %v2512, 0.0
    %v2517 = vmax.f32 %v2513, 0.0
    %v2518 = vpack.c.bf16 %v2516, %v2514
    %v2519 = vpack.c.bf16 %v2517, %v2515
    %v2520 = vld [vmem:[#allocation8] sm:$0xff]
    %v2521 = vld [vmem:[#allocation8 + $0x8] sm:$0xff]
    %v2522 = vld [vmem:[#allocation8 + $0x10] sm:$0xff]
    %v2523 = vld [vmem:[#allocation8 + $0x18] sm:$0xff]
    %v2524 = vld [vmem:[#allocation8 + $0x20] sm:$0xff]
    %v2525 = vld [vmem:[#allocation8 + $0x28] sm:$0xff]
    %v2526 = vld [vmem:[#allocation8 + $0x30] sm:$0xff]
    %v2527 = vld [vmem:[#allocation8 + $0x38] sm:$0xff]
    %v2528 = vld [vmem:[#allocation8 + $0x40] sm:$0xff]
    %v2529 = vld [vmem:[#allocation8 + $0x48] sm:$0xff]
    %v2530 = vld [vmem:[#allocation8 + $0x50] sm:$0xff]
    %v2531 = vld [vmem:[#allocation8 + $0x58] sm:$0xff]
    %v2532 = vld [vmem:[#allocation8 + $0x60] sm:$0xff]
    %v2533 = vld [vmem:[#allocation8 + $0x68] sm:$0xff]
    %v2534 = vld [vmem:[#allocation8 + $0x70] sm:$0xff]
    %v2535 = vld [vmem:[#allocation8 + $0x78] sm:$0xff]
    %v2536 = vld [vmem:[#allocation8 + $0x80] sm:$0xff]
    %v2537 = vld [vmem:[#allocation8 + $0x88] sm:$0xff]
    %v2538 = vld [vmem:[#allocation8 + $0x90] sm:$0xff]
    %v2539 = vld [vmem:[#allocation8 + $0x98] sm:$0xff]
    %v2540 = vld [vmem:[#allocation8 + $0xa0] sm:$0xff]
    %v2541 = vld [vmem:[#allocation8 + $0xa8] sm:$0xff]
    %v2542 = vld [vmem:[#allocation8 + $0xb0] sm:$0xff]
    %v2543 = vld [vmem:[#allocation8 + $0xb8] sm:$0xff]
    %v2544 = vld [vmem:[#allocation8 + $0xc0] sm:$0xff]
    %v2545 = vld [vmem:[#allocation8 + $0xc8] sm:$0xff]
    %v2546 = vld [vmem:[#allocation8 + $0xd0] sm:$0xff]
    %v2547 = vld [vmem:[#allocation8 + $0xd8] sm:$0xff]
    %v2548 = vld [vmem:[#allocation8 + $0xe0] sm:$0xff]
    %v2549 = vld [vmem:[#allocation8 + $0xe8] sm:$0xff]
    %v2550 = vld [vmem:[#allocation8 + $0xf0] sm:$0xff]
    %v2551 = vld [vmem:[#allocation8 + $0xf8] sm:$0xff]
    %v2552 = vld [vmem:[%s16] sm:$0x3]
    %v2554 = vperm.slane %v2552, 0
    %v2555 = vperm.slane %v2552, 1
    %v2590 = vunpack.c.l.b16 %v2520
    %v2591 = vunpack.c.h.b16 %v2520
    %v2592 = vunpack.c.l.b16 %v2521
    %v2593 = vunpack.c.h.b16 %v2521
    %v2594 = vunpack.c.l.b16 %v2522
    %v2595 = vunpack.c.h.b16 %v2522
    %v2596 = vunpack.c.l.b16 %v2523
    %v2597 = vunpack.c.h.b16 %v2523
    %v2598 = vunpack.c.l.b16 %v2524
    %v2599 = vunpack.c.h.b16 %v2524
    %v2600 = vunpack.c.l.b16 %v2525
    %v2601 = vunpack.c.h.b16 %v2525
    %v2602 = vunpack.c.l.b16 %v2526
    %v2603 = vunpack.c.h.b16 %v2526
    %v2604 = vunpack.c.l.b16 %v2527
    %v2605 = vunpack.c.h.b16 %v2527
    %v2606 = vunpack.c.l.b16 %v2528
    %v2607 = vunpack.c.h.b16 %v2528
    %v2608 = vunpack.c.l.b16 %v2529
    %v2609 = vunpack.c.h.b16 %v2529
    %v2610 = vunpack.c.l.b16 %v2530
    %v2611 = vunpack.c.h.b16 %v2530
    %v2612 = vunpack.c.l.b16 %v2531
    %v2613 = vunpack.c.h.b16 %v2531
    %v2614 = vunpack.c.l.b16 %v2532
    %v2615 = vunpack.c.h.b16 %v2532
    %v2616 = vunpack.c.l.b16 %v2533
    %v2617 = vunpack.c.h.b16 %v2533
    %v2618 = vunpack.c.l.b16 %v2534
    %v2619 = vunpack.c.h.b16 %v2534
    %v2620 = vunpack.c.l.b16 %v2535
    %v2621 = vunpack.c.h.b16 %v2535
    %v2622 = vunpack.c.l.b16 %v2536
    %v2623 = vunpack.c.h.b16 %v2536
    %v2624 = vunpack.c.l.b16 %v2537
    %v2625 = vunpack.c.h.b16 %v2537
    %v2626 = vunpack.c.l.b16 %v2538
    %v2627 = vunpack.c.h.b16 %v2538
    %v2628 = vunpack.c.l.b16 %v2539
    %v2629 = vunpack.c.h.b16 %v2539
    %v2630 = vunpack.c.l.b16 %v2540
    %v2631 = vunpack.c.h.b16 %v2540
    %v2632 = vunpack.c.l.b16 %v2541
    %v2633 = vunpack.c.h.b16 %v2541
    %v2634 = vunpack.c.l.b16 %v2542
    %v2635 = vunpack.c.h.b16 %v2542
    %v2636 = vunpack.c.l.b16 %v2543
    %v2637 = vunpack.c.h.b16 %v2543
    %v2638 = vunpack.c.l.b16 %v2544
    %v2639 = vunpack.c.h.b16 %v2544
    %v2640 = vunpack.c.l.b16 %v2545
    %v2641 = vunpack.c.h.b16 %v2545
    %v2642 = vunpack.c.l.b16 %v2546
    %v2643 = vunpack.c.h.b16 %v2546
    %v2644 = vunpack.c.l.b16 %v2547
    %v2645 = vunpack.c.h.b16 %v2547
    %v2646 = vunpack.c.l.b16 %v2548
    %v2647 = vunpack.c.h.b16 %v2548
    %v2648 = vunpack.c.l.b16 %v2549
    %v2649 = vunpack.c.h.b16 %v2549
    %v2650 = vunpack.c.l.b16 %v2550
    %v2651 = vunpack.c.h.b16 %v2550
    %v2652 = vunpack.c.l.b16 %v2551
    %v2653 = vunpack.c.h.b16 %v2551
    %v2654 = vpack.c.b16 %v2592, %v2590
    %v2655 = vpack.c.b16 %v2593, %v2591
    %v2656 = vpack.c.b16 %v2596, %v2594
    %v2657 = vpack.c.b16 %v2597, %v2595
    %v2658 = vpack.c.b16 %v2600, %v2598
    %v2659 = vpack.c.b16 %v2601, %v2599
    %v2660 = vpack.c.b16 %v2604, %v2602
    %v2661 = vpack.c.b16 %v2605, %v2603
    %v2662 = vpack.c.b16 %v2608, %v2606
    %v2663 = vpack.c.b16 %v2609, %v2607
    %v2664 = vpack.c.b16 %v2612, %v2610
    %v2665 = vpack.c.b16 %v2613, %v2611
    %v2666 = vpack.c.b16 %v2616, %v2614
    %v2667 = vpack.c.b16 %v2617, %v2615
    %v2668 = vpack.c.b16 %v2620, %v2618
    %v2669 = vpack.c.b16 %v2621, %v2619
    %v2670 = vpack.c.b16 %v2624, %v2622
    %v2671 = vpack.c.b16 %v2625, %v2623
    %v2672 = vpack.c.b16 %v2628, %v2626
    %v2673 = vpack.c.b16 %v2629, %v2627
    %v2674 = vpack.c.b16 %v2632, %v2630
    %v2675 = vpack.c.b16 %v2633, %v2631
    %v2676 = vpack.c.b16 %v2636, %v2634
    %v2677 = vpack.c.b16 %v2637, %v2635
    %v2678 = vpack.c.b16 %v2640, %v2638
    %v2679 = vpack.c.b16 %v2641, %v2639
    %v2680 = vpack.c.b16 %v2644, %v2642
    %v2681 = vpack.c.b16 %v2645, %v2643
    %v2682 = vpack.c.b16 %v2648, %v2646
    %v2683 = vpack.c.b16 %v2649, %v2647
    %v2684 = vpack.c.b16 %v2652, %v2650
    %v2685 = vpack.c.b16 %v2653, %v2651
    %2718 = vmatpush.bf16.msra.mxu0 %v2668
    %2719 = vmatpush.bf16.msra.mxu0 %v2666
    %2720 = vmatpush.bf16.msra.mxu0 %v2664
    %2721 = vmatpush.bf16.msra.mxu0 %v2662
    %2722 = vmatpush.bf16.msra.mxu0 %v2660
    %2723 = vmatpush.bf16.msra.mxu0 %v2658
    %2724 = vmatpush.bf16.msra.mxu0 %v2656
    %2725 = vmatpush.bf16.msra.mxu0 %v2654
    %2726 = vmatmul.bf16.gmra.mxu0 %v2518
    %v2727 = vpop.f32.mrf.mxu0
    %v2728 = vadd.f32 %v2554, %v2727
    %v2729 = vpop.f32.mrf.mxu0
    %v2730 = vadd.f32 %v2554, %v2729
    %2731 = vdwg.mxu0
    %2732 = vmatpush.bf16.msra.mxu0 %v2684
    %2733 = vmatpush.bf16.msra.mxu0 %v2682
    %2734 = vmatpush.bf16.msra.mxu0 %v2680
    %2735 = vmatpush.bf16.msra.mxu0 %v2678
    %2736 = vmatpush.bf16.msra.mxu0 %v2676
    %2737 = vmatpush.bf16.msra.mxu0 %v2674
    %2738 = vmatpush.bf16.msra.mxu0 %v2672
    %2739 = vmatpush.bf16.msra.mxu0 %v2670
    %2740 = vmatmul.bf16.gmra.mxu0 %v2519
    %v2741 = vpop.f32.mrf.mxu0
    %v2742 = vadd.f32 %v2728, %v2741
    %v2743 = vpop.f32.mrf.mxu0
    %v2744 = vadd.f32 %v2730, %v2743
    %2745 = vdwg.mxu0
    %2746 = vmatpush.bf16.msra.mxu0 %v2669
    %2747 = vmatpush.bf16.msra.mxu0 %v2667
    %2748 = vmatpush.bf16.msra.mxu0 %v2665
    %2749 = vmatpush.bf16.msra.mxu0 %v2663
    %2750 = vmatpush.bf16.msra.mxu0 %v2661
    %2751 = vmatpush.bf16.msra.mxu0 %v2659
    %2752 = vmatpush.bf16.msra.mxu0 %v2657
    %2753 = vmatpush.bf16.msra.mxu0 %v2655
    %2754 = vmatmul.bf16.gmra.mxu0 %v2518
    %v2755 = vpop.f32.mrf.mxu0
    %v2756 = vadd.f32 %v2555, %v2755
    %v2757 = vpop.f32.mrf.mxu0
    %v2758 = vadd.f32 %v2555, %v2757
    %2759 = vdwg.mxu0
    %2760 = vmatpush.bf16.msra.mxu0 %v2685
    %2761 = vmatpush.bf16.msra.mxu0 %v2683
    %2762 = vmatpush.bf16.msra.mxu0 %v2681
    %2763 = vmatpush.bf16.msra.mxu0 %v2679
    %2764 = vmatpush.bf16.msra.mxu0 %v2677
    %2765 = vmatpush.bf16.msra.mxu0 %v2675
    %2766 = vmatpush.bf16.msra.mxu0 %v2673
    %2767 = vmatpush.bf16.msra.mxu0 %v2671
    %2768 = vmatmul.bf16.gmra.mxu0 %v2519
    %v2769 = vpop.f32.mrf.mxu0
    %v2770 = vadd.f32 %v2756, %v2769
    %v2771 = vpop.f32.mrf.mxu0
    %v2772 = vadd.f32 %v2758, %v2771
    %2773 = vdwg.mxu0
    %v2774 = vmax.f32 %v2742, 0.0
    %v2775 = vmax.f32 %v2770, 0.0
    %v2776 = vmax.f32 %v2744, 0.0
    %v2777 = vmax.f32 %v2772, 0.0
    %v2778 = vpack.c.bf16 %v2776, %v2774
    %v2779 = vpack.c.bf16 %v2777, %v2775
    %v2780 = vld [vmem:[#allocation10] sm:$0xff]
    %v2781 = vld [vmem:[#allocation10 + $0x8] sm:$0xff]
    %v2782 = vld [vmem:[#allocation10 + $0x10] sm:$0xff]
    %v2783 = vld [vmem:[#allocation10 + $0x18] sm:$0xff]
    %v2784 = vld [vmem:[#allocation10 + $0x20] sm:$0xff]
    %v2785 = vld [vmem:[#allocation10 + $0x28] sm:$0xff]
    %v2786 = vld [vmem:[#allocation10 + $0x30] sm:$0xff]
    %v2787 = vld [vmem:[#allocation10 + $0x38] sm:$0xff]
    %v2788 = vld [vmem:[#allocation10 + $0x40] sm:$0xff]
    %v2789 = vld [vmem:[#allocation10 + $0x48] sm:$0xff]
    %v2790 = vld [vmem:[#allocation10 + $0x50] sm:$0xff]
    %v2791 = vld [vmem:[#allocation10 + $0x58] sm:$0xff]
    %v2792 = vld [vmem:[#allocation10 + $0x60] sm:$0xff]
    %v2793 = vld [vmem:[#allocation10 + $0x68] sm:$0xff]
    %v2794 = vld [vmem:[#allocation10 + $0x70] sm:$0xff]
    %v2795 = vld [vmem:[#allocation10 + $0x78] sm:$0xff]
    %v2796 = vld [vmem:[#allocation10 + $0x80] sm:$0xff]
    %v2797 = vld [vmem:[#allocation10 + $0x88] sm:$0xff]
    %v2798 = vld [vmem:[#allocation10 + $0x90] sm:$0xff]
    %v2799 = vld [vmem:[#allocation10 + $0x98] sm:$0xff]
    %v2800 = vld [vmem:[#allocation10 + $0xa0] sm:$0xff]
    %v2801 = vld [vmem:[#allocation10 + $0xa8] sm:$0xff]
    %v2802 = vld [vmem:[#allocation10 + $0xb0] sm:$0xff]
    %v2803 = vld [vmem:[#allocation10 + $0xb8] sm:$0xff]
    %v2804 = vld [vmem:[#allocation10 + $0xc0] sm:$0xff]
    %v2805 = vld [vmem:[#allocation10 + $0xc8] sm:$0xff]
    %v2806 = vld [vmem:[#allocation10 + $0xd0] sm:$0xff]
    %v2807 = vld [vmem:[#allocation10 + $0xd8] sm:$0xff]
    %v2808 = vld [vmem:[#allocation10 + $0xe0] sm:$0xff]
    %v2809 = vld [vmem:[#allocation10 + $0xe8] sm:$0xff]
    %v2810 = vld [vmem:[#allocation10 + $0xf0] sm:$0xff]
    %v2811 = vld [vmem:[#allocation10 + $0xf8] sm:$0xff]
    %v2812 = vld [vmem:[%s18] sm:$0x3]
    %v2814 = vperm.slane %v2812, 0
    %v2815 = vperm.slane %v2812, 1
    %v2850 = vunpack.c.l.b16 %v2780
    %v2851 = vunpack.c.h.b16 %v2780
    %v2852 = vunpack.c.l.b16 %v2781
    %v2853 = vunpack.c.h.b16 %v2781
    %v2854 = vunpack.c.l.b16 %v2782
    %v2855 = vunpack.c.h.b16 %v2782
    %v2856 = vunpack.c.l.b16 %v2783
    %v2857 = vunpack.c.h.b16 %v2783
    %v2858 = vunpack.c.l.b16 %v2784
    %v2859 = vunpack.c.h.b16 %v2784
    %v2860 = vunpack.c.l.b16 %v2785
    %v2861 = vunpack.c.h.b16 %v2785
    %v2862 = vunpack.c.l.b16 %v2786
    %v2863 = vunpack.c.h.b16 %v2786
    %v2864 = vunpack.c.l.b16 %v2787
    %v2865 = vunpack.c.h.b16 %v2787
    %v2866 = vunpack.c.l.b16 %v2788
    %v2867 = vunpack.c.h.b16 %v2788
    %v2868 = vunpack.c.l.b16 %v2789
    %v2869 = vunpack.c.h.b16 %v2789
    %v2870 = vunpack.c.l.b16 %v2790
    %v2871 = vunpack.c.h.b16 %v2790
    %v2872 = vunpack.c.l.b16 %v2791
    %v2873 = vunpack.c.h.b16 %v2791
    %v2874 = vunpack.c.l.b16 %v2792
    %v2875 = vunpack.c.h.b16 %v2792
    %v2876 = vunpack.c.l.b16 %v2793
    %v2877 = vunpack.c.h.b16 %v2793
    %v2878 = vunpack.c.l.b16 %v2794
    %v2879 = vunpack.c.h.b16 %v2794
    %v2880 = vunpack.c.l.b16 %v2795
    %v2881 = vunpack.c.h.b16 %v2795
    %v2882 = vunpack.c.l.b16 %v2796
    %v2883 = vunpack.c.h.b16 %v2796
    %v2884 = vunpack.c.l.b16 %v2797
    %v2885 = vunpack.c.h.b16 %v2797
    %v2886 = vunpack.c.l.b16 %v2798
    %v2887 = vunpack.c.h.b16 %v2798
    %v2888 = vunpack.c.l.b16 %v2799
    %v2889 = vunpack.c.h.b16 %v2799
    %v2890 = vunpack.c.l.b16 %v2800
    %v2891 = vunpack.c.h.b16 %v2800
    %v2892 = vunpack.c.l.b16 %v2801
    %v2893 = vunpack.c.h.b16 %v2801
    %v2894 = vunpack.c.l.b16 %v2802
    %v2895 = vunpack.c.h.b16 %v2802
    %v2896 = vunpack.c.l.b16 %v2803
    %v2897 = vunpack.c.h.b16 %v2803
    %v2898 = vunpack.c.l.b16 %v2804
    %v2899 = vunpack.c.h.b16 %v2804
    %v2900 = vunpack.c.l.b16 %v2805
    %v2901 = vunpack.c.h.b16 %v2805
    %v2902 = vunpack.c.l.b16 %v2806
    %v2903 = vunpack.c.h.b16 %v2806
    %v2904 = vunpack.c.l.b16 %v2807
    %v2905 = vunpack.c.h.b16 %v2807
    %v2906 = vunpack.c.l.b16 %v2808
    %v2907 = vunpack.c.h.b16 %v2808
    %v2908 = vunpack.c.l.b16 %v2809
    %v2909 = vunpack.c.h.b16 %v2809
    %v2910 = vunpack.c.l.b16 %v2810
    %v2911 = vunpack.c.h.b16 %v2810
    %v2912 = vunpack.c.l.b16 %v2811
    %v2913 = vunpack.c.h.b16 %v2811
    %v2914 = vpack.c.b16 %v2852, %v2850
    %v2915 = vpack.c.b16 %v2853, %v2851
    %v2916 = vpack.c.b16 %v2856, %v2854
    %v2917 = vpack.c.b16 %v2857, %v2855
    %v2918 = vpack.c.b16 %v2860, %v2858
    %v2919 = vpack.c.b16 %v2861, %v2859
    %v2920 = vpack.c.b16 %v2864, %v2862
    %v2921 = vpack.c.b16 %v2865, %v2863
    %v2922 = vpack.c.b16 %v2868, %v2866
    %v2923 = vpack.c.b16 %v2869, %v2867
    %v2924 = vpack.c.b16 %v2872, %v2870
    %v2925 = vpack.c.b16 %v2873, %v2871
    %v2926 = vpack.c.b16 %v2876, %v2874
    %v2927 = vpack.c.b16 %v2877, %v2875
    %v2928 = vpack.c.b16 %v2880, %v2878
    %v2929 = vpack.c.b16 %v2881, %v2879
    %v2930 = vpack.c.b16 %v2884, %v2882
    %v2931 = vpack.c.b16 %v2885, %v2883
    %v2932 = vpack.c.b16 %v2888, %v2886
    %v2933 = vpack.c.b16 %v2889, %v2887
    %v2934 = vpack.c.b16 %v2892, %v2890
    %v2935 = vpack.c.b16 %v2893, %v2891
    %v2936 = vpack.c.b16 %v2896, %v2894
    %v2937 = vpack.c.b16 %v2897, %v2895
    %v2938 = vpack.c.b16 %v2900, %v2898
    %v2939 = vpack.c.b16 %v2901, %v2899
    %v2940 = vpack.c.b16 %v2904, %v2902
    %v2941 = vpack.c.b16 %v2905, %v2903
    %v2942 = vpack.c.b16 %v2908, %v2906
    %v2943 = vpack.c.b16 %v2909, %v2907
    %v2944 = vpack.c.b16 %v2912, %v2910
    %v2945 = vpack.c.b16 %v2913, %v2911
    %2978 = vmatpush.bf16.msra.mxu0 %v2928
    %2979 = vmatpush.bf16.msra.mxu0 %v2926
    %2980 = vmatpush.bf16.msra.mxu0 %v2924
    %2981 = vmatpush.bf16.msra.mxu0 %v2922
    %2982 = vmatpush.bf16.msra.mxu0 %v2920
    %2983 = vmatpush.bf16.msra.mxu0 %v2918
    %2984 = vmatpush.bf16.msra.mxu0 %v2916
    %2985 = vmatpush.bf16.msra.mxu0 %v2914
    %2986 = vmatmul.bf16.gmra.mxu0 %v2778
    %v2987 = vpop.f32.mrf.mxu0
    %v2988 = vadd.f32 %v2814, %v2987
    %v2989 = vpop.f32.mrf.mxu0
    %v2990 = vadd.f32 %v2814, %v2989
    %2991 = vdwg.mxu0
    %2992 = vmatpush.bf16.msra.mxu0 %v2944
    %2993 = vmatpush.bf16.msra.mxu0 %v2942
    %2994 = vmatpush.bf16.msra.mxu0 %v2940
    %2995 = vmatpush.bf16.msra.mxu0 %v2938
    %2996 = vmatpush.bf16.msra.mxu0 %v2936
    %2997 = vmatpush.bf16.msra.mxu0 %v2934
    %2998 = vmatpush.bf16.msra.mxu0 %v2932
    %2999 = vmatpush.bf16.msra.mxu0 %v2930
    %3000 = vmatmul.bf16.gmra.mxu0 %v2779
    %v3001 = vpop.f32.mrf.mxu0
    %v3002 = vadd.f32 %v2988, %v3001
    %v3003 = vpop.f32.mrf.mxu0
    %v3004 = vadd.f32 %v2990, %v3003
    %3005 = vdwg.mxu0
    %3006 = vmatpush.bf16.msra.mxu0 %v2929
    %3007 = vmatpush.bf16.msra.mxu0 %v2927
    %3008 = vmatpush.bf16.msra.mxu0 %v2925
    %3009 = vmatpush.bf16.msra.mxu0 %v2923
    %3010 = vmatpush.bf16.msra.mxu0 %v2921
    %3011 = vmatpush.bf16.msra.mxu0 %v2919
    %3012 = vmatpush.bf16.msra.mxu0 %v2917
    %3013 = vmatpush.bf16.msra.mxu0 %v2915
    %3014 = vmatmul.bf16.gmra.mxu0 %v2778
    %v3015 = vpop.f32.mrf.mxu0
    %v3016 = vadd.f32 %v2815, %v3015
    %v3017 = vpop.f32.mrf.mxu0
    %v3018 = vadd.f32 %v2815, %v3017
    %3019 = vdwg.mxu0
    %3020 = vmatpush.bf16.msra.mxu0 %v2945
    %3021 = vmatpush.bf16.msra.mxu0 %v2943
    %3022 = vmatpush.bf16.msra.mxu0 %v2941
    %3023 = vmatpush.bf16.msra.mxu0 %v2939
    %3024 = vmatpush.bf16.msra.mxu0 %v2937
    %3025 = vmatpush.bf16.msra.mxu0 %v2935
    %3026 = vmatpush.bf16.msra.mxu0 %v2933
    %3027 = vmatpush.bf16.msra.mxu0 %v2931
    %3028 = vmatmul.bf16.gmra.mxu0 %v2779
    %v3029 = vpop.f32.mrf.mxu0
    %v3030 = vadd.f32 %v3016, %v3029
    %v3031 = vpop.f32.mrf.mxu0
    %v3032 = vadd.f32 %v3018, %v3031
    %3033 = vdwg.mxu0
    %v3034 = vmax.f32 %v3002, 0.0
    %v3035 = vmax.f32 %v3030, 0.0
    %v3036 = vmax.f32 %v3004, 0.0
    %v3037 = vmax.f32 %v3032, 0.0
    %v3038 = vpack.c.bf16 %v3035, %v3034
    %v3039 = vpack.c.bf16 %v3037, %v3036
    %v3040 = vunpack.c.l.bf16 %v3038
    %v3041 = vunpack.c.h.bf16 %v3038
    %v3042 = vunpack.c.l.bf16 %v3039
    %v3043 = vunpack.c.h.bf16 %v3039
    %v3044 = vld [vmem:[%s21] sm:$0x3]
    %v3046 = vperm.slane %v3044, 0
    %v3047 = vperm.slane %v3044, 1
    %v3050 = vmul.f32 %v3040, %v3046
    %v3051 = vmul.f32 %v3041, %v3047
    %v3052 = vmul.f32 %v3042, %v3046
    %v3053 = vmul.f32 %v3043, %v3047
    %v3054 = vadd.f32 %v3050, %v3051
    %3055 = vadd.xlane.f32.xlu0 %v3054
    %v3056 = vpop.xlane.xlu0 %3055
    %v3057 = vadd.f32 %v3052, %v3053
    %3058 = vadd.xlane.f32.xlu0 %v3057
    %v3059 = vpop.xlane.xlu0 %3058
    %v3060 = vld [vmem:[#allocation2] sm:$0x1]
    %v3062 = vperm.slane %v3060, 0
    %v3064 = vadd.f32 %v3056, %v3062
    %v3065 = vadd.f32 %v3059, %v3062
    %v3066 = vadd.f32 %v3064, -1.0
    %v3067 = vadd.f32 %v3065, -1.0
    %v3068 = vmax.f32 %v3066, 0.0
    %v3069 = vmax.f32 %v3067, 0.0
    %v3070 = vand.u32 2147483647, %v3066
    %v3071 = vand.u32 2147483647, %v3067
    %v3072 = vsub.f32 0.0, %v3070
    %v3073 = vsub.f32 0.0, %v3071
    %v3074 = vmul.f32 %v3072, 1.442695
    %v3075 = vpow.pop %v3074
    %v3076 = vmul.f32 %v3073, 1.442695
    %v3077 = vpow.pop %v3076
    %v3078 = vadd.f32 %v3075, 1.0
    %v3079 = vadd.f32 %v3077, 1.0
    %v3080 = vlog2.pop %v3078
    %v3081 = vmul.f32 %v3080, 0.6931472
    %v3082 = vlog2.pop %v3079
    %v3083 = vmul.f32 %v3082, 0.6931472
    %v3084 = vadd.f32 %v3068, %v3081
    %v3085 = vadd.f32 %v3069, %v3083
    %v3086 = vld [vmem:[#allocation11] sm:$0xff]
    %v3087 = vld [vmem:[#allocation11 + $0x8] sm:$0xff]
    %v3088 = vld [vmem:[#allocation11 + $0x10] sm:$0xff]
    %v3089 = vld [vmem:[#allocation11 + $0x18] sm:$0xff]
    %v3090 = vld [vmem:[#allocation11 + $0x20] sm:$0xff]
    %v3091 = vld [vmem:[#allocation11 + $0x28] sm:$0xff]
    %v3092 = vld [vmem:[#allocation11 + $0x30] sm:$0xff]
    %v3093 = vld [vmem:[#allocation11 + $0x38] sm:$0xff]
    %v3094 = vld [vmem:[#allocation11 + $0x40] sm:$0xff]
    %v3095 = vld [vmem:[#allocation11 + $0x48] sm:$0xff]
    %v3096 = vld [vmem:[#allocation11 + $0x50] sm:$0xff]
    %v3097 = vld [vmem:[#allocation11 + $0x58] sm:$0xff]
    %v3098 = vld [vmem:[#allocation11 + $0x60] sm:$0xff]
    %v3099 = vld [vmem:[#allocation11 + $0x68] sm:$0xff]
    %v3100 = vld [vmem:[#allocation11 + $0x70] sm:$0xff]
    %v3101 = vld [vmem:[#allocation11 + $0x78] sm:$0xff]
    %v3102 = vld [vmem:[#allocation11 + $0x80] sm:$0xff]
    %v3103 = vld [vmem:[#allocation11 + $0x88] sm:$0xff]
    %v3104 = vld [vmem:[#allocation11 + $0x90] sm:$0xff]
    %v3105 = vld [vmem:[#allocation11 + $0x98] sm:$0xff]
    %v3106 = vld [vmem:[#allocation11 + $0xa0] sm:$0xff]
    %v3107 = vld [vmem:[#allocation11 + $0xa8] sm:$0xff]
    %v3108 = vld [vmem:[#allocation11 + $0xb0] sm:$0xff]
    %v3109 = vld [vmem:[#allocation11 + $0xb8] sm:$0xff]
    %v3110 = vld [vmem:[#allocation11 + $0xc0] sm:$0xff]
    %v3111 = vld [vmem:[#allocation11 + $0xc8] sm:$0xff]
    %v3112 = vld [vmem:[#allocation11 + $0xd0] sm:$0xff]
    %v3113 = vld [vmem:[#allocation11 + $0xd8] sm:$0xff]
    %v3114 = vld [vmem:[#allocation11 + $0xe0] sm:$0xff]
    %v3115 = vld [vmem:[#allocation11 + $0xe8] sm:$0xff]
    %v3116 = vld [vmem:[#allocation11 + $0xf0] sm:$0xff]
    %v3117 = vld [vmem:[#allocation11 + $0xf8] sm:$0xff]
    %v3118 = vld [vmem:[%s20] sm:$0x3]
    %v3120 = vperm.slane %v3118, 0
    %v3121 = vperm.slane %v3118, 1
    %v3126 = vunpack.c.l.b16 %v3038
    %v3127 = vunpack.c.h.b16 %v3038
    %v3128 = vunpack.c.l.b16 %v3039
    %v3129 = vunpack.c.h.b16 %v3039
    %v3130 = vpack.c.b16 %v3128, %v3126
    %v3131 = vpack.c.b16 %v3129, %v3127
    %v3166 = vunpack.c.l.b16 %v3086
    %v3167 = vunpack.c.h.b16 %v3086
    %v3168 = vunpack.c.l.b16 %v3087
    %v3169 = vunpack.c.h.b16 %v3087
    %v3170 = vunpack.c.l.b16 %v3088
    %v3171 = vunpack.c.h.b16 %v3088
    %v3172 = vunpack.c.l.b16 %v3089
    %v3173 = vunpack.c.h.b16 %v3089
    %v3174 = vunpack.c.l.b16 %v3090
    %v3175 = vunpack.c.h.b16 %v3090
    %v3176 = vunpack.c.l.b16 %v3091
    %v3177 = vunpack.c.h.b16 %v3091
    %v3178 = vunpack.c.l.b16 %v3092
    %v3179 = vunpack.c.h.b16 %v3092
    %v3180 = vunpack.c.l.b16 %v3093
    %v3181 = vunpack.c.h.b16 %v3093
    %v3182 = vunpack.c.l.b16 %v3094
    %v3183 = vunpack.c.h.b16 %v3094
    %v3184 = vunpack.c.l.b16 %v3095
    %v3185 = vunpack.c.h.b16 %v3095
    %v3186 = vunpack.c.l.b16 %v3096
    %v3187 = vunpack.c.h.b16 %v3096
    %v3188 = vunpack.c.l.b16 %v3097
    %v3189 = vunpack.c.h.b16 %v3097
    %v3190 = vunpack.c.l.b16 %v3098
    %v3191 = vunpack.c.h.b16 %v3098
    %v3192 = vunpack.c.l.b16 %v3099
    %v3193 = vunpack.c.h.b16 %v3099
    %v3194 = vunpack.c.l.b16 %v3100
    %v3195 = vunpack.c.h.b16 %v3100
    %v3196 = vunpack.c.l.b16 %v3101
    %v3197 = vunpack.c.h.b16 %v3101
    %v3198 = vunpack.c.l.b16 %v3102
    %v3199 = vunpack.c.h.b16 %v3102
    %v3200 = vunpack.c.l.b16 %v3103
    %v3201 = vunpack.c.h.b16 %v3103
    %v3202 = vunpack.c.l.b16 %v3104
    %v3203 = vunpack.c.h.b16 %v3104
    %v3204 = vunpack.c.l.b16 %v3105
    %v3205 = vunpack.c.h.b16 %v3105
    %v3206 = vunpack.c.l.b16 %v3106
    %v3207 = vunpack.c.h.b16 %v3106
    %v3208 = vunpack.c.l.b16 %v3107
    %v3209 = vunpack.c.h.b16 %v3107
    %v3210 = vunpack.c.l.b16 %v3108
    %v3211 = vunpack.c.h.b16 %v3108
    %v3212 = vunpack.c.l.b16 %v3109
    %v3213 = vunpack.c.h.b16 %v3109
    %v3214 = vunpack.c.l.b16 %v3110
    %v3215 = vunpack.c.h.b16 %v3110
    %v3216 = vunpack.c.l.b16 %v3111
    %v3217 = vunpack.c.h.b16 %v3111
    %v3218 = vunpack.c.l.b16 %v3112
    %v3219 = vunpack.c.h.b16 %v3112
    %v3220 = vunpack.c.l.b16 %v3113
    %v3221 = vunpack.c.h.b16 %v3113
    %v3222 = vunpack.c.l.b16 %v3114
    %v3223 = vunpack.c.h.b16 %v3114
    %v3224 = vunpack.c.l.b16 %v3115
    %v3225 = vunpack.c.h.b16 %v3115
    %v3226 = vunpack.c.l.b16 %v3116
    %v3227 = vunpack.c.h.b16 %v3116
    %v3228 = vunpack.c.l.b16 %v3117
    %v3229 = vunpack.c.h.b16 %v3117
    %v3230 = vpack.c.b16 %v3168, %v3166
    %v3231 = vpack.c.b16 %v3169, %v3167
    %v3232 = vpack.c.b16 %v3172, %v3170
    %v3233 = vpack.c.b16 %v3173, %v3171
    %v3234 = vpack.c.b16 %v3176, %v3174
    %v3235 = vpack.c.b16 %v3177, %v3175
    %v3236 = vpack.c.b16 %v3180, %v3178
    %v3237 = vpack.c.b16 %v3181, %v3179
    %v3238 = vpack.c.b16 %v3184, %v3182
    %v3239 = vpack.c.b16 %v3185, %v3183
    %v3240 = vpack.c.b16 %v3188, %v3186
    %v3241 = vpack.c.b16 %v3189, %v3187
    %v3242 = vpack.c.b16 %v3192, %v3190
    %v3243 = vpack.c.b16 %v3193, %v3191
    %v3244 = vpack.c.b16 %v3196, %v3194
    %v3245 = vpack.c.b16 %v3197, %v3195
    %v3246 = vpack.c.b16 %v3200, %v3198
    %v3247 = vpack.c.b16 %v3201, %v3199
    %v3248 = vpack.c.b16 %v3204, %v3202
    %v3249 = vpack.c.b16 %v3205, %v3203
    %v3250 = vpack.c.b16 %v3208, %v3206
    %v3251 = vpack.c.b16 %v3209, %v3207
    %v3252 = vpack.c.b16 %v3212, %v3210
    %v3253 = vpack.c.b16 %v3213, %v3211
    %v3254 = vpack.c.b16 %v3216, %v3214
    %v3255 = vpack.c.b16 %v3217, %v3215
    %v3256 = vpack.c.b16 %v3220, %v3218
    %v3257 = vpack.c.b16 %v3221, %v3219
    %v3258 = vpack.c.b16 %v3224, %v3222
    %v3259 = vpack.c.b16 %v3225, %v3223
    %v3260 = vpack.c.b16 %v3228, %v3226
    %v3261 = vpack.c.b16 %v3229, %v3227
    %3294 = vmatpush.bf16.msra.mxu0 %v3244
    %3295 = vmatpush.bf16.msra.mxu0 %v3242
    %3296 = vmatpush.bf16.msra.mxu0 %v3240
    %3297 = vmatpush.bf16.msra.mxu0 %v3238
    %3298 = vmatpush.bf16.msra.mxu0 %v3236
    %3299 = vmatpush.bf16.msra.mxu0 %v3234
    %3300 = vmatpush.bf16.msra.mxu0 %v3232
    %3301 = vmatpush.bf16.msra.mxu0 %v3230
    %3302 = vmatmul.bf16.gmra.mxu0 %v3130
    %v3303 = vpop.f32.mrf.mxu0
    %v3304 = vadd.f32 %v3120, %v3303
    %v3305 = vpop.f32.mrf.mxu0
    %v3306 = vadd.f32 %v3120, %v3305
    %3307 = vdwg.mxu0
    %3308 = vmatpush.bf16.msra.mxu0 %v3260
    %3309 = vmatpush.bf16.msra.mxu0 %v3258
    %3310 = vmatpush.bf16.msra.mxu0 %v3256
    %3311 = vmatpush.bf16.msra.mxu0 %v3254
    %3312 = vmatpush.bf16.msra.mxu0 %v3252
    %3313 = vmatpush.bf16.msra.mxu0 %v3250
    %3314 = vmatpush.bf16.msra.mxu0 %v3248
    %3315 = vmatpush.bf16.msra.mxu0 %v3246
    %3316 = vmatmul.bf16.gmra.mxu0 %v3131
    %v3317 = vpop.f32.mrf.mxu0
    %v3318 = vadd.f32 %v3304, %v3317
    %v3319 = vpop.f32.mrf.mxu0
    %v3320 = vadd.f32 %v3306, %v3319
    %3321 = vdwg.mxu0
    %3322 = vmatpush.bf16.msra.mxu0 %v3245
    %3323 = vmatpush.bf16.msra.mxu0 %v3243
    %3324 = vmatpush.bf16.msra.mxu0 %v3241
    %3325 = vmatpush.bf16.msra.mxu0 %v3239
    %3326 = vmatpush.bf16.msra.mxu0 %v3237
    %3327 = vmatpush.bf16.msra.mxu0 %v3235
    %3328 = vmatpush.bf16.msra.mxu0 %v3233
    %3329 = vmatpush.bf16.msra.mxu0 %v3231
    %3330 = vmatmul.bf16.gmra.mxu0 %v3130
    %v3331 = vpop.f32.mrf.mxu0
    %v3332 = vadd.f32 %v3121, %v3331
    %v3333 = vpop.f32.mrf.mxu0
    %v3334 = vadd.f32 %v3121, %v3333
    %3335 = vdwg.mxu0
    %3336 = vmatpush.bf16.msra.mxu0 %v3261
    %3337 = vmatpush.bf16.msra.mxu0 %v3259
    %3338 = vmatpush.bf16.msra.mxu0 %v3257
    %3339 = vmatpush.bf16.msra.mxu0 %v3255
    %3340 = vmatpush.bf16.msra.mxu0 %v3253
    %3341 = vmatpush.bf16.msra.mxu0 %v3251
    %3342 = vmatpush.bf16.msra.mxu0 %v3249
    %3343 = vmatpush.bf16.msra.mxu0 %v3247
    %3344 = vmatmul.bf16.gmra.mxu0 %v3131
    %v3345 = vpop.f32.mrf.mxu0
    %v3346 = vadd.f32 %v3332, %v3345
    %v3347 = vpop.f32.mrf.mxu0
    %v3348 = vadd.f32 %v3334, %v3347
    %3349 = vdwg.mxu0
    %v3350 = vpack.c.bf16 %v3320, %v3318
    %v3351 = vpack.c.bf16 %v3348, %v3346
    %v3352 = vld [vmem:[%s23] sm:$0xf]
    %v3353 = vld [vmem:[%s23 + $0x4] sm:$0xf]
    %v3354 = vld [vmem:[%s23 + $0x8] sm:$0xf]
    %v3355 = vld [vmem:[%s23 + $0xc] sm:$0xf]
    %v3356 = vld [vmem:[%s23 + $0x10] sm:$0xf]
    %v3357 = vld [vmem:[%s23 + $0x14] sm:$0xf]
    %v3358 = vld [vmem:[%s23 + $0x18] sm:$0xf]
    %v3359 = vld [vmem:[%s23 + $0x1c] sm:$0xf]
    %v3360 = vld [vmem:[%s23 + $0x20] sm:$0xf]
    %v3361 = vld [vmem:[%s23 + $0x24] sm:$0xf]
    %v3362 = vld [vmem:[%s23 + $0x28] sm:$0xf]
    %v3363 = vld [vmem:[%s23 + $0x2c] sm:$0xf]
    %v3364 = vld [vmem:[%s23 + $0x30] sm:$0xf]
    %v3365 = vld [vmem:[%s23 + $0x34] sm:$0xf]
    %v3366 = vld [vmem:[%s23 + $0x38] sm:$0xf]
    %v3367 = vld [vmem:[%s23 + $0x3c] sm:$0xf]
    %v3368 = vld [vmem:[%s23 + $0x40] sm:$0xf]
    %v3369 = vld [vmem:[%s23 + $0x44] sm:$0xf]
    %v3370 = vld [vmem:[%s23 + $0x48] sm:$0xf]
    %v3371 = vld [vmem:[%s23 + $0x4c] sm:$0xf]
    %v3372 = vld [vmem:[%s23 + $0x50] sm:$0xf]
    %v3373 = vld [vmem:[%s23 + $0x54] sm:$0xf]
    %v3374 = vld [vmem:[%s23 + $0x58] sm:$0xf]
    %v3375 = vld [vmem:[%s23 + $0x5c] sm:$0xf]
    %v3376 = vld [vmem:[%s23 + $0x60] sm:$0xf]
    %v3377 = vld [vmem:[%s23 + $0x64] sm:$0xf]
    %v3378 = vld [vmem:[%s23 + $0x68] sm:$0xf]
    %v3379 = vld [vmem:[%s23 + $0x6c] sm:$0xf]
    %v3380 = vld [vmem:[%s23 + $0x70] sm:$0xf]
    %v3381 = vld [vmem:[%s23 + $0x74] sm:$0xf]
    %v3382 = vld [vmem:[%s23 + $0x78] sm:$0xf]
    %v3383 = vld [vmem:[%s23 + $0x7c] sm:$0xf]
    %v3384 = vld [vmem:[%s24] sm:$0xf]
    %v3385 = vld [vmem:[%s24 + $0x4] sm:$0xf]
    %v3386 = vld [vmem:[%s24 + $0x8] sm:$0xf]
    %v3387 = vld [vmem:[%s24 + $0xc] sm:$0x3]
    %v3390 = vunpack.c.l.b16 %v190
    %v3391 = vunpack.c.l.b16 %v191
    %v3392 = vpack.c.b16 %v3391, %v3390
    %v3397 = vunpack.c.l.b16 %v3384
    %v3398 = vunpack.c.l.b16 %v3385
    %v3399 = vunpack.c.l.b16 %v3386
    %v3400 = vunpack.c.l.b16 %v3387
    %v3401 = vpack.c.b16 %v3398, %v3397
    %v3402 = vpack.c.b16 %v3400, %v3399
    %vm3404 = vcmask 220160
    %v3406 = vsel %vm3404, %v3392, 0
    %vm3408 = vcmask 1044480
    %vm3409 = vcmask 1045504
    %v3410 = vsel %vm3408, 4294967295, 65535
    %v3411 = vsel %vm3409, %v3410, 0
    %v3413 = vand.u32 %v3402, %v3411
    %3415 = vmatpush.bf16.msra.mxu0 0
    %3416 = vmatpush.bf16.msra.mxu0 0
    %3417 = vmatpush.bf16.msra.mxu0 0
    %3418 = vmatpush.bf16.msra.mxu0 0
    %3419 = vmatpush.bf16.msra.mxu0 0
    %3420 = vmatpush.bf16.msra.mxu0 0
    %3421 = vmatpush.bf16.msra.mxu0 %v3413
    %3422 = vmatpush.bf16.msra.mxu0 %v3401
    %3423 = vmatmul.bf16.gmra.mxu0 %v3406
    %v3424 = vpop.f32.mrf.mxu0
    %v3425 = vadd.f32 0.0, %v3424
    %v3426 = vpop.f32.mrf.mxu0
    %v3427 = vadd.f32 0.0, %v3426
    %3428 = vdwg.mxu0
    %v3461 = vunpack.c.l.b16 %v3352
    %v3462 = vunpack.c.l.b16 %v3353
    %v3463 = vunpack.c.l.b16 %v3354
    %v3464 = vunpack.c.l.b16 %v3355
    %v3465 = vunpack.c.l.b16 %v3356
    %v3466 = vunpack.c.l.b16 %v3357
    %v3467 = vunpack.c.l.b16 %v3358
    %v3468 = vunpack.c.l.b16 %v3359
    %v3469 = vunpack.c.l.b16 %v3360
    %v3470 = vunpack.c.l.b16 %v3361
    %v3471 = vunpack.c.l.b16 %v3362
    %v3472 = vunpack.c.l.b16 %v3363
    %v3473 = vunpack.c.l.b16 %v3364
    %v3474 = vunpack.c.l.b16 %v3365
    %v3475 = vunpack.c.l.b16 %v3366
    %v3476 = vunpack.c.l.b16 %v3367
    %v3477 = vunpack.c.l.b16 %v3368
    %v3478 = vunpack.c.l.b16 %v3369
    %v3479 = vunpack.c.l.b16 %v3370
    %v3480 = vunpack.c.l.b16 %v3371
    %v3481 = vunpack.c.l.b16 %v3372
    %v3482 = vunpack.c.l.b16 %v3373
    %v3483 = vunpack.c.l.b16 %v3374
    %v3484 = vunpack.c.l.b16 %v3375
    %v3485 = vunpack.c.l.b16 %v3376
    %v3486 = vunpack.c.l.b16 %v3377
    %v3487 = vunpack.c.l.b16 %v3378
    %v3488 = vunpack.c.l.b16 %v3379
    %v3489 = vunpack.c.l.b16 %v3380
    %v3490 = vunpack.c.l.b16 %v3381
    %v3491 = vunpack.c.l.b16 %v3382
    %v3492 = vunpack.c.l.b16 %v3383
    %v3493 = vpack.c.b16 %v3462, %v3461
    %v3494 = vpack.c.b16 %v3464, %v3463
    %v3495 = vpack.c.b16 %v3466, %v3465
    %v3496 = vpack.c.b16 %v3468, %v3467
    %v3497 = vpack.c.b16 %v3470, %v3469
    %v3498 = vpack.c.b16 %v3472, %v3471
    %v3499 = vpack.c.b16 %v3474, %v3473
    %v3500 = vpack.c.b16 %v3476, %v3475
    %v3501 = vpack.c.b16 %v3478, %v3477
    %v3502 = vpack.c.b16 %v3480, %v3479
    %v3503 = vpack.c.b16 %v3482, %v3481
    %v3504 = vpack.c.b16 %v3484, %v3483
    %v3505 = vpack.c.b16 %v3486, %v3485
    %v3506 = vpack.c.b16 %v3488, %v3487
    %v3507 = vpack.c.b16 %v3490, %v3489
    %v3508 = vpack.c.b16 %v3492, %v3491
    %3525 = vmatpush.bf16.msra.mxu0 %v3500
    %3526 = vmatpush.bf16.msra.mxu0 %v3499
    %3527 = vmatpush.bf16.msra.mxu0 %v3498
    %3528 = vmatpush.bf16.msra.mxu0 %v3497
    %3529 = vmatpush.bf16.msra.mxu0 %v3496
    %3530 = vmatpush.bf16.msra.mxu0 %v3495
    %3531 = vmatpush.bf16.msra.mxu0 %v3494
    %3532 = vmatpush.bf16.msra.mxu0 %v3493
    %3533 = vmatmul.bf16.gmra.mxu0 %v3350
    %v3534 = vpop.f32.mrf.mxu0
    %v3535 = vadd.f32 %v3425, %v3534
    %v3536 = vpop.f32.mrf.mxu0
    %v3537 = vadd.f32 %v3427, %v3536
    %3538 = vdwg.mxu0
    %3539 = vmatpush.bf16.msra.mxu0 %v3508
    %3540 = vmatpush.bf16.msra.mxu0 %v3507
    %3541 = vmatpush.bf16.msra.mxu0 %v3506
    %3542 = vmatpush.bf16.msra.mxu0 %v3505
    %3543 = vmatpush.bf16.msra.mxu0 %v3504
    %3544 = vmatpush.bf16.msra.mxu0 %v3503
    %3545 = vmatpush.bf16.msra.mxu0 %v3502
    %3546 = vmatpush.bf16.msra.mxu0 %v3501
    %3547 = vmatmul.bf16.gmra.mxu0 %v3351
    %v3548 = vpop.f32.mrf.mxu0
    %v3549 = vadd.f32 %v3535, %v3548
    %v3550 = vpop.f32.mrf.mxu0
    %v3551 = vadd.f32 %v3537, %v3550
    %3552 = vdwg.mxu0
    %v3553 = vld [vmem:[%s25] sm:$0x1]
    %v3555 = vperm.slane %v3553, 0
    %v3557 = vadd.f32 %v3549, %v3555
    %v3558 = vadd.f32 %v3551, %v3555
    %v3559 = vmax.f32 %v3557, 0.0
    %v3560 = vmax.f32 %v3558, 0.0
    %v3561 = vpack.c.bf16 %v3560, %v3559
    %v3562 = vld [vmem:[%s26] sm:$0xf]
    %v3563 = vld [vmem:[%s26 + $0x4] sm:$0xf]
    %v3564 = vld [vmem:[%s26 + $0x8] sm:$0xf]
    %v3565 = vld [vmem:[%s26 + $0xc] sm:$0xf]
    %v3566 = vld [vmem:[%s26 + $0x10] sm:$0xf]
    %v3567 = vld [vmem:[%s26 + $0x14] sm:$0xf]
    %v3568 = vld [vmem:[%s26 + $0x18] sm:$0xf]
    %v3569 = vld [vmem:[%s26 + $0x1c] sm:$0xf]
    %v3570 = vld [vmem:[%s26 + $0x20] sm:$0xf]
    %v3571 = vld [vmem:[%s26 + $0x24] sm:$0xf]
    %v3572 = vld [vmem:[%s26 + $0x28] sm:$0xf]
    %v3573 = vld [vmem:[%s26 + $0x2c] sm:$0xf]
    %v3574 = vld [vmem:[%s26 + $0x30] sm:$0xf]
    %v3575 = vld [vmem:[%s26 + $0x34] sm:$0xf]
    %v3576 = vld [vmem:[%s26 + $0x38] sm:$0xf]
    %v3577 = vld [vmem:[%s26 + $0x3c] sm:$0xf]
    %v3578 = vld [vmem:[%s27] sm:$0x1]
    %v3580 = vperm.slane %v3578, 0
    %v3598 = vunpack.c.l.b16 %v3562
    %v3599 = vunpack.c.l.b16 %v3563
    %v3600 = vunpack.c.l.b16 %v3564
    %v3601 = vunpack.c.l.b16 %v3565
    %v3602 = vunpack.c.l.b16 %v3566
    %v3603 = vunpack.c.l.b16 %v3567
    %v3604 = vunpack.c.l.b16 %v3568
    %v3605 = vunpack.c.l.b16 %v3569
    %v3606 = vunpack.c.l.b16 %v3570
    %v3607 = vunpack.c.l.b16 %v3571
    %v3608 = vunpack.c.l.b16 %v3572
    %v3609 = vunpack.c.l.b16 %v3573
    %v3610 = vunpack.c.l.b16 %v3574
    %v3611 = vunpack.c.l.b16 %v3575
    %v3612 = vunpack.c.l.b16 %v3576
    %v3613 = vunpack.c.l.b16 %v3577
    %v3614 = vpack.c.b16 %v3599, %v3598
    %v3615 = vpack.c.b16 %v3601, %v3600
    %v3616 = vpack.c.b16 %v3603, %v3602
    %v3617 = vpack.c.b16 %v3605, %v3604
    %v3618 = vpack.c.b16 %v3607, %v3606
    %v3619 = vpack.c.b16 %v3609, %v3608
    %v3620 = vpack.c.b16 %v3611, %v3610
    %v3621 = vpack.c.b16 %v3613, %v3612
    %3630 = vmatpush.bf16.msra.mxu0 %v3621
    %3631 = vmatpush.bf16.msra.mxu0 %v3620
    %3632 = vmatpush.bf16.msra.mxu0 %v3619
    %3633 = vmatpush.bf16.msra.mxu0 %v3618
    %3634 = vmatpush.bf16.msra.mxu0 %v3617
    %3635 = vmatpush.bf16.msra.mxu0 %v3616
    %3636 = vmatpush.bf16.msra.mxu0 %v3615
    %3637 = vmatpush.bf16.msra.mxu0 %v3614
    %3638 = vmatmul.bf16.gmra.mxu0 %v3561
    %v3639 = vpop.f32.mrf.mxu0
    %v3640 = vadd.f32 %v3580, %v3639
    %v3641 = vpop.f32.mrf.mxu0
    %v3642 = vadd.f32 %v3580, %v3641
    %3643 = vdwg.mxu0
    %v3644 = vadd.f32 %v3640, 0.0
    %v3645 = vadd.f32 %v3642, 0.0
    %v3646 = vsub.f32 0.0, %v3644
    %v3647 = vsub.f32 0.0, %v3645
    %v3648 = vmul.f32 %v3646, 1.442695
    %v3649 = vpow.pop %v3648
    %v3650 = vmul.f32 %v3647, 1.442695
    %v3651 = vpow.pop %v3650
    %v3652 = vadd.f32 %v3649, 1.0
    %v3653 = vadd.f32 %v3651, 1.0
    %v3654 = vrcp.pop %v3652
    %v3655 = vmul.f32 %v3652, %v3654
    %v3656 = vsub.f32 1.0, %v3655
    %v3657 = vmul.f32 %v3654, %v3656
    %v3658 = vadd.f32 %v3654, %v3657
    %vm3659 = vweird.f32 %v3652
    %vm3660 = vweird.f32 %v3654
    %vm3661 = vmor %vm3659, %vm3660
    %v3662 = vsel %vm3661, %v3654, %v3658
    %v3663 = vand.u32 2147483647, %v3652
    %vm3664 = vcmp.eq.f32.partialorder %v3663, 8.507059e+37
    %v3665 = vand.u32 %v3652, 2147483648
    %v3666 = vor.u32 1.1754944e-38, %v3665
    %v3667 = vsel %vm3664, %v3666, %v3662
    %v3668 = vmul.f32 1.0, %v3667
    %v3669 = vrcp.pop %v3653
    %v3670 = vmul.f32 %v3653, %v3669
    %v3671 = vsub.f32 1.0, %v3670
    %v3672 = vmul.f32 %v3669, %v3671
    %v3673 = vadd.f32 %v3669, %v3672
    %vm3674 = vweird.f32 %v3653
    %vm3675 = vweird.f32 %v3669
    %vm3676 = vmor %vm3674, %vm3675
    %v3677 = vsel %vm3676, %v3669, %v3673
    %v3678 = vand.u32 2147483647, %v3653
    %vm3679 = vcmp.eq.f32.partialorder %v3678, 8.507059e+37
    %v3680 = vand.u32 %v3653, 2147483648
    %v3681 = vor.u32 1.1754944e-38, %v3680
    %v3682 = vsel %vm3679, %v3681, %v3677
    %v3683 = vmul.f32 1.0, %v3682
    %v3684 = vmul.f32 %v3668, 1.002
    %v3685 = vmul.f32 %v3683, 1.002
    %v3686 = vsub.f32 %v3684, 0.001
    %v3687 = vsub.f32 %v3685, 0.001
    %3690 = vrot.lane.b32.xlu0 %v3686, 1
    %v3691 = vpop.permute.xlu0 %3690
    %3692 = vrot.lane.b32.xlu0 %v3687, 1
    %v3693 = vpop.permute.xlu0 %3692
    %vm3696 = vcmask 7168
    %v3697 = vsel %vm3696, %v3084, %v3691
    %v3698 = vsel %vm3696, %v3085, %v3693
    %vm3699 = vcmask 31744
    %3700 = vst.msk [vmem:[%s28] sm:$0xff] %vm3699, %v3697
    %3701 = vst.msk [vmem:[%s28 + $0x8] sm:$0xff] %vm3699, %v3698
    // Predicated region
    $region138: #{uwmlp_forward.1} parent=1 // pred_check
      _
    $region139: #{uwmlp_forward.1} parent=1 // pred_check_branch
      %3703 = sbr.rel (0) target = $region141
    $region140: #{uwmlp_forward.1} parent=1 // pred_region
      _
    $region141: #{uwmlp_forward.1} parent=1 // pred_fallthru
      _
    // Predicated region
    $region142: #{uwmlp_forward.1} parent=1 // pred_check
      _
    $region143: #{uwmlp_forward.1} parent=1 // pred_check_branch
      %3705 = sbr.rel (0) target = $region145
    $region144: #{uwmlp_forward.1} parent=1 // pred_region
      _
    $region145: #{uwmlp_forward.1} parent=1 // pred_fallthru
      _
    %3706 = vsyncpa [#allocation4], 1
    %3707 = vsyncpa [#allocation6], 1
    %3708 = vsyncpa [#allocation9], 1
    %3709 = vsyncpa [#allocation12], 1

</llo_original>
